<compile_context>
chip_gen: v7x
topology: tpu7x:2x2x1
jax: 0.10.0
libtpu: 0.0.40
codegen_flags: <defaults>
</compile_context>

<pallas_src>
import functools

import jax
import jax.numpy as jnp
from jax.experimental import pallas as pl
from jax.experimental.pallas import tpu as pltpu

_LANE = 128        # TPU lane width
_NEG_BIG = -1e30   # mask value for padded logit columns (finite, avoids NaN leaks)


def _round_up(x, m):
    return ((x + m - 1) // m) * m


def _tensorcores_per_device():
    """Best-effort TensorCore count per device (v7x: 2, v5e/v6e: 1)."""
    try:
        dev = jax.devices()[0]
        for attr in ("num_cores", "core_count"):
            v = getattr(dev, attr, None)
            if isinstance(v, int) and v > 0:
                return v
    except Exception:
        pass
    return 1


# --------------------------------------------------------------------------- #
# Kernel
# --------------------------------------------------------------------------- #
def _mlp_kernel(n_layers, x_ref, *refs):
    """One (TB, D) batch tile through the 8-layer MLP + log_softmax.

    refs = (w1, b1, w2, b2, ..., wN, bN, out_ref)
      w_i : (in_i, out_i) bf16   (pre-transposed, lane-padded, zero-filled pads)
      b_i : (1, out_i)    f32    (lane-padded; last layer's padded cols = -1e30)
      x   : (TB, in)      bf16
      out : (TB, out_pad) f32    (lane-dense block; padded cols hold huge-negative
                                  log-probs; wrapper slices them away)
    """
    out_ref = refs[-1]
    param_refs = refs[:-1]

    h = x_ref[...]  # bf16 activations for the first dot
    for i in range(n_layers):
        w = param_refs[2 * i][...]          # (in, out) bf16
        b = param_refs[2 * i + 1][...]      # (1, out)  f32
        acc = jnp.dot(h, w, preferred_element_type=jnp.float32) + b
        if i < n_layers - 1:
            # fused ReLU + bf16 downcast: next dot consumes bf16 directly
            h = jnp.maximum(acc, 0.0).astype(jnp.bfloat16)
        else:
            h = acc                         # final logits, f32 (TB, out_pad)

    # Padded logit columns already hold ~-1e30 (baked into the last bias), so
    # they vanish from the normalizer without any in-kernel masking.
    m = jnp.max(h, axis=-1, keepdims=True)
    shifted = h - m
    lse = jnp.log(jnp.sum(jnp.exp(shifted), axis=-1, keepdims=True))
    out_ref[...] = (shifted - lse).astype(out_ref.dtype)


# --------------------------------------------------------------------------- #
# One-time parameter preparation (hoisted out of the forward path)
# --------------------------------------------------------------------------- #
def prepare_mnist_params(weights, biases):
    """Pad/cast weights & biases once; cache the result and reuse every forward.

    weights[i]: (in_i, out_i) f32 (already transposed vs. torch's (out, in)).
    biases[i] : (out_i,) f32.
    Returns (params, pdims, out_dim):
      params: flat list [w1, b1, ..., wN, bN] of lane-padded device arrays
              (weights bf16, biases f32; last bias carries the -1e30 column mask).
    """
    n_layers = len(weights)
    in_dim = weights[0].shape[0]
    out_dim = weights[-1].shape[1]

    dims = [in_dim] + [w.shape[1] for w in weights]
    pdims = [_round_up(d, _LANE) for d in dims]

    params = []
    for i, (w, b) in enumerate(zip(weights, biases)):
        pw = jnp.zeros((pdims[i], pdims[i + 1]), jnp.bfloat16)
        pw = pw.at[: w.shape[0], : w.shape[1]].set(w.astype(jnp.bfloat16))

        is_last = i == n_layers - 1
        fill = _NEG_BIG if is_last else 0.0
        pb = jnp.full((1, pdims[i + 1]), fill, jnp.float32)
        pb = pb.at[0, : b.shape[0]].set(b.astype(jnp.float32))

        params.append(pw)
        params.append(pb)

    params = [jax.device_put(p) for p in params]
    return params, pdims, out_dim


# --------------------------------------------------------------------------- #
# Forward wrapper (cheap: cast x if needed + one pallas_call)
# --------------------------------------------------------------------------- #
def mnist_classifier_forward(x, prepared, *, batch_tile=None):
    """x: (B, input_dim) f32.  prepared = prepare_mnist_params(weights, biases)."""
    params, pdims, out_dim = prepared
    n_layers = len(params) // 2
    B, in_dim = x.shape

    # ---- batch tiling: one tile per TensorCore (grid=(1,) on v5e/v6e) ----
    b_pad8 = _round_up(B, 8)
    if batch_tile is None:
        ncores = _tensorcores_per_device()
        batch_tile = max(8, _round_up(pl.cdiv(b_pad8, ncores), 8))
    tb = min(batch_tile, b_pad8)
    bp = _round_up(B, tb)

    # ---- input: skip the pad-and-copy entirely when no padding is needed ----
    if bp == B and pdims[0] == in_dim:
        xp = x.astype(jnp.bfloat16)
    else:
        xp = jnp.zeros((bp, pdims[0]), jnp.bfloat16)
        xp = xp.at[:B, :in_dim].set(x.astype(jnp.bfloat16))

    pout = pdims[-1]
    grid = (bp // tb,)

    in_specs = [pl.BlockSpec((tb, pdims[0]), lambda i: (i, 0))]
    # Weights/biases: full-array blocks with a constant index_map -> DMA'd once,
    # VMEM-resident across all grid steps.
    for p in params:
        in_specs.append(pl.BlockSpec(p.shape, lambda i: (0, 0)))
    out_specs = pl.BlockSpec((tb, pout), lambda i: (i, 0))

    flops = 2 * bp * sum(pdims[i] * pdims[i + 1] for i in range(n_layers))
    bytes_accessed = (
        bp * pdims[0] * 2
        + sum(int(p.size) * p.dtype.itemsize for p in params)
        + bp * pout * 4
    )
    cost = pl.CostEstimate(
        flops=flops, transcendentals=bp * pout, bytes_accessed=bytes_accessed
    )

    kernel = functools.partial(_mlp_kernel, n_layers)

    out = pl.pallas_call(
        kernel,
        out_shape=jax.ShapeDtypeStruct((bp, pout), jnp.float32),
        grid=grid,
        in_specs=in_specs,
        out_specs=out_specs,
        compiler_params=pltpu.CompilerParams(
            dimension_semantics=("parallel",),
        ),
        cost_estimate=cost,
    )(xp, *params)

    return out[:B, :out_dim]


# --------------------------------------------------------------------------- #
# Pure-JAX reference (mimics the kernel's bf16-dot / f32-accumulate math)
# --------------------------------------------------------------------------- #
def _reference_forward(x, weights, biases):
    h = x.astype(jnp.bfloat16)
    n = len(weights)
    for i, (w, b) in enumerate(zip(weights, biases)):
        acc = jnp.dot(h, w.astype(jnp.bfloat16),
                      preferred_element_type=jnp.float32) + b.astype(jnp.float32)
        if i < n - 1:
            h = jnp.maximum(acc, 0.0).astype(jnp.bfloat16)
        else:
            h = acc
    return jax.nn.log_softmax(h, axis=1)


def _init_linear_params(key, in_features, out_features):
    """Deterministic PyTorch-style nn.Linear init: U(-1/sqrt(in), 1/sqrt(in))."""
    k_w, k_b = jax.random.split(key)
    bound = 1.0 / jnp.sqrt(jnp.float32(in_features))
    # stored already transposed: (in, out)
    w = jax.random.uniform(k_w, (in_features, out_features), jnp.float32,
                           minval=-bound, maxval=bound)
    b = jax.random.uniform(k_b, (out_features,), jnp.float32,
                           minval=-bound, maxval=bound)
    return w, b


if __name__ == "__main__":
    # FLAGS-consistent sizes:
    #   FLAGS.input_dimensions = 128
    #   FLAGS.units_per_layer  = [128, 128, 128, 128, 128, 128, 128, 10]
    batch = 512
    input_dim = 128
    units_per_layer = [128, 128, 128, 128, 128, 128, 128, 10]

    root = jax.random.PRNGKey(0)
    k_x, k_p = jax.random.split(root)

    x = jax.random.normal(k_x, (batch, input_dim), dtype=jnp.float32)

    dims = [input_dim] + units_per_layer
    weights, biases = [], []
    keys = jax.random.split(k_p, len(units_per_layer))
    for i, k in enumerate(keys):
        w, b = _init_linear_params(k, dims[i], dims[i + 1])
        weights.append(w)
        biases.append(b)

    # One-time parameter prep (padding + bf16 cast + bias-baked logit mask).
    prepared = prepare_mnist_params(weights, biases)

    out = mnist_classifier_forward(x, prepared)
    out = jax.block_until_ready(out)

    assert out.shape == (batch, units_per_layer[-1])

    # Sanity 1: log_softmax rows should sum (in prob space) to ~1.
    row_prob_sums = jnp.sum(jnp.exp(out), axis=1)
    assert bool(jnp.all(jnp.abs(row_prob_sums - 1.0) < 1e-3))

    # Sanity 2: matches a pure-JAX reference using the same bf16-dot math.
    # (bf16 MXU operands differ from a pure-f32 PyTorch forward by up to ~1e-2
    # per logit; acceptable for classification.)
    ref = jax.block_until_ready(_reference_forward(x, weights, biases))
    assert bool(jnp.all(jnp.abs(out - ref) < 1e-2))

    print("KERNEL_OK")
</pallas_src>

<mosaic_0001>
module attributes {stable_mosaic.version = 11 : i64} {
  func.func @_mlp_kernel(%arg0: i32, %arg1: memref<512x128xbf16, #tpu.memory_space<vmem>>, %arg2: memref<128x128xbf16, #tpu.memory_space<vmem>>, %arg3: memref<1x128xf32, #tpu.memory_space<vmem>>, %arg4: memref<128x128xbf16, #tpu.memory_space<vmem>>, %arg5: memref<1x128xf32, #tpu.memory_space<vmem>>, %arg6: memref<128x128xbf16, #tpu.memory_space<vmem>>, %arg7: memref<1x128xf32, #tpu.memory_space<vmem>>, %arg8: memref<128x128xbf16, #tpu.memory_space<vmem>>, %arg9: memref<1x128xf32, #tpu.memory_space<vmem>>, %arg10: memref<128x128xbf16, #tpu.memory_space<vmem>>, %arg11: memref<1x128xf32, #tpu.memory_space<vmem>>, %arg12: memref<128x128xbf16, #tpu.memory_space<vmem>>, %arg13: memref<1x128xf32, #tpu.memory_space<vmem>>, %arg14: memref<128x128xbf16, #tpu.memory_space<vmem>>, %arg15: memref<1x128xf32, #tpu.memory_space<vmem>>, %arg16: memref<128x128xbf16, #tpu.memory_space<vmem>>, %arg17: memref<1x128xf32, #tpu.memory_space<vmem>>, %arg18: memref<512x128xf32, #tpu.memory_space<vmem>>) attributes {dimension_semantics = [#tpu.dimension_semantics<parallel>], iteration_bounds = array<i64: 1>, scalar_prefetch = 0 : i64, scratch_operands = 0 : i64, tpu.core_type = #tpu.core_type<tc>, window_params = [{transform_indices = @transform_0, window_bounds = array<i64: 512, 128>}, {pipeline_mode = #tpu.pipeline_mode<synchronous>, transform_indices = @transform_1, window_bounds = array<i64: 128, 128>}, {pipeline_mode = #tpu.pipeline_mode<synchronous>, transform_indices = @transform_2, window_bounds = array<i64: 1, 128>}, {pipeline_mode = #tpu.pipeline_mode<synchronous>, transform_indices = @transform_3, window_bounds = array<i64: 128, 128>}, {pipeline_mode = #tpu.pipeline_mode<synchronous>, transform_indices = @transform_4, window_bounds = array<i64: 1, 128>}, {pipeline_mode = #tpu.pipeline_mode<synchronous>, transform_indices = @transform_5, window_bounds = array<i64: 128, 128>}, {pipeline_mode = #tpu.pipeline_mode<synchronous>, transform_indices = @transform_6, window_bounds = array<i64: 1, 128>}, {pipeline_mode = #tpu.pipeline_mode<synchronous>, transform_indices = @transform_7, window_bounds = array<i64: 128, 128>}, {pipeline_mode = #tpu.pipeline_mode<synchronous>, transform_indices = @transform_8, window_bounds = array<i64: 1, 128>}, {pipeline_mode = #tpu.pipeline_mode<synchronous>, transform_indices = @transform_9, window_bounds = array<i64: 128, 128>}, {pipeline_mode = #tpu.pipeline_mode<synchronous>, transform_indices = @transform_10, window_bounds = array<i64: 1, 128>}, {pipeline_mode = #tpu.pipeline_mode<synchronous>, transform_indices = @transform_11, window_bounds = array<i64: 128, 128>}, {pipeline_mode = #tpu.pipeline_mode<synchronous>, transform_indices = @transform_12, window_bounds = array<i64: 1, 128>}, {pipeline_mode = #tpu.pipeline_mode<synchronous>, transform_indices = @transform_13, window_bounds = array<i64: 128, 128>}, {pipeline_mode = #tpu.pipeline_mode<synchronous>, transform_indices = @transform_14, window_bounds = array<i64: 1, 128>}, {pipeline_mode = #tpu.pipeline_mode<synchronous>, transform_indices = @transform_15, window_bounds = array<i64: 128, 128>}, {pipeline_mode = #tpu.pipeline_mode<synchronous>, transform_indices = @transform_16, window_bounds = array<i64: 1, 128>}, {transform_indices = @transform_17, window_bounds = array<i64: 512, 128>}]} {
    %c0 = arith.constant 0 : index
    %c0_0 = arith.constant 0 : index
    %0 = vector.load %arg1[%c0, %c0_0] : memref<512x128xbf16, #tpu.memory_space<vmem>>, vector<512x128xbf16>
    %c0_1 = arith.constant 0 : index
    %c0_2 = arith.constant 0 : index
    %1 = vector.load %arg2[%c0_1, %c0_2] : memref<128x128xbf16, #tpu.memory_space<vmem>>, vector<128x128xbf16>
    %c0_3 = arith.constant 0 : index
    %c0_4 = arith.constant 0 : index
    %2 = vector.load %arg3[%c0_3, %c0_4] : memref<1x128xf32, #tpu.memory_space<vmem>>, vector<1x128xf32>
    %cst = arith.constant dense<0.000000e+00> : vector<512x128xf32>
    %3 = tpu.matmul %0, %1, %cst {dimension_numbers = #tpu.dot_dimension_numbers<[1], [0], [0], [1], [0, 0, 1, 1], [], []>} : vector<512x128xbf16>, vector<128x128xbf16>, vector<512x128xf32> -> vector<512x128xf32>
    %4 = vector.broadcast %2 : vector<1x128xf32> to vector<512x128xf32>
    %5 = arith.addf %3, %4 : vector<512x128xf32>
    %cst_5 = arith.constant 0.000000e+00 : f32
    %6 = vector.broadcast %cst_5 : f32 to vector<512x128xf32>
    %7 = arith.maximumf %5, %6 : vector<512x128xf32>
    %8 = arith.truncf %7 : vector<512x128xf32> to vector<512x128xbf16>
    %c0_6 = arith.constant 0 : index
    %c0_7 = arith.constant 0 : index
    %9 = vector.load %arg4[%c0_6, %c0_7] : memref<128x128xbf16, #tpu.memory_space<vmem>>, vector<128x128xbf16>
    %c0_8 = arith.constant 0 : index
    %c0_9 = arith.constant 0 : index
    %10 = vector.load %arg5[%c0_8, %c0_9] : memref<1x128xf32, #tpu.memory_space<vmem>>, vector<1x128xf32>
    %cst_10 = arith.constant dense<0.000000e+00> : vector<512x128xf32>
    %11 = tpu.matmul %8, %9, %cst_10 {dimension_numbers = #tpu.dot_dimension_numbers<[1], [0], [0], [1], [0, 0, 1, 1], [], []>} : vector<512x128xbf16>, vector<128x128xbf16>, vector<512x128xf32> -> vector<512x128xf32>
    %12 = vector.broadcast %10 : vector<1x128xf32> to vector<512x128xf32>
    %13 = arith.addf %11, %12 : vector<512x128xf32>
    %cst_11 = arith.constant 0.000000e+00 : f32
    %14 = vector.broadcast %cst_11 : f32 to vector<512x128xf32>
    %15 = arith.maximumf %13, %14 : vector<512x128xf32>
    %16 = arith.truncf %15 : vector<512x128xf32> to vector<512x128xbf16>
    %c0_12 = arith.constant 0 : index
    %c0_13 = arith.constant 0 : index
    %17 = vector.load %arg6[%c0_12, %c0_13] : memref<128x128xbf16, #tpu.memory_space<vmem>>, vector<128x128xbf16>
    %c0_14 = arith.constant 0 : index
    %c0_15 = arith.constant 0 : index
    %18 = vector.load %arg7[%c0_14, %c0_15] : memref<1x128xf32, #tpu.memory_space<vmem>>, vector<1x128xf32>
    %cst_16 = arith.constant dense<0.000000e+00> : vector<512x128xf32>
    %19 = tpu.matmul %16, %17, %cst_16 {dimension_numbers = #tpu.dot_dimension_numbers<[1], [0], [0], [1], [0, 0, 1, 1], [], []>} : vector<512x128xbf16>, vector<128x128xbf16>, vector<512x128xf32> -> vector<512x128xf32>
    %20 = vector.broadcast %18 : vector<1x128xf32> to vector<512x128xf32>
    %21 = arith.addf %19, %20 : vector<512x128xf32>
    %cst_17 = arith.constant 0.000000e+00 : f32
    %22 = vector.broadcast %cst_17 : f32 to vector<512x128xf32>
    %23 = arith.maximumf %21, %22 : vector<512x128xf32>
    %24 = arith.truncf %23 : vector<512x128xf32> to vector<512x128xbf16>
    %c0_18 = arith.constant 0 : index
    %c0_19 = arith.constant 0 : index
    %25 = vector.load %arg8[%c0_18, %c0_19] : memref<128x128xbf16, #tpu.memory_space<vmem>>, vector<128x128xbf16>
    %c0_20 = arith.constant 0 : index
    %c0_21 = arith.constant 0 : index
    %26 = vector.load %arg9[%c0_20, %c0_21] : memref<1x128xf32, #tpu.memory_space<vmem>>, vector<1x128xf32>
    %cst_22 = arith.constant dense<0.000000e+00> : vector<512x128xf32>
    %27 = tpu.matmul %24, %25, %cst_22 {dimension_numbers = #tpu.dot_dimension_numbers<[1], [0], [0], [1], [0, 0, 1, 1], [], []>} : vector<512x128xbf16>, vector<128x128xbf16>, vector<512x128xf32> -> vector<512x128xf32>
    %28 = vector.broadcast %26 : vector<1x128xf32> to vector<512x128xf32>
    %29 = arith.addf %27, %28 : vector<512x128xf32>
    %cst_23 = arith.constant 0.000000e+00 : f32
    %30 = vector.broadcast %cst_23 : f32 to vector<512x128xf32>
    %31 = arith.maximumf %29, %30 : vector<512x128xf32>
    %32 = arith.truncf %31 : vector<512x128xf32> to vector<512x128xbf16>
    %c0_24 = arith.constant 0 : index
    %c0_25 = arith.constant 0 : index
    %33 = vector.load %arg10[%c0_24, %c0_25] : memref<128x128xbf16, #tpu.memory_space<vmem>>, vector<128x128xbf16>
    %c0_26 = arith.constant 0 : index
    %c0_27 = arith.constant 0 : index
    %34 = vector.load %arg11[%c0_26, %c0_27] : memref<1x128xf32, #tpu.memory_space<vmem>>, vector<1x128xf32>
    %cst_28 = arith.constant dense<0.000000e+00> : vector<512x128xf32>
    %35 = tpu.matmul %32, %33, %cst_28 {dimension_numbers = #tpu.dot_dimension_numbers<[1], [0], [0], [1], [0, 0, 1, 1], [], []>} : vector<512x128xbf16>, vector<128x128xbf16>, vector<512x128xf32> -> vector<512x128xf32>
    %36 = vector.broadcast %34 : vector<1x128xf32> to vector<512x128xf32>
    %37 = arith.addf %35, %36 : vector<512x128xf32>
    %cst_29 = arith.constant 0.000000e+00 : f32
    %38 = vector.broadcast %cst_29 : f32 to vector<512x128xf32>
    %39 = arith.maximumf %37, %38 : vector<512x128xf32>
    %40 = arith.truncf %39 : vector<512x128xf32> to vector<512x128xbf16>
    %c0_30 = arith.constant 0 : index
    %c0_31 = arith.constant 0 : index
    %41 = vector.load %arg12[%c0_30, %c0_31] : memref<128x128xbf16, #tpu.memory_space<vmem>>, vector<128x128xbf16>
    %c0_32 = arith.constant 0 : index
    %c0_33 = arith.constant 0 : index
    %42 = vector.load %arg13[%c0_32, %c0_33] : memref<1x128xf32, #tpu.memory_space<vmem>>, vector<1x128xf32>
    %cst_34 = arith.constant dense<0.000000e+00> : vector<512x128xf32>
    %43 = tpu.matmul %40, %41, %cst_34 {dimension_numbers = #tpu.dot_dimension_numbers<[1], [0], [0], [1], [0, 0, 1, 1], [], []>} : vector<512x128xbf16>, vector<128x128xbf16>, vector<512x128xf32> -> vector<512x128xf32>
    %44 = vector.broadcast %42 : vector<1x128xf32> to vector<512x128xf32>
    %45 = arith.addf %43, %44 : vector<512x128xf32>
    %cst_35 = arith.constant 0.000000e+00 : f32
    %46 = vector.broadcast %cst_35 : f32 to vector<512x128xf32>
    %47 = arith.maximumf %45, %46 : vector<512x128xf32>
    %48 = arith.truncf %47 : vector<512x128xf32> to vector<512x128xbf16>
    %c0_36 = arith.constant 0 : index
    %c0_37 = arith.constant 0 : index
    %49 = vector.load %arg14[%c0_36, %c0_37] : memref<128x128xbf16, #tpu.memory_space<vmem>>, vector<128x128xbf16>
    %c0_38 = arith.constant 0 : index
    %c0_39 = arith.constant 0 : index
    %50 = vector.load %arg15[%c0_38, %c0_39] : memref<1x128xf32, #tpu.memory_space<vmem>>, vector<1x128xf32>
    %cst_40 = arith.constant dense<0.000000e+00> : vector<512x128xf32>
    %51 = tpu.matmul %48, %49, %cst_40 {dimension_numbers = #tpu.dot_dimension_numbers<[1], [0], [0], [1], [0, 0, 1, 1], [], []>} : vector<512x128xbf16>, vector<128x128xbf16>, vector<512x128xf32> -> vector<512x128xf32>
    %52 = vector.broadcast %50 : vector<1x128xf32> to vector<512x128xf32>
    %53 = arith.addf %51, %52 : vector<512x128xf32>
    %cst_41 = arith.constant 0.000000e+00 : f32
    %54 = vector.broadcast %cst_41 : f32 to vector<512x128xf32>
    %55 = arith.maximumf %53, %54 : vector<512x128xf32>
    %56 = arith.truncf %55 : vector<512x128xf32> to vector<512x128xbf16>
    %c0_42 = arith.constant 0 : index
    %c0_43 = arith.constant 0 : index
    %57 = vector.load %arg16[%c0_42, %c0_43] : memref<128x128xbf16, #tpu.memory_space<vmem>>, vector<128x128xbf16>
    %c0_44 = arith.constant 0 : index
    %c0_45 = arith.constant 0 : index
    %58 = vector.load %arg17[%c0_44, %c0_45] : memref<1x128xf32, #tpu.memory_space<vmem>>, vector<1x128xf32>
    %cst_46 = arith.constant dense<0.000000e+00> : vector<512x128xf32>
    %59 = tpu.matmul %56, %57, %cst_46 {dimension_numbers = #tpu.dot_dimension_numbers<[1], [0], [0], [1], [0, 0, 1, 1], [], []>} : vector<512x128xbf16>, vector<128x128xbf16>, vector<512x128xf32> -> vector<512x128xf32>
    %60 = vector.broadcast %58 : vector<1x128xf32> to vector<512x128xf32>
    %61 = arith.addf %59, %60 : vector<512x128xf32>
    %cst_47 = arith.constant dense<0xFF800000> : vector<512xf32>
    %62 = vector.multi_reduction <maximumf>, %61, %cst_47 [1] : vector<512x128xf32> to vector<512xf32>
    %63 = vector.shape_cast %62 : vector<512xf32> to vector<512x1xf32>
    %64 = vector.broadcast %63 : vector<512x1xf32> to vector<512x128xf32>
    %65 = arith.subf %61, %64 : vector<512x128xf32>
    %66 = math.exp %65 : vector<512x128xf32>
    %cst_48 = arith.constant dense<0.000000e+00> : vector<512xf32>
    %67 = vector.multi_reduction <add>, %66, %cst_48 [1] : vector<512x128xf32> to vector<512xf32>
    %68 = vector.shape_cast %67 : vector<512xf32> to vector<512x1xf32>
    %69 = math.log %68 : vector<512x1xf32>
    %70 = vector.broadcast %69 : vector<512x1xf32> to vector<512x128xf32>
    %71 = arith.subf %65, %70 : vector<512x128xf32>
    %c0_49 = arith.constant 0 : index
    %c0_50 = arith.constant 0 : index
    %72 = vector.load %arg18[%c0_49, %c0_50] : memref<512x128xf32, #tpu.memory_space<vmem>>, vector<512x128xf32>
    tpu.vector_store %arg18[%c0_49, %c0_50], %71 {strides = array<i32>} : memref<512x128xf32, #tpu.memory_space<vmem>>, vector<512x128xf32>,
    return
  }
  func.func @transform_0(%arg0: i32) -> (i32, i32) {
    %c0_i32 = arith.constant 0 : i32
    %c0_i32_0 = arith.constant 0 : i32
    return %arg0, %c0_i32 : i32, i32
  }
  func.func @transform_1(%arg0: i32) -> (i32, i32) {
    %c0_i32 = arith.constant 0 : i32
    %c0_i32_0 = arith.constant 0 : i32
    %c0_i32_1 = arith.constant 0 : i32
    return %c0_i32, %c0_i32_0 : i32, i32
  }
  func.func @transform_2(%arg0: i32) -> (i32, i32) {
    %c0_i32 = arith.constant 0 : i32
    %c0_i32_0 = arith.constant 0 : i32
    %c0_i32_1 = arith.constant 0 : i32
    return %c0_i32, %c0_i32_0 : i32, i32
  }
  func.func @transform_3(%arg0: i32) -> (i32, i32) {
    %c0_i32 = arith.constant 0 : i32
    %c0_i32_0 = arith.constant 0 : i32
    %c0_i32_1 = arith.constant 0 : i32
    return %c0_i32, %c0_i32_0 : i32, i32
  }
  func.func @transform_4(%arg0: i32) -> (i32, i32) {
    %c0_i32 = arith.constant 0 : i32
    %c0_i32_0 = arith.constant 0 : i32
    %c0_i32_1 = arith.constant 0 : i32
    return %c0_i32, %c0_i32_0 : i32, i32
  }
  func.func @transform_5(%arg0: i32) -> (i32, i32) {
    %c0_i32 = arith.constant 0 : i32
    %c0_i32_0 = arith.constant 0 : i32
    %c0_i32_1 = arith.constant 0 : i32
    return %c0_i32, %c0_i32_0 : i32, i32
  }
  func.func @transform_6(%arg0: i32) -> (i32, i32) {
    %c0_i32 = arith.constant 0 : i32
    %c0_i32_0 = arith.constant 0 : i32
    %c0_i32_1 = arith.constant 0 : i32
    return %c0_i32, %c0_i32_0 : i32, i32
  }
  func.func @transform_7(%arg0: i32) -> (i32, i32) {
    %c0_i32 = arith.constant 0 : i32
    %c0_i32_0 = arith.constant 0 : i32
    %c0_i32_1 = arith.constant 0 : i32
    return %c0_i32, %c0_i32_0 : i32, i32
  }
  func.func @transform_8(%arg0: i32) -> (i32, i32) {
    %c0_i32 = arith.constant 0 : i32
    %c0_i32_0 = arith.constant 0 : i32
    %c0_i32_1 = arith.constant 0 : i32
    return %c0_i32, %c0_i32_0 : i32, i32
  }
  func.func @transform_9(%arg0: i32) -> (i32, i32) {
    %c0_i32 = arith.constant 0 : i32
    %c0_i32_0 = arith.constant 0 : i32
    %c0_i32_1 = arith.constant 0 : i32
    return %c0_i32, %c0_i32_0 : i32, i32
  }
  func.func @transform_10(%arg0: i32) -> (i32, i32) {
    %c0_i32 = arith.constant 0 : i32
    %c0_i32_0 = arith.constant 0 : i32
    %c0_i32_1 = arith.constant 0 : i32
    return %c0_i32, %c0_i32_0 : i32, i32
  }
  func.func @transform_11(%arg0: i32) -> (i32, i32) {
    %c0_i32 = arith.constant 0 : i32
    %c0_i32_0 = arith.constant 0 : i32
    %c0_i32_1 = arith.constant 0 : i32
    return %c0_i32, %c0_i32_0 : i32, i32
  }
  func.func @transform_12(%arg0: i32) -> (i32, i32) {
    %c0_i32 = arith.constant 0 : i32
    %c0_i32_0 = arith.constant 0 : i32
    %c0_i32_1 = arith.constant 0 : i32
    return %c0_i32, %c0_i32_0 : i32, i32
  }
  func.func @transform_13(%arg0: i32) -> (i32, i32) {
    %c0_i32 = arith.constant 0 : i32
    %c0_i32_0 = arith.constant 0 : i32
    %c0_i32_1 = arith.constant 0 : i32
    return %c0_i32, %c0_i32_0 : i32, i32
  }
  func.func @transform_14(%arg0: i32) -> (i32, i32) {
    %c0_i32 = arith.constant 0 : i32
    %c0_i32_0 = arith.constant 0 : i32
    %c0_i32_1 = arith.constant 0 : i32
    return %c0_i32, %c0_i32_0 : i32, i32
  }
  func.func @transform_15(%arg0: i32) -> (i32, i32) {
    %c0_i32 = arith.constant 0 : i32
    %c0_i32_0 = arith.constant 0 : i32
    %c0_i32_1 = arith.constant 0 : i32
    return %c0_i32, %c0_i32_0 : i32, i32
  }
  func.func @transform_16(%arg0: i32) -> (i32, i32) {
    %c0_i32 = arith.constant 0 : i32
    %c0_i32_0 = arith.constant 0 : i32
    %c0_i32_1 = arith.constant 0 : i32
    return %c0_i32, %c0_i32_0 : i32, i32
  }
  func.func @transform_17(%arg0: i32) -> (i32, i32) {
    %c0_i32 = arith.constant 0 : i32
    %c0_i32_0 = arith.constant 0 : i32
    return %arg0, %c0_i32 : i32, i32
  }
}

</mosaic_0001>

<llo_original>
// kernel: tpu_custom_call.1
$region0: #{tpu_custom_call.1}
  #allocation0 [shape = 'u32[]', space=smem, size = 0x4, offset = 0x4, fixed_abs, tag = 'smem constant byte address 0x4 - core index']
  #allocation1 [shape = 'u32[144,128]{1,0:T(1,128)}', space=vmem, size = 0x12000, scoped, tag = 'internal scratch']
  %s0 = inlined_call_operand.hbm [shape: bf16[512,128], index: 0, kind: input, shape index: {}]
  %s1 = inlined_call_operand.hbm [shape: bf16[128,128], index: 1, kind: input, shape index: {}]
  %s2 = inlined_call_operand.vmem [shape: f32[1,128], index: 2, kind: input, shape index: {}]
  %s3 = inlined_call_operand.hbm [shape: bf16[128,128], index: 3, kind: input, shape index: {}]
  %s4 = inlined_call_operand.vmem [shape: f32[1,128], index: 4, kind: input, shape index: {}]
  %s5 = inlined_call_operand.hbm [shape: bf16[128,128], index: 5, kind: input, shape index: {}]
  %s6 = inlined_call_operand.vmem [shape: f32[1,128], index: 6, kind: input, shape index: {}]
  %s7 = inlined_call_operand.hbm [shape: bf16[128,128], index: 7, kind: input, shape index: {}]
  %s8 = inlined_call_operand.vmem [shape: f32[1,128], index: 8, kind: input, shape index: {}]
  %s9 = inlined_call_operand.hbm [shape: bf16[128,128], index: 9, kind: input, shape index: {}]
  %s10 = inlined_call_operand.vmem [shape: f32[1,128], index: 10, kind: input, shape index: {}]
  %s11 = inlined_call_operand.hbm [shape: bf16[128,128], index: 11, kind: input, shape index: {}]
  %s12 = inlined_call_operand.vmem [shape: f32[1,128], index: 12, kind: input, shape index: {}]
  %s13 = inlined_call_operand.hbm [shape: bf16[128,128], index: 13, kind: input, shape index: {}]
  %s14 = inlined_call_operand.vmem [shape: f32[1,128], index: 14, kind: input, shape index: {}]
  %s15 = inlined_call_operand.hbm [shape: bf16[128,128], index: 15, kind: input, shape index: {}]
  %s16 = inlined_call_operand.vmem [shape: f32[1,128], index: 16, kind: input, shape index: {}]
  %s17 = inlined_call_operand.hbm [shape: f32[512,128], index: 17, kind: output, shape index: {}]
  %s18 = sld [smem:[#allocation0]]
  $region114: #{tpu_custom_call.1} parent=0
    _
  %s20 = ssub.s32 1, %s18
  %s21 = scalar_select 0, %s20, %s18
  $region1: #{tpu_custom_call.1} parent=0
    #allocation2 [shape = 'u8[131072]{0}', space=vmem, size = 0x20000, scoped, tag = 'input window, operand 0, single buffered']
    #allocation3 [shape = 's32[1]{0}', space=sflag, size = 0x4, scoped, tag = 'scoped memory for tpu_custom_call.1']
    #allocation4 [shape = 's32[1]{0}', space=sflag, size = 0x4, scoped, tag = 'scoped memory for tpu_custom_call.1']
    #allocation5 [shape = 'u8[32768]{0}', space=vmem, size = 0x8000, scoped, tag = 'input window, operand 1, single buffered']
    #allocation6 [shape = 's32[1]{0}', space=sflag, size = 0x4, scoped, tag = 'scoped memory for tpu_custom_call.1']
    #allocation7 [shape = 'u8[32768]{0}', space=vmem, size = 0x8000, scoped, tag = 'input window, operand 3, single buffered']
    #allocation8 [shape = 'u8[32768]{0}', space=vmem, size = 0x8000, scoped, tag = 'input window, operand 5, single buffered']
    #allocation9 [shape = 's32[1]{0}', space=sflag, size = 0x4, scoped, tag = 'scoped memory for tpu_custom_call.1']
    #allocation10 [shape = 'u8[32768]{0}', space=vmem, size = 0x8000, scoped, tag = 'input window, operand 7, single buffered']
    #allocation11 [shape = 'u8[32768]{0}', space=vmem, size = 0x8000, scoped, tag = 'input window, operand 9, single buffered']
    #allocation12 [shape = 's32[1]{0}', space=sflag, size = 0x4, scoped, tag = 'scoped memory for tpu_custom_call.1']
    #allocation13 [shape = 'u8[32768]{0}', space=vmem, size = 0x8000, scoped, tag = 'input window, operand 11, single buffered']
    #allocation14 [shape = 'u8[32768]{0}', space=vmem, size = 0x8000, scoped, tag = 'input window, operand 13, single buffered']
    #allocation15 [shape = 's32[1]{0}', space=sflag, size = 0x4, scoped, tag = 'scoped memory for tpu_custom_call.1']
    #allocation16 [shape = 'u8[32768]{0}', space=vmem, size = 0x8000, scoped, tag = 'input window, operand 15, single buffered']
    #allocation17 [shape = 'u8[262144]{0}', space=vmem, size = 0x40000, scoped, tag = 'output window, operand 0, single buffered']
    %22 = vsyncpa [#allocation3], 0
    %23 = vsyncpa [#allocation6], 0
    %24 = vsyncpa [#allocation9], 0
    %25 = vsyncpa [#allocation12], 0
    %26 = vsyncpa [#allocation15], 0
    %27 = vsyncpa [#allocation4], 0
    // Predicated region
    $region2: #{tpu_custom_call.1} parent=1 // pred_check
      _
    $region3: #{tpu_custom_call.1} parent=1 // pred_check_branch
      %29 = sbr.rel (0) target = $region5
    $region4: #{tpu_custom_call.1} parent=1 // pred_region
      %s31 = ssub.s32 4096, 4096
      %32 = vsyncadd [#allocation3], %s31
      %s33 = sshll.u32 [#allocation2], 4
      %s34 = int_to_ptr.vmem [resolvable:$true] %s33
      %39 = dma.hbm_to_vmem [thread:$0]  %s0, 4096, %s34, [#allocation3], 64, 64, 4
    $region5: #{tpu_custom_call.1} parent=1 // pred_fallthru
      _
    // Predicated region
    $region6: #{tpu_custom_call.1} parent=1 // pred_check
      _
    $region7: #{tpu_custom_call.1} parent=1 // pred_check_branch
      %41 = sbr.rel (0) target = $region9
    $region8: #{tpu_custom_call.1} parent=1 // pred_region
      %s43 = ssub.s32 1024, 1024
      %44 = vsyncadd [#allocation6], %s43
      %s45 = sshll.u32 [#allocation5], 4
      %s46 = int_to_ptr.vmem [resolvable:$true] %s45
      %51 = dma.hbm_to_vmem [thread:$0]  %s1, 1024, %s46, [#allocation6], 64, 64, 4
    $region9: #{tpu_custom_call.1} parent=1 // pred_fallthru
      _
    // Predicated region
    $region10: #{tpu_custom_call.1} parent=1 // pred_check
      _
    $region11: #{tpu_custom_call.1} parent=1 // pred_check_branch
      %53 = sbr.rel (0) target = $region13
    $region12: #{tpu_custom_call.1} parent=1 // pred_region
      _
    $region13: #{tpu_custom_call.1} parent=1 // pred_fallthru
      _
    // Predicated region
    $region14: #{tpu_custom_call.1} parent=1 // pred_check
      _
    $region15: #{tpu_custom_call.1} parent=1 // pred_check_branch
      %55 = sbr.rel (0) target = $region17
    $region16: #{tpu_custom_call.1} parent=1 // pred_region
      %s57 = ssub.s32 1024, 1024
      %58 = vsyncadd [#allocation6], %s57
      %s59 = sshll.u32 [#allocation7], 4
      %s60 = int_to_ptr.vmem [resolvable:$true] %s59
      %65 = dma.hbm_to_vmem [thread:$0]  %s3, 1024, %s60, [#allocation6], 64, 64, 4
    $region17: #{tpu_custom_call.1} parent=1 // pred_fallthru
      _
    // Predicated region
    $region18: #{tpu_custom_call.1} parent=1 // pred_check
      _
    $region19: #{tpu_custom_call.1} parent=1 // pred_check_branch
      %67 = sbr.rel (0) target = $region21
    $region20: #{tpu_custom_call.1} parent=1 // pred_region
      _
    $region21: #{tpu_custom_call.1} parent=1 // pred_fallthru
      _
    // Predicated region
    $region22: #{tpu_custom_call.1} parent=1 // pred_check
      _
    $region23: #{tpu_custom_call.1} parent=1 // pred_check_branch
      %69 = sbr.rel (0) target = $region25
    $region24: #{tpu_custom_call.1} parent=1 // pred_region
      %s71 = ssub.s32 1024, 1024
      %72 = vsyncadd [#allocation9], %s71
      %s73 = sshll.u32 [#allocation8], 4
      %s74 = int_to_ptr.vmem [resolvable:$true] %s73
      %79 = dma.hbm_to_vmem [thread:$0]  %s5, 1024, %s74, [#allocation9], 64, 64, 4
    $region25: #{tpu_custom_call.1} parent=1 // pred_fallthru
      _
    // Predicated region
    $region26: #{tpu_custom_call.1} parent=1 // pred_check
      _
    $region27: #{tpu_custom_call.1} parent=1 // pred_check_branch
      %81 = sbr.rel (0) target = $region29
    $region28: #{tpu_custom_call.1} parent=1 // pred_region
      _
    $region29: #{tpu_custom_call.1} parent=1 // pred_fallthru
      _
    // Predicated region
    $region30: #{tpu_custom_call.1} parent=1 // pred_check
      _
    $region31: #{tpu_custom_call.1} parent=1 // pred_check_branch
      %83 = sbr.rel (0) target = $region33
    $region32: #{tpu_custom_call.1} parent=1 // pred_region
      %s85 = ssub.s32 1024, 1024
      %86 = vsyncadd [#allocation9], %s85
      %s87 = sshll.u32 [#allocation10], 4
      %s88 = int_to_ptr.vmem [resolvable:$true] %s87
      %93 = dma.hbm_to_vmem [thread:$0]  %s7, 1024, %s88, [#allocation9], 64, 64, 4
    $region33: #{tpu_custom_call.1} parent=1 // pred_fallthru
      _
    // Predicated region
    $region34: #{tpu_custom_call.1} parent=1 // pred_check
      _
    $region35: #{tpu_custom_call.1} parent=1 // pred_check_branch
      %95 = sbr.rel (0) target = $region37
    $region36: #{tpu_custom_call.1} parent=1 // pred_region
      _
    $region37: #{tpu_custom_call.1} parent=1 // pred_fallthru
      _
    // Predicated region
    $region38: #{tpu_custom_call.1} parent=1 // pred_check
      _
    $region39: #{tpu_custom_call.1} parent=1 // pred_check_branch
      %97 = sbr.rel (0) target = $region41
    $region40: #{tpu_custom_call.1} parent=1 // pred_region
      %s99 = ssub.s32 1024, 1024
      %100 = vsyncadd [#allocation12], %s99
      %s101 = sshll.u32 [#allocation11], 4
      %s102 = int_to_ptr.vmem [resolvable:$true] %s101
      %107 = dma.hbm_to_vmem [thread:$0]  %s9, 1024, %s102, [#allocation12], 64, 64, 4
    $region41: #{tpu_custom_call.1} parent=1 // pred_fallthru
      _
    // Predicated region
    $region42: #{tpu_custom_call.1} parent=1 // pred_check
      _
    $region43: #{tpu_custom_call.1} parent=1 // pred_check_branch
      %109 = sbr.rel (0) target = $region45
    $region44: #{tpu_custom_call.1} parent=1 // pred_region
      _
    $region45: #{tpu_custom_call.1} parent=1 // pred_fallthru
      _
    // Predicated region
    $region46: #{tpu_custom_call.1} parent=1 // pred_check
      _
    $region47: #{tpu_custom_call.1} parent=1 // pred_check_branch
      %111 = sbr.rel (0) target = $region49
    $region48: #{tpu_custom_call.1} parent=1 // pred_region
      %s113 = ssub.s32 1024, 1024
      %114 = vsyncadd [#allocation12], %s113
      %s115 = sshll.u32 [#allocation13], 4
      %s116 = int_to_ptr.vmem [resolvable:$true] %s115
      %121 = dma.hbm_to_vmem [thread:$0]  %s11, 1024, %s116, [#allocation12], 64, 64, 4
    $region49: #{tpu_custom_call.1} parent=1 // pred_fallthru
      _
    // Predicated region
    $region50: #{tpu_custom_call.1} parent=1 // pred_check
      _
    $region51: #{tpu_custom_call.1} parent=1 // pred_check_branch
      %123 = sbr.rel (0) target = $region53
    $region52: #{tpu_custom_call.1} parent=1 // pred_region
      _
    $region53: #{tpu_custom_call.1} parent=1 // pred_fallthru
      _
    // Predicated region
    $region54: #{tpu_custom_call.1} parent=1 // pred_check
      _
    $region55: #{tpu_custom_call.1} parent=1 // pred_check_branch
      %125 = sbr.rel (0) target = $region57
    $region56: #{tpu_custom_call.1} parent=1 // pred_region
      %s127 = ssub.s32 1024, 1024
      %128 = vsyncadd [#allocation15], %s127
      %s129 = sshll.u32 [#allocation14], 4
      %s130 = int_to_ptr.vmem [resolvable:$true] %s129
      %135 = dma.hbm_to_vmem [thread:$0]  %s13, 1024, %s130, [#allocation15], 64, 64, 4
    $region57: #{tpu_custom_call.1} parent=1 // pred_fallthru
      _
    // Predicated region
    $region58: #{tpu_custom_call.1} parent=1 // pred_check
      _
    $region59: #{tpu_custom_call.1} parent=1 // pred_check_branch
      %137 = sbr.rel (0) target = $region61
    $region60: #{tpu_custom_call.1} parent=1 // pred_region
      _
    $region61: #{tpu_custom_call.1} parent=1 // pred_fallthru
      _
    // Predicated region
    $region62: #{tpu_custom_call.1} parent=1 // pred_check
      _
    $region63: #{tpu_custom_call.1} parent=1 // pred_check_branch
      %139 = sbr.rel (0) target = $region65
    $region64: #{tpu_custom_call.1} parent=1 // pred_region
      %s141 = ssub.s32 1024, 1024
      %142 = vsyncadd [#allocation15], %s141
      %s143 = sshll.u32 [#allocation16], 4
      %s144 = int_to_ptr.vmem [resolvable:$true] %s143
      %149 = dma.hbm_to_vmem [thread:$0]  %s15, 1024, %s144, [#allocation15], 64, 64, 4
    $region65: #{tpu_custom_call.1} parent=1 // pred_fallthru
      _
    // Predicated region
    $region66: #{tpu_custom_call.1} parent=1 // pred_check
      _
    $region67: #{tpu_custom_call.1} parent=1 // pred_check_branch
      %151 = sbr.rel (0) target = $region69
    $region68: #{tpu_custom_call.1} parent=1 // pred_region
      _
    $region69: #{tpu_custom_call.1} parent=1 // pred_fallthru
      _
    // Predicated region
    $region70: #{tpu_custom_call.1} parent=1 // pred_check
      _
    $region71: #{tpu_custom_call.1} parent=1 // pred_check_branch
      %153 = sbr.rel (0) target = $region73
    $region72: #{tpu_custom_call.1} parent=1 // pred_region
      %154 = dma.done [#allocation3], 4096
    $region73: #{tpu_custom_call.1} parent=1 // pred_fallthru
      _
    // Predicated region
    $region74: #{tpu_custom_call.1} parent=1 // pred_check
      _
    $region75: #{tpu_custom_call.1} parent=1 // pred_check_branch
      %156 = sbr.rel (0) target = $region77
    $region76: #{tpu_custom_call.1} parent=1 // pred_region
      %157 = dma.done [#allocation6], 1024
    $region77: #{tpu_custom_call.1} parent=1 // pred_fallthru
      _
    // Predicated region
    $region78: #{tpu_custom_call.1} parent=1 // pred_check
      _
    $region79: #{tpu_custom_call.1} parent=1 // pred_check_branch
      %159 = sbr.rel (0) target = $region81
    $region80: #{tpu_custom_call.1} parent=1 // pred_region
      %160 = dma.done [#allocation6], 1024
    $region81: #{tpu_custom_call.1} parent=1 // pred_fallthru
      _
    // Predicated region
    $region82: #{tpu_custom_call.1} parent=1 // pred_check
      _
    $region83: #{tpu_custom_call.1} parent=1 // pred_check_branch
      %162 = sbr.rel (0) target = $region85
    $region84: #{tpu_custom_call.1} parent=1 // pred_region
      %163 = dma.done [#allocation9], 1024
    $region85: #{tpu_custom_call.1} parent=1 // pred_fallthru
      _
    // Predicated region
    $region86: #{tpu_custom_call.1} parent=1 // pred_check
      _
    $region87: #{tpu_custom_call.1} parent=1 // pred_check_branch
      %165 = sbr.rel (0) target = $region89
    $region88: #{tpu_custom_call.1} parent=1 // pred_region
      %166 = dma.done [#allocation9], 1024
    $region89: #{tpu_custom_call.1} parent=1 // pred_fallthru
      _
    // Predicated region
    $region90: #{tpu_custom_call.1} parent=1 // pred_check
      _
    $region91: #{tpu_custom_call.1} parent=1 // pred_check_branch
      %168 = sbr.rel (0) target = $region93
    $region92: #{tpu_custom_call.1} parent=1 // pred_region
      %169 = dma.done [#allocation12], 1024
    $region93: #{tpu_custom_call.1} parent=1 // pred_fallthru
      _
    // Predicated region
    $region94: #{tpu_custom_call.1} parent=1 // pred_check
      _
    $region95: #{tpu_custom_call.1} parent=1 // pred_check_branch
      %171 = sbr.rel (0) target = $region97
    $region96: #{tpu_custom_call.1} parent=1 // pred_region
      %172 = dma.done [#allocation12], 1024
    $region97: #{tpu_custom_call.1} parent=1 // pred_fallthru
      _
    // Predicated region
    $region98: #{tpu_custom_call.1} parent=1 // pred_check
      _
    $region99: #{tpu_custom_call.1} parent=1 // pred_check_branch
      %174 = sbr.rel (0) target = $region101
    $region100: #{tpu_custom_call.1} parent=1 // pred_region
      %175 = dma.done [#allocation15], 1024
    $region101: #{tpu_custom_call.1} parent=1 // pred_fallthru
      _
    // Predicated region
    $region102: #{tpu_custom_call.1} parent=1 // pred_check
      _
    $region103: #{tpu_custom_call.1} parent=1 // pred_check_branch
      %177 = sbr.rel (0) target = $region105
    $region104: #{tpu_custom_call.1} parent=1 // pred_region
      %178 = dma.done [#allocation15], 1024
    $region105: #{tpu_custom_call.1} parent=1 // pred_fallthru
      _
    %v180 = vld [vmem:[#allocation2] sm:$0xf]
    %v181 = vld [vmem:[#allocation2 + $0x4] sm:$0xf]
    %v182 = vld [vmem:[#allocation2 + $0x8] sm:$0xf]
    %v183 = vld [vmem:[#allocation2 + $0xc] sm:$0xf]
    %v184 = vld [vmem:[#allocation2 + $0x10] sm:$0xf]
    %v185 = vld [vmem:[#allocation2 + $0x14] sm:$0xf]
    %v186 = vld [vmem:[#allocation2 + $0x18] sm:$0xf]
    %v187 = vld [vmem:[#allocation2 + $0x1c] sm:$0xf]
    %v188 = vld [vmem:[#allocation2 + $0x20] sm:$0xf]
    %v189 = vld [vmem:[#allocation2 + $0x24] sm:$0xf]
    %v190 = vld [vmem:[#allocation2 + $0x28] sm:$0xf]
    %v191 = vld [vmem:[#allocation2 + $0x2c] sm:$0xf]
    %v192 = vld [vmem:[#allocation2 + $0x30] sm:$0xf]
    %v193 = vld [vmem:[#allocation2 + $0x34] sm:$0xf]
    %v194 = vld [vmem:[#allocation2 + $0x38] sm:$0xf]
    %v195 = vld [vmem:[#allocation2 + $0x3c] sm:$0xf]
    %v196 = vld [vmem:[#allocation2 + $0x40] sm:$0xf]
    %v197 = vld [vmem:[#allocation2 + $0x44] sm:$0xf]
    %v198 = vld [vmem:[#allocation2 + $0x48] sm:$0xf]
    %v199 = vld [vmem:[#allocation2 + $0x4c] sm:$0xf]
    %v200 = vld [vmem:[#allocation2 + $0x50] sm:$0xf]
    %v201 = vld [vmem:[#allocation2 + $0x54] sm:$0xf]
    %v202 = vld [vmem:[#allocation2 + $0x58] sm:$0xf]
    %v203 = vld [vmem:[#allocation2 + $0x5c] sm:$0xf]
    %v204 = vld [vmem:[#allocation2 + $0x60] sm:$0xf]
    %v205 = vld [vmem:[#allocation2 + $0x64] sm:$0xf]
    %v206 = vld [vmem:[#allocation2 + $0x68] sm:$0xf]
    %v207 = vld [vmem:[#allocation2 + $0x6c] sm:$0xf]
    %v208 = vld [vmem:[#allocation2 + $0x70] sm:$0xf]
    %v209 = vld [vmem:[#allocation2 + $0x74] sm:$0xf]
    %v210 = vld [vmem:[#allocation2 + $0x78] sm:$0xf]
    %v211 = vld [vmem:[#allocation2 + $0x7c] sm:$0xf]
    %v212 = vld [vmem:[#allocation2 + $0x80] sm:$0xf]
    %v213 = vld [vmem:[#allocation2 + $0x84] sm:$0xf]
    %v214 = vld [vmem:[#allocation2 + $0x88] sm:$0xf]
    %v215 = vld [vmem:[#allocation2 + $0x8c] sm:$0xf]
    %v216 = vld [vmem:[#allocation2 + $0x90] sm:$0xf]
    %v217 = vld [vmem:[#allocation2 + $0x94] sm:$0xf]
    %v218 = vld [vmem:[#allocation2 + $0x98] sm:$0xf]
    %v219 = vld [vmem:[#allocation2 + $0x9c] sm:$0xf]
    %v220 = vld [vmem:[#allocation2 + $0xa0] sm:$0xf]
    %v221 = vld [vmem:[#allocation2 + $0xa4] sm:$0xf]
    %v222 = vld [vmem:[#allocation2 + $0xa8] sm:$0xf]
    %v223 = vld [vmem:[#allocation2 + $0xac] sm:$0xf]
    %v224 = vld [vmem:[#allocation2 + $0xb0] sm:$0xf]
    %v225 = vld [vmem:[#allocation2 + $0xb4] sm:$0xf]
    %v226 = vld [vmem:[#allocation2 + $0xb8] sm:$0xf]
    %v227 = vld [vmem:[#allocation2 + $0xbc] sm:$0xf]
    %v228 = vld [vmem:[#allocation2 + $0xc0] sm:$0xf]
    %v229 = vld [vmem:[#allocation2 + $0xc4] sm:$0xf]
    %v230 = vld [vmem:[#allocation2 + $0xc8] sm:$0xf]
    %v231 = vld [vmem:[#allocation2 + $0xcc] sm:$0xf]
    %v232 = vld [vmem:[#allocation2 + $0xd0] sm:$0xf]
    %v233 = vld [vmem:[#allocation2 + $0xd4] sm:$0xf]
    %v234 = vld [vmem:[#allocation2 + $0xd8] sm:$0xf]
    %v235 = vld [vmem:[#allocation2 + $0xdc] sm:$0xf]
    %v236 = vld [vmem:[#allocation2 + $0xe0] sm:$0xf]
    %v237 = vld [vmem:[#allocation2 + $0xe4] sm:$0xf]
    %v238 = vld [vmem:[#allocation2 + $0xe8] sm:$0xf]
    %v239 = vld [vmem:[#allocation2 + $0xec] sm:$0xf]
    %v240 = vld [vmem:[#allocation2 + $0xf0] sm:$0xf]
    %v241 = vld [vmem:[#allocation2 + $0xf4] sm:$0xf]
    %v242 = vld [vmem:[#allocation2 + $0xf8] sm:$0xf]
    %v243 = vld [vmem:[#allocation2 + $0xfc] sm:$0xf]
    %v244 = vld [vmem:[#allocation5] sm:$0xf]
    %v245 = vld [vmem:[#allocation5 + $0x4] sm:$0xf]
    %v246 = vld [vmem:[#allocation5 + $0x8] sm:$0xf]
    %v247 = vld [vmem:[#allocation5 + $0xc] sm:$0xf]
    %v248 = vld [vmem:[#allocation5 + $0x10] sm:$0xf]
    %v249 = vld [vmem:[#allocation5 + $0x14] sm:$0xf]
    %v250 = vld [vmem:[#allocation5 + $0x18] sm:$0xf]
    %v251 = vld [vmem:[#allocation5 + $0x1c] sm:$0xf]
    %v252 = vld [vmem:[#allocation5 + $0x20] sm:$0xf]
    %v253 = vld [vmem:[#allocation5 + $0x24] sm:$0xf]
    %v254 = vld [vmem:[#allocation5 + $0x28] sm:$0xf]
    %v255 = vld [vmem:[#allocation5 + $0x2c] sm:$0xf]
    %v256 = vld [vmem:[#allocation5 + $0x30] sm:$0xf]
    %v257 = vld [vmem:[#allocation5 + $0x34] sm:$0xf]
    %v258 = vld [vmem:[#allocation5 + $0x38] sm:$0xf]
    %v259 = vld [vmem:[#allocation5 + $0x3c] sm:$0xf]
    %v260 = vld [vmem:[%s2] sm:$0x1]
    %v262 = vlaneseq
    %v263 = vshrl.u32 %v262, 7
    %v264 = vsub.s32 0, %v263
    %v265 = vrot.slane %v260, %v264
    %v331 = vunpack.c.l.b16 %v180
    %v332 = vunpack.c.l.b16 %v181
    %v333 = vunpack.c.l.b16 %v182
    %v334 = vunpack.c.l.b16 %v183
    %v335 = vunpack.c.l.b16 %v184
    %v336 = vunpack.c.l.b16 %v185
    %v337 = vunpack.c.l.b16 %v186
    %v338 = vunpack.c.l.b16 %v187
    %v339 = vunpack.c.l.b16 %v188
    %v340 = vunpack.c.l.b16 %v189
    %v341 = vunpack.c.l.b16 %v190
    %v342 = vunpack.c.l.b16 %v191
    %v343 = vunpack.c.l.b16 %v192
    %v344 = vunpack.c.l.b16 %v193
    %v345 = vunpack.c.l.b16 %v194
    %v346 = vunpack.c.l.b16 %v195
    %v347 = vunpack.c.l.b16 %v196
    %v348 = vunpack.c.l.b16 %v197
    %v349 = vunpack.c.l.b16 %v198
    %v350 = vunpack.c.l.b16 %v199
    %v351 = vunpack.c.l.b16 %v200
    %v352 = vunpack.c.l.b16 %v201
    %v353 = vunpack.c.l.b16 %v202
    %v354 = vunpack.c.l.b16 %v203
    %v355 = vunpack.c.l.b16 %v204
    %v356 = vunpack.c.l.b16 %v205
    %v357 = vunpack.c.l.b16 %v206
    %v358 = vunpack.c.l.b16 %v207
    %v359 = vunpack.c.l.b16 %v208
    %v360 = vunpack.c.l.b16 %v209
    %v361 = vunpack.c.l.b16 %v210
    %v362 = vunpack.c.l.b16 %v211
    %v363 = vunpack.c.l.b16 %v212
    %v364 = vunpack.c.l.b16 %v213
    %v365 = vunpack.c.l.b16 %v214
    %v366 = vunpack.c.l.b16 %v215
    %v367 = vunpack.c.l.b16 %v216
    %v368 = vunpack.c.l.b16 %v217
    %v369 = vunpack.c.l.b16 %v218
    %v370 = vunpack.c.l.b16 %v219
    %v371 = vunpack.c.l.b16 %v220
    %v372 = vunpack.c.l.b16 %v221
    %v373 = vunpack.c.l.b16 %v222
    %v374 = vunpack.c.l.b16 %v223
    %v375 = vunpack.c.l.b16 %v224
    %v376 = vunpack.c.l.b16 %v225
    %v377 = vunpack.c.l.b16 %v226
    %v378 = vunpack.c.l.b16 %v227
    %v379 = vunpack.c.l.b16 %v228
    %v380 = vunpack.c.l.b16 %v229
    %v381 = vunpack.c.l.b16 %v230
    %v382 = vunpack.c.l.b16 %v231
    %v383 = vunpack.c.l.b16 %v232
    %v384 = vunpack.c.l.b16 %v233
    %v385 = vunpack.c.l.b16 %v234
    %v386 = vunpack.c.l.b16 %v235
    %v387 = vunpack.c.l.b16 %v236
    %v388 = vunpack.c.l.b16 %v237
    %v389 = vunpack.c.l.b16 %v238
    %v390 = vunpack.c.l.b16 %v239
    %v391 = vunpack.c.l.b16 %v240
    %v392 = vunpack.c.l.b16 %v241
    %v393 = vunpack.c.l.b16 %v242
    %v394 = vunpack.c.l.b16 %v243
    %v395 = vpack.c.b16 %v332, %v331
    %v396 = vpack.c.b16 %v334, %v333
    %v397 = vpack.c.b16 %v336, %v335
    %v398 = vpack.c.b16 %v338, %v337
    %v399 = vpack.c.b16 %v340, %v339
    %v400 = vpack.c.b16 %v342, %v341
    %v401 = vpack.c.b16 %v344, %v343
    %v402 = vpack.c.b16 %v346, %v345
    %v403 = vpack.c.b16 %v348, %v347
    %v404 = vpack.c.b16 %v350, %v349
    %v405 = vpack.c.b16 %v352, %v351
    %v406 = vpack.c.b16 %v354, %v353
    %v407 = vpack.c.b16 %v356, %v355
    %v408 = vpack.c.b16 %v358, %v357
    %v409 = vpack.c.b16 %v360, %v359
    %v410 = vpack.c.b16 %v362, %v361
    %v411 = vpack.c.b16 %v364, %v363
    %v412 = vpack.c.b16 %v366, %v365
    %v413 = vpack.c.b16 %v368, %v367
    %v414 = vpack.c.b16 %v370, %v369
    %v415 = vpack.c.b16 %v372, %v371
    %v416 = vpack.c.b16 %v374, %v373
    %v417 = vpack.c.b16 %v376, %v375
    %v418 = vpack.c.b16 %v378, %v377
    %v419 = vpack.c.b16 %v380, %v379
    %v420 = vpack.c.b16 %v382, %v381
    %v421 = vpack.c.b16 %v384, %v383
    %v422 = vpack.c.b16 %v386, %v385
    %v423 = vpack.c.b16 %v388, %v387
    %v424 = vpack.c.b16 %v390, %v389
    %v425 = vpack.c.b16 %v392, %v391
    %v426 = vpack.c.b16 %v394, %v393
    %v475 = vunpack.c.l.b16 %v244
    %v476 = vunpack.c.l.b16 %v245
    %v477 = vunpack.c.l.b16 %v246
    %v478 = vunpack.c.l.b16 %v247
    %v479 = vunpack.c.l.b16 %v248
    %v480 = vunpack.c.l.b16 %v249
    %v481 = vunpack.c.l.b16 %v250
    %v482 = vunpack.c.l.b16 %v251
    %v483 = vunpack.c.l.b16 %v252
    %v484 = vunpack.c.l.b16 %v253
    %v485 = vunpack.c.l.b16 %v254
    %v486 = vunpack.c.l.b16 %v255
    %v487 = vunpack.c.l.b16 %v256
    %v488 = vunpack.c.l.b16 %v257
    %v489 = vunpack.c.l.b16 %v258
    %v490 = vunpack.c.l.b16 %v259
    %v491 = vpack.c.b16 %v476, %v475
    %v492 = vpack.c.b16 %v478, %v477
    %v493 = vpack.c.b16 %v480, %v479
    %v494 = vpack.c.b16 %v482, %v481
    %v495 = vpack.c.b16 %v484, %v483
    %v496 = vpack.c.b16 %v486, %v485
    %v497 = vpack.c.b16 %v488, %v487
    %v498 = vpack.c.b16 %v490, %v489
    %507 = vmatprep.subr.bf16.mxu0 0
    %508 = vmatpush1.bf16.msra.mxu0 %v491
    %509 = vmatprep.subr.bf16.mxu0 0
    %510 = vmatpush1.bf16.msra.mxu0 %v492
    %511 = vmatprep.subr.bf16.mxu0 0
    %512 = vmatpush1.bf16.msra.mxu0 %v493
    %513 = vmatprep.subr.bf16.mxu0 0
    %514 = vmatpush1.bf16.msra.mxu0 %v494
    %515 = vmatprep.subr.bf16.mxu0 0
    %516 = vmatpush1.bf16.msra.mxu0 %v495
    %517 = vmatprep.subr.bf16.mxu0 0
    %518 = vmatpush1.bf16.msra.mxu0 %v496
    %519 = vmatprep.subr.bf16.mxu0 0
    %520 = vmatpush1.bf16.msra.mxu0 %v497
    %521 = vmatprep.subr.bf16.mxu0 0
    %522 = vmatpush1.bf16.msra.mxu0 %v498
    %523 = vmatprep.subr.bf16.mxu0 0
    %524 = vmatpush1.bf16.msra.mxu0 0
    %525 = vmatprep.subr.bf16.mxu0 0
    %526 = vmatpush1.bf16.msra.mxu0 0
    %527 = vmatprep.subr.bf16.mxu0 0
    %528 = vmatpush1.bf16.msra.mxu0 0
    %529 = vmatprep.subr.bf16.mxu0 0
    %530 = vmatpush1.bf16.msra.mxu0 0
    %531 = vmatprep.subr.bf16.mxu0 0
    %532 = vmatpush1.bf16.msra.mxu0 0
    %533 = vmatprep.subr.bf16.mxu0 0
    %534 = vmatpush1.bf16.msra.mxu0 0
    %535 = vmatprep.subr.bf16.mxu0 0
    %536 = vmatpush1.bf16.msra.mxu0 0
    %537 = vmatprep.subr.bf16.mxu0 0
    %538 = vmatpush1.bf16.msra.mxu0 0
    %539 = vmatprep.mubr.bf16.mxu0 0
    %540 = vmatmul.mubr.bf16.gmra.mrb[0].mxu0 %v395
    %v541 = vpop.f32.mrb[0].mxu0
    %v542 = vadd.f32 %v265, %v541
    %v543 = vpop.f32.mrb[0].mxu0
    %v544 = vpop.f32.mrb[0].mxu0
    %v545 = vadd.f32 %v265, %v544
    %v546 = vpop.f32.mrb[0].mxu0
    %547 = vmatprep.mubr.bf16.mxu0 0
    %548 = vmatmul.mubr.bf16.gmra.mrb[0].mxu0 %v396
    %v549 = vpop.f32.mrb[0].mxu0
    %v550 = vadd.f32 %v265, %v549
    %v551 = vpop.f32.mrb[0].mxu0
    %v552 = vpop.f32.mrb[0].mxu0
    %v553 = vadd.f32 %v265, %v552
    %v554 = vpop.f32.mrb[0].mxu0
    %555 = vmatprep.mubr.bf16.mxu0 0
    %556 = vmatmul.mubr.bf16.gmra.mrb[0].mxu0 %v397
    %v557 = vpop.f32.mrb[0].mxu0
    %v558 = vadd.f32 %v265, %v557
    %v559 = vpop.f32.mrb[0].mxu0
    %v560 = vpop.f32.mrb[0].mxu0
    %v561 = vadd.f32 %v265, %v560
    %v562 = vpop.f32.mrb[0].mxu0
    %563 = vmatprep.mubr.bf16.mxu0 0
    %564 = vmatmul.mubr.bf16.gmra.mrb[0].mxu0 %v398
    %v565 = vpop.f32.mrb[0].mxu0
    %v566 = vadd.f32 %v265, %v565
    %v567 = vpop.f32.mrb[0].mxu0
    %v568 = vpop.f32.mrb[0].mxu0
    %v569 = vadd.f32 %v265, %v568
    %v570 = vpop.f32.mrb[0].mxu0
    %571 = vmatprep.mubr.bf16.mxu0 0
    %572 = vmatmul.mubr.bf16.gmra.mrb[0].mxu0 %v399
    %v573 = vpop.f32.mrb[0].mxu0
    %v574 = vadd.f32 %v265, %v573
    %v575 = vpop.f32.mrb[0].mxu0
    %v576 = vpop.f32.mrb[0].mxu0
    %v577 = vadd.f32 %v265, %v576
    %v578 = vpop.f32.mrb[0].mxu0
    %579 = vmatprep.mubr.bf16.mxu0 0
    %580 = vmatmul.mubr.bf16.gmra.mrb[0].mxu0 %v400
    %v581 = vpop.f32.mrb[0].mxu0
    %v582 = vadd.f32 %v265, %v581
    %v583 = vpop.f32.mrb[0].mxu0
    %v584 = vpop.f32.mrb[0].mxu0
    %v585 = vadd.f32 %v265, %v584
    %v586 = vpop.f32.mrb[0].mxu0
    %587 = vmatprep.mubr.bf16.mxu0 0
    %588 = vmatmul.mubr.bf16.gmra.mrb[0].mxu0 %v401
    %v589 = vpop.f32.mrb[0].mxu0
    %v590 = vadd.f32 %v265, %v589
    %v591 = vpop.f32.mrb[0].mxu0
    %v592 = vpop.f32.mrb[0].mxu0
    %v593 = vadd.f32 %v265, %v592
    %v594 = vpop.f32.mrb[0].mxu0
    %595 = vmatprep.mubr.bf16.mxu0 0
    %596 = vmatmul.mubr.bf16.gmra.mrb[0].mxu0 %v402
    %v597 = vpop.f32.mrb[0].mxu0
    %v598 = vadd.f32 %v265, %v597
    %v599 = vpop.f32.mrb[0].mxu0
    %v600 = vpop.f32.mrb[0].mxu0
    %v601 = vadd.f32 %v265, %v600
    %v602 = vpop.f32.mrb[0].mxu0
    %603 = vmatprep.mubr.bf16.mxu0 0
    %604 = vmatmul.mubr.bf16.gmra.mrb[0].mxu0 %v403
    %v605 = vpop.f32.mrb[0].mxu0
    %v606 = vadd.f32 %v265, %v605
    %v607 = vpop.f32.mrb[0].mxu0
    %v608 = vpop.f32.mrb[0].mxu0
    %v609 = vadd.f32 %v265, %v608
    %v610 = vpop.f32.mrb[0].mxu0
    %611 = vmatprep.mubr.bf16.mxu0 0
    %612 = vmatmul.mubr.bf16.gmra.mrb[0].mxu0 %v404
    %v613 = vpop.f32.mrb[0].mxu0
    %v614 = vadd.f32 %v265, %v613
    %v615 = vpop.f32.mrb[0].mxu0
    %v616 = vpop.f32.mrb[0].mxu0
    %v617 = vadd.f32 %v265, %v616
    %v618 = vpop.f32.mrb[0].mxu0
    %619 = vmatprep.mubr.bf16.mxu0 0
    %620 = vmatmul.mubr.bf16.gmra.mrb[0].mxu0 %v405
    %v621 = vpop.f32.mrb[0].mxu0
    %v622 = vadd.f32 %v265, %v621
    %v623 = vpop.f32.mrb[0].mxu0
    %v624 = vpop.f32.mrb[0].mxu0
    %v625 = vadd.f32 %v265, %v624
    %v626 = vpop.f32.mrb[0].mxu0
    %627 = vmatprep.mubr.bf16.mxu0 0
    %628 = vmatmul.mubr.bf16.gmra.mrb[0].mxu0 %v406
    %v629 = vpop.f32.mrb[0].mxu0
    %v630 = vadd.f32 %v265, %v629
    %v631 = vpop.f32.mrb[0].mxu0
    %v632 = vpop.f32.mrb[0].mxu0
    %v633 = vadd.f32 %v265, %v632
    %v634 = vpop.f32.mrb[0].mxu0
    %635 = vmatprep.mubr.bf16.mxu0 0
    %636 = vmatmul.mubr.bf16.gmra.mrb[0].mxu0 %v407
    %v637 = vpop.f32.mrb[0].mxu0
    %v638 = vadd.f32 %v265, %v637
    %v639 = vpop.f32.mrb[0].mxu0
    %v640 = vpop.f32.mrb[0].mxu0
    %v641 = vadd.f32 %v265, %v640
    %v642 = vpop.f32.mrb[0].mxu0
    %643 = vmatprep.mubr.bf16.mxu0 0
    %644 = vmatmul.mubr.bf16.gmra.mrb[0].mxu0 %v408
    %v645 = vpop.f32.mrb[0].mxu0
    %v646 = vadd.f32 %v265, %v645
    %v647 = vpop.f32.mrb[0].mxu0
    %v648 = vpop.f32.mrb[0].mxu0
    %v649 = vadd.f32 %v265, %v648
    %v650 = vpop.f32.mrb[0].mxu0
    %651 = vmatprep.mubr.bf16.mxu0 0
    %652 = vmatmul.mubr.bf16.gmra.mrb[0].mxu0 %v409
    %v653 = vpop.f32.mrb[0].mxu0
    %v654 = vadd.f32 %v265, %v653
    %v655 = vpop.f32.mrb[0].mxu0
    %v656 = vpop.f32.mrb[0].mxu0
    %v657 = vadd.f32 %v265, %v656
    %v658 = vpop.f32.mrb[0].mxu0
    %659 = vmatprep.mubr.bf16.mxu0 0
    %660 = vmatmul.mubr.bf16.gmra.mrb[0].mxu0 %v410
    %v661 = vpop.f32.mrb[0].mxu0
    %v662 = vadd.f32 %v265, %v661
    %v663 = vpop.f32.mrb[0].mxu0
    %v664 = vpop.f32.mrb[0].mxu0
    %v665 = vadd.f32 %v265, %v664
    %v666 = vpop.f32.mrb[0].mxu0
    %667 = vmatprep.mubr.bf16.mxu0 0
    %668 = vmatmul.mubr.bf16.gmra.mrb[0].mxu0 %v411
    %v669 = vpop.f32.mrb[0].mxu0
    %v670 = vadd.f32 %v265, %v669
    %v671 = vpop.f32.mrb[0].mxu0
    %v672 = vpop.f32.mrb[0].mxu0
    %v673 = vadd.f32 %v265, %v672
    %v674 = vpop.f32.mrb[0].mxu0
    %675 = vmatprep.mubr.bf16.mxu0 0
    %676 = vmatmul.mubr.bf16.gmra.mrb[0].mxu0 %v412
    %v677 = vpop.f32.mrb[0].mxu0
    %v678 = vadd.f32 %v265, %v677
    %v679 = vpop.f32.mrb[0].mxu0
    %v680 = vpop.f32.mrb[0].mxu0
    %v681 = vadd.f32 %v265, %v680
    %v682 = vpop.f32.mrb[0].mxu0
    %683 = vmatprep.mubr.bf16.mxu0 0
    %684 = vmatmul.mubr.bf16.gmra.mrb[0].mxu0 %v413
    %v685 = vpop.f32.mrb[0].mxu0
    %v686 = vadd.f32 %v265, %v685
    %v687 = vpop.f32.mrb[0].mxu0
    %v688 = vpop.f32.mrb[0].mxu0
    %v689 = vadd.f32 %v265, %v688
    %v690 = vpop.f32.mrb[0].mxu0
    %691 = vmatprep.mubr.bf16.mxu0 0
    %692 = vmatmul.mubr.bf16.gmra.mrb[0].mxu0 %v414
    %v693 = vpop.f32.mrb[0].mxu0
    %v694 = vadd.f32 %v265, %v693
    %v695 = vpop.f32.mrb[0].mxu0
    %v696 = vpop.f32.mrb[0].mxu0
    %v697 = vadd.f32 %v265, %v696
    %v698 = vpop.f32.mrb[0].mxu0
    %699 = vmatprep.mubr.bf16.mxu0 0
    %700 = vmatmul.mubr.bf16.gmra.mrb[0].mxu0 %v415
    %v701 = vpop.f32.mrb[0].mxu0
    %v702 = vadd.f32 %v265, %v701
    %v703 = vpop.f32.mrb[0].mxu0
    %v704 = vpop.f32.mrb[0].mxu0
    %v705 = vadd.f32 %v265, %v704
    %v706 = vpop.f32.mrb[0].mxu0
    %707 = vmatprep.mubr.bf16.mxu0 0
    %708 = vmatmul.mubr.bf16.gmra.mrb[0].mxu0 %v416
    %v709 = vpop.f32.mrb[0].mxu0
    %v710 = vadd.f32 %v265, %v709
    %v711 = vpop.f32.mrb[0].mxu0
    %v712 = vpop.f32.mrb[0].mxu0
    %v713 = vadd.f32 %v265, %v712
    %v714 = vpop.f32.mrb[0].mxu0
    %715 = vmatprep.mubr.bf16.mxu0 0
    %716 = vmatmul.mubr.bf16.gmra.mrb[0].mxu0 %v417
    %v717 = vpop.f32.mrb[0].mxu0
    %v718 = vadd.f32 %v265, %v717
    %v719 = vpop.f32.mrb[0].mxu0
    %v720 = vpop.f32.mrb[0].mxu0
    %v721 = vadd.f32 %v265, %v720
    %v722 = vpop.f32.mrb[0].mxu0
    %723 = vmatprep.mubr.bf16.mxu0 0
    %724 = vmatmul.mubr.bf16.gmra.mrb[0].mxu0 %v418
    %v725 = vpop.f32.mrb[0].mxu0
    %v726 = vadd.f32 %v265, %v725
    %v727 = vpop.f32.mrb[0].mxu0
    %v728 = vpop.f32.mrb[0].mxu0
    %v729 = vadd.f32 %v265, %v728
    %v730 = vpop.f32.mrb[0].mxu0
    %731 = vmatprep.mubr.bf16.mxu0 0
    %732 = vmatmul.mubr.bf16.gmra.mrb[0].mxu0 %v419
    %v733 = vpop.f32.mrb[0].mxu0
    %v734 = vadd.f32 %v265, %v733
    %v735 = vpop.f32.mrb[0].mxu0
    %v736 = vpop.f32.mrb[0].mxu0
    %v737 = vadd.f32 %v265, %v736
    %v738 = vpop.f32.mrb[0].mxu0
    %739 = vmatprep.mubr.bf16.mxu0 0
    %740 = vmatmul.mubr.bf16.gmra.mrb[0].mxu0 %v420
    %v741 = vpop.f32.mrb[0].mxu0
    %v742 = vadd.f32 %v265, %v741
    %v743 = vpop.f32.mrb[0].mxu0
    %v744 = vpop.f32.mrb[0].mxu0
    %v745 = vadd.f32 %v265, %v744
    %v746 = vpop.f32.mrb[0].mxu0
    %747 = vmatprep.mubr.bf16.mxu0 0
    %748 = vmatmul.mubr.bf16.gmra.mrb[0].mxu0 %v421
    %v749 = vpop.f32.mrb[0].mxu0
    %v750 = vadd.f32 %v265, %v749
    %v751 = vpop.f32.mrb[0].mxu0
    %v752 = vpop.f32.mrb[0].mxu0
    %v753 = vadd.f32 %v265, %v752
    %v754 = vpop.f32.mrb[0].mxu0
    %755 = vmatprep.mubr.bf16.mxu0 0
    %756 = vmatmul.mubr.bf16.gmra.mrb[0].mxu0 %v422
    %v757 = vpop.f32.mrb[0].mxu0
    %v758 = vadd.f32 %v265, %v757
    %v759 = vpop.f32.mrb[0].mxu0
    %v760 = vpop.f32.mrb[0].mxu0
    %v761 = vadd.f32 %v265, %v760
    %v762 = vpop.f32.mrb[0].mxu0
    %763 = vmatprep.mubr.bf16.mxu0 0
    %764 = vmatmul.mubr.bf16.gmra.mrb[0].mxu0 %v423
    %v765 = vpop.f32.mrb[0].mxu0
    %v766 = vadd.f32 %v265, %v765
    %v767 = vpop.f32.mrb[0].mxu0
    %v768 = vpop.f32.mrb[0].mxu0
    %v769 = vadd.f32 %v265, %v768
    %v770 = vpop.f32.mrb[0].mxu0
    %771 = vmatprep.mubr.bf16.mxu0 0
    %772 = vmatmul.mubr.bf16.gmra.mrb[0].mxu0 %v424
    %v773 = vpop.f32.mrb[0].mxu0
    %v774 = vadd.f32 %v265, %v773
    %v775 = vpop.f32.mrb[0].mxu0
    %v776 = vpop.f32.mrb[0].mxu0
    %v777 = vadd.f32 %v265, %v776
    %v778 = vpop.f32.mrb[0].mxu0
    %779 = vmatprep.mubr.bf16.mxu0 0
    %780 = vmatmul.mubr.bf16.gmra.mrb[0].mxu0 %v425
    %v781 = vpop.f32.mrb[0].mxu0
    %v782 = vadd.f32 %v265, %v781
    %v783 = vpop.f32.mrb[0].mxu0
    %v784 = vpop.f32.mrb[0].mxu0
    %v785 = vadd.f32 %v265, %v784
    %v786 = vpop.f32.mrb[0].mxu0
    %787 = vmatprep.mubr.bf16.mxu0 0
    %788 = vmatmul.mubr.bf16.gmra.mrb[0].mxu0 %v426
    %v789 = vpop.f32.mrb[0].mxu0
    %v790 = vadd.f32 %v265, %v789
    %v791 = vpop.f32.mrb[0].mxu0
    %v792 = vpop.f32.mrb[0].mxu0
    %v793 = vadd.f32 %v265, %v792
    %v794 = vpop.f32.mrb[0].mxu0
    %795 = vdwg.mxu0
    %v796 = vmax.f32 %v542, 0.0
    %v797 = vmax.f32 %v545, 0.0
    %v798 = vmax.f32 %v550, 0.0
    %v799 = vmax.f32 %v553, 0.0
    %v800 = vmax.f32 %v558, 0.0
    %v801 = vmax.f32 %v561, 0.0
    %v802 = vmax.f32 %v566, 0.0
    %v803 = vmax.f32 %v569, 0.0
    %v804 = vmax.f32 %v574, 0.0
    %v805 = vmax.f32 %v577, 0.0
    %v806 = vmax.f32 %v582, 0.0
    %v807 = vmax.f32 %v585, 0.0
    %v808 = vmax.f32 %v590, 0.0
    %v809 = vmax.f32 %v593, 0.0
    %v810 = vmax.f32 %v598, 0.0
    %v811 = vmax.f32 %v601, 0.0
    %v812 = vmax.f32 %v606, 0.0
    %v813 = vmax.f32 %v609, 0.0
    %v814 = vmax.f32 %v614, 0.0
    %v815 = vmax.f32 %v617, 0.0
    %v816 = vmax.f32 %v622, 0.0
    %v817 = vmax.f32 %v625, 0.0
    %v818 = vmax.f32 %v630, 0.0
    %v819 = vmax.f32 %v633, 0.0
    %v820 = vmax.f32 %v638, 0.0
    %v821 = vmax.f32 %v641, 0.0
    %v822 = vmax.f32 %v646, 0.0
    %v823 = vmax.f32 %v649, 0.0
    %v824 = vmax.f32 %v654, 0.0
    %v825 = vmax.f32 %v657, 0.0
    %v826 = vmax.f32 %v662, 0.0
    %v827 = vmax.f32 %v665, 0.0
    %v828 = vmax.f32 %v670, 0.0
    %v829 = vmax.f32 %v673, 0.0
    %v830 = vmax.f32 %v678, 0.0
    %v831 = vmax.f32 %v681, 0.0
    %v832 = vmax.f32 %v686, 0.0
    %v833 = vmax.f32 %v689, 0.0
    %v834 = vmax.f32 %v694, 0.0
    %v835 = vmax.f32 %v697, 0.0
    %v836 = vmax.f32 %v702, 0.0
    %v837 = vmax.f32 %v705, 0.0
    %v838 = vmax.f32 %v710, 0.0
    %v839 = vmax.f32 %v713, 0.0
    %v840 = vmax.f32 %v718, 0.0
    %v841 = vmax.f32 %v721, 0.0
    %v842 = vmax.f32 %v726, 0.0
    %v843 = vmax.f32 %v729, 0.0
    %v844 = vmax.f32 %v734, 0.0
    %v845 = vmax.f32 %v737, 0.0
    %v846 = vmax.f32 %v742, 0.0
    %v847 = vmax.f32 %v745, 0.0
    %v848 = vmax.f32 %v750, 0.0
    %v849 = vmax.f32 %v753, 0.0
    %v850 = vmax.f32 %v758, 0.0
    %v851 = vmax.f32 %v761, 0.0
    %v852 = vmax.f32 %v766, 0.0
    %v853 = vmax.f32 %v769, 0.0
    %v854 = vmax.f32 %v774, 0.0
    %v855 = vmax.f32 %v777, 0.0
    %v856 = vmax.f32 %v782, 0.0
    %v857 = vmax.f32 %v785, 0.0
    %v858 = vmax.f32 %v790, 0.0
    %v859 = vmax.f32 %v793, 0.0
    %v860 = vpack.c.bf16 %v797, %v796
    %v861 = vpack.c.bf16 %v799, %v798
    %v862 = vpack.c.bf16 %v801, %v800
    %v863 = vpack.c.bf16 %v803, %v802
    %v864 = vpack.c.bf16 %v805, %v804
    %v865 = vpack.c.bf16 %v807, %v806
    %v866 = vpack.c.bf16 %v809, %v808
    %v867 = vpack.c.bf16 %v811, %v810
    %v868 = vpack.c.bf16 %v813, %v812
    %v869 = vpack.c.bf16 %v815, %v814
    %v870 = vpack.c.bf16 %v817, %v816
    %v871 = vpack.c.bf16 %v819, %v818
    %v872 = vpack.c.bf16 %v821, %v820
    %v873 = vpack.c.bf16 %v823, %v822
    %v874 = vpack.c.bf16 %v825, %v824
    %v875 = vpack.c.bf16 %v827, %v826
    %v876 = vpack.c.bf16 %v829, %v828
    %v877 = vpack.c.bf16 %v831, %v830
    %v878 = vpack.c.bf16 %v833, %v832
    %v879 = vpack.c.bf16 %v835, %v834
    %v880 = vpack.c.bf16 %v837, %v836
    %v881 = vpack.c.bf16 %v839, %v838
    %v882 = vpack.c.bf16 %v841, %v840
    %v883 = vpack.c.bf16 %v843, %v842
    %v884 = vpack.c.bf16 %v845, %v844
    %v885 = vpack.c.bf16 %v847, %v846
    %v886 = vpack.c.bf16 %v849, %v848
    %v887 = vpack.c.bf16 %v851, %v850
    %v888 = vpack.c.bf16 %v853, %v852
    %v889 = vpack.c.bf16 %v855, %v854
    %v890 = vpack.c.bf16 %v857, %v856
    %v891 = vpack.c.bf16 %v859, %v858
    %v892 = vld [vmem:[#allocation7] sm:$0xf]
    %v893 = vld [vmem:[#allocation7 + $0x4] sm:$0xf]
    %v894 = vld [vmem:[#allocation7 + $0x8] sm:$0xf]
    %v895 = vld [vmem:[#allocation7 + $0xc] sm:$0xf]
    %v896 = vld [vmem:[#allocation7 + $0x10] sm:$0xf]
    %v897 = vld [vmem:[#allocation7 + $0x14] sm:$0xf]
    %v898 = vld [vmem:[#allocation7 + $0x18] sm:$0xf]
    %v899 = vld [vmem:[#allocation7 + $0x1c] sm:$0xf]
    %v900 = vld [vmem:[#allocation7 + $0x20] sm:$0xf]
    %v901 = vld [vmem:[#allocation7 + $0x24] sm:$0xf]
    %v902 = vld [vmem:[#allocation7 + $0x28] sm:$0xf]
    %v903 = vld [vmem:[#allocation7 + $0x2c] sm:$0xf]
    %v904 = vld [vmem:[#allocation7 + $0x30] sm:$0xf]
    %v905 = vld [vmem:[#allocation7 + $0x34] sm:$0xf]
    %v906 = vld [vmem:[#allocation7 + $0x38] sm:$0xf]
    %v907 = vld [vmem:[#allocation7 + $0x3c] sm:$0xf]
    %v908 = vld [vmem:[%s4] sm:$0x1]
    %v910 = vlaneseq
    %v911 = vshrl.u32 %v910, 7
    %v912 = vsub.s32 0, %v911
    %v913 = vrot.slane %v908, %v912
    %v931 = vunpack.c.l.b16 %v892
    %v932 = vunpack.c.l.b16 %v893
    %v933 = vunpack.c.l.b16 %v894
    %v934 = vunpack.c.l.b16 %v895
    %v935 = vunpack.c.l.b16 %v896
    %v936 = vunpack.c.l.b16 %v897
    %v937 = vunpack.c.l.b16 %v898
    %v938 = vunpack.c.l.b16 %v899
    %v939 = vunpack.c.l.b16 %v900
    %v940 = vunpack.c.l.b16 %v901
    %v941 = vunpack.c.l.b16 %v902
    %v942 = vunpack.c.l.b16 %v903
    %v943 = vunpack.c.l.b16 %v904
    %v944 = vunpack.c.l.b16 %v905
    %v945 = vunpack.c.l.b16 %v906
    %v946 = vunpack.c.l.b16 %v907
    %v947 = vpack.c.b16 %v932, %v931
    %v948 = vpack.c.b16 %v934, %v933
    %v949 = vpack.c.b16 %v936, %v935
    %v950 = vpack.c.b16 %v938, %v937
    %v951 = vpack.c.b16 %v940, %v939
    %v952 = vpack.c.b16 %v942, %v941
    %v953 = vpack.c.b16 %v944, %v943
    %v954 = vpack.c.b16 %v946, %v945
    %963 = vmatprep.subr.bf16.mxu0 0
    %964 = vmatpush1.bf16.msra.mxu0 %v947
    %965 = vmatprep.subr.bf16.mxu0 0
    %966 = vmatpush1.bf16.msra.mxu0 %v948
    %967 = vmatprep.subr.bf16.mxu0 0
    %968 = vmatpush1.bf16.msra.mxu0 %v949
    %969 = vmatprep.subr.bf16.mxu0 0
    %970 = vmatpush1.bf16.msra.mxu0 %v950
    %971 = vmatprep.subr.bf16.mxu0 0
    %972 = vmatpush1.bf16.msra.mxu0 %v951
    %973 = vmatprep.subr.bf16.mxu0 0
    %974 = vmatpush1.bf16.msra.mxu0 %v952
    %975 = vmatprep.subr.bf16.mxu0 0
    %976 = vmatpush1.bf16.msra.mxu0 %v953
    %977 = vmatprep.subr.bf16.mxu0 0
    %978 = vmatpush1.bf16.msra.mxu0 %v954
    %979 = vmatprep.subr.bf16.mxu0 0
    %980 = vmatpush1.bf16.msra.mxu0 0
    %981 = vmatprep.subr.bf16.mxu0 0
    %982 = vmatpush1.bf16.msra.mxu0 0
    %983 = vmatprep.subr.bf16.mxu0 0
    %984 = vmatpush1.bf16.msra.mxu0 0
    %985 = vmatprep.subr.bf16.mxu0 0
    %986 = vmatpush1.bf16.msra.mxu0 0
    %987 = vmatprep.subr.bf16.mxu0 0
    %988 = vmatpush1.bf16.msra.mxu0 0
    %989 = vmatprep.subr.bf16.mxu0 0
    %990 = vmatpush1.bf16.msra.mxu0 0
    %991 = vmatprep.subr.bf16.mxu0 0
    %992 = vmatpush1.bf16.msra.mxu0 0
    %993 = vmatprep.subr.bf16.mxu0 0
    %994 = vmatpush1.bf16.msra.mxu0 0
    %995 = vmatprep.mubr.bf16.mxu0 0
    %996 = vmatmul.mubr.bf16.gmra.mrb[0].mxu0 %v860
    %v997 = vpop.f32.mrb[0].mxu0
    %v998 = vadd.f32 %v913, %v997
    %v999 = vpop.f32.mrb[0].mxu0
    %v1000 = vpop.f32.mrb[0].mxu0
    %v1001 = vadd.f32 %v913, %v1000
    %v1002 = vpop.f32.mrb[0].mxu0
    %1003 = vmatprep.mubr.bf16.mxu0 0
    %1004 = vmatmul.mubr.bf16.gmra.mrb[0].mxu0 %v861
    %v1005 = vpop.f32.mrb[0].mxu0
    %v1006 = vadd.f32 %v913, %v1005
    %v1007 = vpop.f32.mrb[0].mxu0
    %v1008 = vpop.f32.mrb[0].mxu0
    %v1009 = vadd.f32 %v913, %v1008
    %v1010 = vpop.f32.mrb[0].mxu0
    %1011 = vmatprep.mubr.bf16.mxu0 0
    %1012 = vmatmul.mubr.bf16.gmra.mrb[0].mxu0 %v862
    %v1013 = vpop.f32.mrb[0].mxu0
    %v1014 = vadd.f32 %v913, %v1013
    %v1015 = vpop.f32.mrb[0].mxu0
    %v1016 = vpop.f32.mrb[0].mxu0
    %v1017 = vadd.f32 %v913, %v1016
    %v1018 = vpop.f32.mrb[0].mxu0
    %1019 = vmatprep.mubr.bf16.mxu0 0
    %1020 = vmatmul.mubr.bf16.gmra.mrb[0].mxu0 %v863
    %v1021 = vpop.f32.mrb[0].mxu0
    %v1022 = vadd.f32 %v913, %v1021
    %v1023 = vpop.f32.mrb[0].mxu0
    %v1024 = vpop.f32.mrb[0].mxu0
    %v1025 = vadd.f32 %v913, %v1024
    %v1026 = vpop.f32.mrb[0].mxu0
    %1027 = vmatprep.mubr.bf16.mxu0 0
    %1028 = vmatmul.mubr.bf16.gmra.mrb[0].mxu0 %v864
    %v1029 = vpop.f32.mrb[0].mxu0
    %v1030 = vadd.f32 %v913, %v1029
    %v1031 = vpop.f32.mrb[0].mxu0
    %v1032 = vpop.f32.mrb[0].mxu0
    %v1033 = vadd.f32 %v913, %v1032
    %v1034 = vpop.f32.mrb[0].mxu0
    %1035 = vmatprep.mubr.bf16.mxu0 0
    %1036 = vmatmul.mubr.bf16.gmra.mrb[0].mxu0 %v865
    %v1037 = vpop.f32.mrb[0].mxu0
    %v1038 = vadd.f32 %v913, %v1037
    %v1039 = vpop.f32.mrb[0].mxu0
    %v1040 = vpop.f32.mrb[0].mxu0
    %v1041 = vadd.f32 %v913, %v1040
    %v1042 = vpop.f32.mrb[0].mxu0
    %1043 = vmatprep.mubr.bf16.mxu0 0
    %1044 = vmatmul.mubr.bf16.gmra.mrb[0].mxu0 %v866
    %v1045 = vpop.f32.mrb[0].mxu0
    %v1046 = vadd.f32 %v913, %v1045
    %v1047 = vpop.f32.mrb[0].mxu0
    %v1048 = vpop.f32.mrb[0].mxu0
    %v1049 = vadd.f32 %v913, %v1048
    %v1050 = vpop.f32.mrb[0].mxu0
    %1051 = vmatprep.mubr.bf16.mxu0 0
    %1052 = vmatmul.mubr.bf16.gmra.mrb[0].mxu0 %v867
    %v1053 = vpop.f32.mrb[0].mxu0
    %v1054 = vadd.f32 %v913, %v1053
    %v1055 = vpop.f32.mrb[0].mxu0
    %v1056 = vpop.f32.mrb[0].mxu0
    %v1057 = vadd.f32 %v913, %v1056
    %v1058 = vpop.f32.mrb[0].mxu0
    %1059 = vmatprep.mubr.bf16.mxu0 0
    %1060 = vmatmul.mubr.bf16.gmra.mrb[0].mxu0 %v868
    %v1061 = vpop.f32.mrb[0].mxu0
    %v1062 = vadd.f32 %v913, %v1061
    %v1063 = vpop.f32.mrb[0].mxu0
    %v1064 = vpop.f32.mrb[0].mxu0
    %v1065 = vadd.f32 %v913, %v1064
    %v1066 = vpop.f32.mrb[0].mxu0
    %1067 = vmatprep.mubr.bf16.mxu0 0
    %1068 = vmatmul.mubr.bf16.gmra.mrb[0].mxu0 %v869
    %v1069 = vpop.f32.mrb[0].mxu0
    %v1070 = vadd.f32 %v913, %v1069
    %v1071 = vpop.f32.mrb[0].mxu0
    %v1072 = vpop.f32.mrb[0].mxu0
    %v1073 = vadd.f32 %v913, %v1072
    %v1074 = vpop.f32.mrb[0].mxu0
    %1075 = vmatprep.mubr.bf16.mxu0 0
    %1076 = vmatmul.mubr.bf16.gmra.mrb[0].mxu0 %v870
    %v1077 = vpop.f32.mrb[0].mxu0
    %v1078 = vadd.f32 %v913, %v1077
    %v1079 = vpop.f32.mrb[0].mxu0
    %v1080 = vpop.f32.mrb[0].mxu0
    %v1081 = vadd.f32 %v913, %v1080
    %v1082 = vpop.f32.mrb[0].mxu0
    %1083 = vmatprep.mubr.bf16.mxu0 0
    %1084 = vmatmul.mubr.bf16.gmra.mrb[0].mxu0 %v871
    %v1085 = vpop.f32.mrb[0].mxu0
    %v1086 = vadd.f32 %v913, %v1085
    %v1087 = vpop.f32.mrb[0].mxu0
    %v1088 = vpop.f32.mrb[0].mxu0
    %v1089 = vadd.f32 %v913, %v1088
    %v1090 = vpop.f32.mrb[0].mxu0
    %1091 = vmatprep.mubr.bf16.mxu0 0
    %1092 = vmatmul.mubr.bf16.gmra.mrb[0].mxu0 %v872
    %v1093 = vpop.f32.mrb[0].mxu0
    %v1094 = vadd.f32 %v913, %v1093
    %v1095 = vpop.f32.mrb[0].mxu0
    %v1096 = vpop.f32.mrb[0].mxu0
    %v1097 = vadd.f32 %v913, %v1096
    %v1098 = vpop.f32.mrb[0].mxu0
    %1099 = vmatprep.mubr.bf16.mxu0 0
    %1100 = vmatmul.mubr.bf16.gmra.mrb[0].mxu0 %v873
    %v1101 = vpop.f32.mrb[0].mxu0
    %v1102 = vadd.f32 %v913, %v1101
    %v1103 = vpop.f32.mrb[0].mxu0
    %v1104 = vpop.f32.mrb[0].mxu0
    %v1105 = vadd.f32 %v913, %v1104
    %v1106 = vpop.f32.mrb[0].mxu0
    %1107 = vmatprep.mubr.bf16.mxu0 0
    %1108 = vmatmul.mubr.bf16.gmra.mrb[0].mxu0 %v874
    %v1109 = vpop.f32.mrb[0].mxu0
    %v1110 = vadd.f32 %v913, %v1109
    %v1111 = vpop.f32.mrb[0].mxu0
    %v1112 = vpop.f32.mrb[0].mxu0
    %v1113 = vadd.f32 %v913, %v1112
    %v1114 = vpop.f32.mrb[0].mxu0
    %1115 = vmatprep.mubr.bf16.mxu0 0
    %1116 = vmatmul.mubr.bf16.gmra.mrb[0].mxu0 %v875
    %v1117 = vpop.f32.mrb[0].mxu0
    %v1118 = vadd.f32 %v913, %v1117
    %v1119 = vpop.f32.mrb[0].mxu0
    %v1120 = vpop.f32.mrb[0].mxu0
    %v1121 = vadd.f32 %v913, %v1120
    %v1122 = vpop.f32.mrb[0].mxu0
    %1123 = vmatprep.mubr.bf16.mxu0 0
    %1124 = vmatmul.mubr.bf16.gmra.mrb[0].mxu0 %v876
    %v1125 = vpop.f32.mrb[0].mxu0
    %v1126 = vadd.f32 %v913, %v1125
    %v1127 = vpop.f32.mrb[0].mxu0
    %v1128 = vpop.f32.mrb[0].mxu0
    %v1129 = vadd.f32 %v913, %v1128
    %v1130 = vpop.f32.mrb[0].mxu0
    %1131 = vmatprep.mubr.bf16.mxu0 0
    %1132 = vmatmul.mubr.bf16.gmra.mrb[0].mxu0 %v877
    %v1133 = vpop.f32.mrb[0].mxu0
    %v1134 = vadd.f32 %v913, %v1133
    %v1135 = vpop.f32.mrb[0].mxu0
    %v1136 = vpop.f32.mrb[0].mxu0
    %v1137 = vadd.f32 %v913, %v1136
    %v1138 = vpop.f32.mrb[0].mxu0
    %1139 = vmatprep.mubr.bf16.mxu0 0
    %1140 = vmatmul.mubr.bf16.gmra.mrb[0].mxu0 %v878
    %v1141 = vpop.f32.mrb[0].mxu0
    %v1142 = vadd.f32 %v913, %v1141
    %v1143 = vpop.f32.mrb[0].mxu0
    %v1144 = vpop.f32.mrb[0].mxu0
    %v1145 = vadd.f32 %v913, %v1144
    %v1146 = vpop.f32.mrb[0].mxu0
    %1147 = vmatprep.mubr.bf16.mxu0 0
    %1148 = vmatmul.mubr.bf16.gmra.mrb[0].mxu0 %v879
    %v1149 = vpop.f32.mrb[0].mxu0
    %v1150 = vadd.f32 %v913, %v1149
    %v1151 = vpop.f32.mrb[0].mxu0
    %v1152 = vpop.f32.mrb[0].mxu0
    %v1153 = vadd.f32 %v913, %v1152
    %v1154 = vpop.f32.mrb[0].mxu0
    %1155 = vmatprep.mubr.bf16.mxu0 0
    %1156 = vmatmul.mubr.bf16.gmra.mrb[0].mxu0 %v880
    %v1157 = vpop.f32.mrb[0].mxu0
    %v1158 = vadd.f32 %v913, %v1157
    %v1159 = vpop.f32.mrb[0].mxu0
    %v1160 = vpop.f32.mrb[0].mxu0
    %v1161 = vadd.f32 %v913, %v1160
    %v1162 = vpop.f32.mrb[0].mxu0
    %1163 = vmatprep.mubr.bf16.mxu0 0
    %1164 = vmatmul.mubr.bf16.gmra.mrb[0].mxu0 %v881
    %v1165 = vpop.f32.mrb[0].mxu0
    %v1166 = vadd.f32 %v913, %v1165
    %v1167 = vpop.f32.mrb[0].mxu0
    %v1168 = vpop.f32.mrb[0].mxu0
    %v1169 = vadd.f32 %v913, %v1168
    %v1170 = vpop.f32.mrb[0].mxu0
    %1171 = vmatprep.mubr.bf16.mxu0 0
    %1172 = vmatmul.mubr.bf16.gmra.mrb[0].mxu0 %v882
    %v1173 = vpop.f32.mrb[0].mxu0
    %v1174 = vadd.f32 %v913, %v1173
    %v1175 = vpop.f32.mrb[0].mxu0
    %v1176 = vpop.f32.mrb[0].mxu0
    %v1177 = vadd.f32 %v913, %v1176
    %v1178 = vpop.f32.mrb[0].mxu0
    %1179 = vmatprep.mubr.bf16.mxu0 0
    %1180 = vmatmul.mubr.bf16.gmra.mrb[0].mxu0 %v883
    %v1181 = vpop.f32.mrb[0].mxu0
    %v1182 = vadd.f32 %v913, %v1181
    %v1183 = vpop.f32.mrb[0].mxu0
    %v1184 = vpop.f32.mrb[0].mxu0
    %v1185 = vadd.f32 %v913, %v1184
    %v1186 = vpop.f32.mrb[0].mxu0
    %1187 = vmatprep.mubr.bf16.mxu0 0
    %1188 = vmatmul.mubr.bf16.gmra.mrb[0].mxu0 %v884
    %v1189 = vpop.f32.mrb[0].mxu0
    %v1190 = vadd.f32 %v913, %v1189
    %v1191 = vpop.f32.mrb[0].mxu0
    %v1192 = vpop.f32.mrb[0].mxu0
    %v1193 = vadd.f32 %v913, %v1192
    %v1194 = vpop.f32.mrb[0].mxu0
    %1195 = vmatprep.mubr.bf16.mxu0 0
    %1196 = vmatmul.mubr.bf16.gmra.mrb[0].mxu0 %v885
    %v1197 = vpop.f32.mrb[0].mxu0
    %v1198 = vadd.f32 %v913, %v1197
    %v1199 = vpop.f32.mrb[0].mxu0
    %v1200 = vpop.f32.mrb[0].mxu0
    %v1201 = vadd.f32 %v913, %v1200
    %v1202 = vpop.f32.mrb[0].mxu0
    %1203 = vmatprep.mubr.bf16.mxu0 0
    %1204 = vmatmul.mubr.bf16.gmra.mrb[0].mxu0 %v886
    %v1205 = vpop.f32.mrb[0].mxu0
    %v1206 = vadd.f32 %v913, %v1205
    %v1207 = vpop.f32.mrb[0].mxu0
    %v1208 = vpop.f32.mrb[0].mxu0
    %v1209 = vadd.f32 %v913, %v1208
    %v1210 = vpop.f32.mrb[0].mxu0
    %1211 = vmatprep.mubr.bf16.mxu0 0
    %1212 = vmatmul.mubr.bf16.gmra.mrb[0].mxu0 %v887
    %v1213 = vpop.f32.mrb[0].mxu0
    %v1214 = vadd.f32 %v913, %v1213
    %v1215 = vpop.f32.mrb[0].mxu0
    %v1216 = vpop.f32.mrb[0].mxu0
    %v1217 = vadd.f32 %v913, %v1216
    %v1218 = vpop.f32.mrb[0].mxu0
    %1219 = vmatprep.mubr.bf16.mxu0 0
    %1220 = vmatmul.mubr.bf16.gmra.mrb[0].mxu0 %v888
    %v1221 = vpop.f32.mrb[0].mxu0
    %v1222 = vadd.f32 %v913, %v1221
    %v1223 = vpop.f32.mrb[0].mxu0
    %v1224 = vpop.f32.mrb[0].mxu0
    %v1225 = vadd.f32 %v913, %v1224
    %v1226 = vpop.f32.mrb[0].mxu0
    %1227 = vmatprep.mubr.bf16.mxu0 0
    %1228 = vmatmul.mubr.bf16.gmra.mrb[0].mxu0 %v889
    %v1229 = vpop.f32.mrb[0].mxu0
    %v1230 = vadd.f32 %v913, %v1229
    %v1231 = vpop.f32.mrb[0].mxu0
    %v1232 = vpop.f32.mrb[0].mxu0
    %v1233 = vadd.f32 %v913, %v1232
    %v1234 = vpop.f32.mrb[0].mxu0
    %1235 = vmatprep.mubr.bf16.mxu0 0
    %1236 = vmatmul.mubr.bf16.gmra.mrb[0].mxu0 %v890
    %v1237 = vpop.f32.mrb[0].mxu0
    %v1238 = vadd.f32 %v913, %v1237
    %v1239 = vpop.f32.mrb[0].mxu0
    %v1240 = vpop.f32.mrb[0].mxu0
    %v1241 = vadd.f32 %v913, %v1240
    %v1242 = vpop.f32.mrb[0].mxu0
    %1243 = vmatprep.mubr.bf16.mxu0 0
    %1244 = vmatmul.mubr.bf16.gmra.mrb[0].mxu0 %v891
    %v1245 = vpop.f32.mrb[0].mxu0
    %v1246 = vadd.f32 %v913, %v1245
    %v1247 = vpop.f32.mrb[0].mxu0
    %v1248 = vpop.f32.mrb[0].mxu0
    %v1249 = vadd.f32 %v913, %v1248
    %v1250 = vpop.f32.mrb[0].mxu0
    %1251 = vdwg.mxu0
    %v1252 = vmax.f32 %v998, 0.0
    %v1253 = vmax.f32 %v1001, 0.0
    %v1254 = vmax.f32 %v1006, 0.0
    %v1255 = vmax.f32 %v1009, 0.0
    %v1256 = vmax.f32 %v1014, 0.0
    %v1257 = vmax.f32 %v1017, 0.0
    %v1258 = vmax.f32 %v1022, 0.0
    %v1259 = vmax.f32 %v1025, 0.0
    %v1260 = vmax.f32 %v1030, 0.0
    %v1261 = vmax.f32 %v1033, 0.0
    %v1262 = vmax.f32 %v1038, 0.0
    %v1263 = vmax.f32 %v1041, 0.0
    %v1264 = vmax.f32 %v1046, 0.0
    %v1265 = vmax.f32 %v1049, 0.0
    %v1266 = vmax.f32 %v1054, 0.0
    %v1267 = vmax.f32 %v1057, 0.0
    %v1268 = vmax.f32 %v1062, 0.0
    %v1269 = vmax.f32 %v1065, 0.0
    %v1270 = vmax.f32 %v1070, 0.0
    %v1271 = vmax.f32 %v1073, 0.0
    %v1272 = vmax.f32 %v1078, 0.0
    %v1273 = vmax.f32 %v1081, 0.0
    %v1274 = vmax.f32 %v1086, 0.0
    %v1275 = vmax.f32 %v1089, 0.0
    %v1276 = vmax.f32 %v1094, 0.0
    %v1277 = vmax.f32 %v1097, 0.0
    %v1278 = vmax.f32 %v1102, 0.0
    %v1279 = vmax.f32 %v1105, 0.0
    %v1280 = vmax.f32 %v1110, 0.0
    %v1281 = vmax.f32 %v1113, 0.0
    %v1282 = vmax.f32 %v1118, 0.0
    %v1283 = vmax.f32 %v1121, 0.0
    %v1284 = vmax.f32 %v1126, 0.0
    %v1285 = vmax.f32 %v1129, 0.0
    %v1286 = vmax.f32 %v1134, 0.0
    %v1287 = vmax.f32 %v1137, 0.0
    %v1288 = vmax.f32 %v1142, 0.0
    %v1289 = vmax.f32 %v1145, 0.0
    %v1290 = vmax.f32 %v1150, 0.0
    %v1291 = vmax.f32 %v1153, 0.0
    %v1292 = vmax.f32 %v1158, 0.0
    %v1293 = vmax.f32 %v1161, 0.0
    %v1294 = vmax.f32 %v1166, 0.0
    %v1295 = vmax.f32 %v1169, 0.0
    %v1296 = vmax.f32 %v1174, 0.0
    %v1297 = vmax.f32 %v1177, 0.0
    %v1298 = vmax.f32 %v1182, 0.0
    %v1299 = vmax.f32 %v1185, 0.0
    %v1300 = vmax.f32 %v1190, 0.0
    %v1301 = vmax.f32 %v1193, 0.0
    %v1302 = vmax.f32 %v1198, 0.0
    %v1303 = vmax.f32 %v1201, 0.0
    %v1304 = vmax.f32 %v1206, 0.0
    %v1305 = vmax.f32 %v1209, 0.0
    %v1306 = vmax.f32 %v1214, 0.0
    %v1307 = vmax.f32 %v1217, 0.0
    %v1308 = vmax.f32 %v1222, 0.0
    %v1309 = vmax.f32 %v1225, 0.0
    %v1310 = vmax.f32 %v1230, 0.0
    %v1311 = vmax.f32 %v1233, 0.0
    %v1312 = vmax.f32 %v1238, 0.0
    %v1313 = vmax.f32 %v1241, 0.0
    %v1314 = vmax.f32 %v1246, 0.0
    %v1315 = vmax.f32 %v1249, 0.0
    %v1316 = vpack.c.bf16 %v1253, %v1252
    %v1317 = vpack.c.bf16 %v1255, %v1254
    %v1318 = vpack.c.bf16 %v1257, %v1256
    %v1319 = vpack.c.bf16 %v1259, %v1258
    %v1320 = vpack.c.bf16 %v1261, %v1260
    %v1321 = vpack.c.bf16 %v1263, %v1262
    %v1322 = vpack.c.bf16 %v1265, %v1264
    %v1323 = vpack.c.bf16 %v1267, %v1266
    %v1324 = vpack.c.bf16 %v1269, %v1268
    %v1325 = vpack.c.bf16 %v1271, %v1270
    %v1326 = vpack.c.bf16 %v1273, %v1272
    %v1327 = vpack.c.bf16 %v1275, %v1274
    %v1328 = vpack.c.bf16 %v1277, %v1276
    %v1329 = vpack.c.bf16 %v1279, %v1278
    %v1330 = vpack.c.bf16 %v1281, %v1280
    %v1331 = vpack.c.bf16 %v1283, %v1282
    %v1332 = vpack.c.bf16 %v1285, %v1284
    %v1333 = vpack.c.bf16 %v1287, %v1286
    %v1334 = vpack.c.bf16 %v1289, %v1288
    %v1335 = vpack.c.bf16 %v1291, %v1290
    %v1336 = vpack.c.bf16 %v1293, %v1292
    %v1337 = vpack.c.bf16 %v1295, %v1294
    %v1338 = vpack.c.bf16 %v1297, %v1296
    %v1339 = vpack.c.bf16 %v1299, %v1298
    %v1340 = vpack.c.bf16 %v1301, %v1300
    %v1341 = vpack.c.bf16 %v1303, %v1302
    %v1342 = vpack.c.bf16 %v1305, %v1304
    %v1343 = vpack.c.bf16 %v1307, %v1306
    %v1344 = vpack.c.bf16 %v1309, %v1308
    %v1345 = vpack.c.bf16 %v1311, %v1310
    %v1346 = vpack.c.bf16 %v1313, %v1312
    %v1347 = vpack.c.bf16 %v1315, %v1314
    %v1348 = vld [vmem:[#allocation8] sm:$0xf]
    %v1349 = vld [vmem:[#allocation8 + $0x4] sm:$0xf]
    %v1350 = vld [vmem:[#allocation8 + $0x8] sm:$0xf]
    %v1351 = vld [vmem:[#allocation8 + $0xc] sm:$0xf]
    %v1352 = vld [vmem:[#allocation8 + $0x10] sm:$0xf]
    %v1353 = vld [vmem:[#allocation8 + $0x14] sm:$0xf]
    %v1354 = vld [vmem:[#allocation8 + $0x18] sm:$0xf]
    %v1355 = vld [vmem:[#allocation8 + $0x1c] sm:$0xf]
    %v1356 = vld [vmem:[#allocation8 + $0x20] sm:$0xf]
    %v1357 = vld [vmem:[#allocation8 + $0x24] sm:$0xf]
    %v1358 = vld [vmem:[#allocation8 + $0x28] sm:$0xf]
    %v1359 = vld [vmem:[#allocation8 + $0x2c] sm:$0xf]
    %v1360 = vld [vmem:[#allocation8 + $0x30] sm:$0xf]
    %v1361 = vld [vmem:[#allocation8 + $0x34] sm:$0xf]
    %v1362 = vld [vmem:[#allocation8 + $0x38] sm:$0xf]
    %v1363 = vld [vmem:[#allocation8 + $0x3c] sm:$0xf]
    %v1364 = vld [vmem:[%s6] sm:$0x1]
    %v1366 = vlaneseq
    %v1367 = vshrl.u32 %v1366, 7
    %v1368 = vsub.s32 0, %v1367
    %v1369 = vrot.slane %v1364, %v1368
    %v1387 = vunpack.c.l.b16 %v1348
    %v1388 = vunpack.c.l.b16 %v1349
    %v1389 = vunpack.c.l.b16 %v1350
    %v1390 = vunpack.c.l.b16 %v1351
    %v1391 = vunpack.c.l.b16 %v1352
    %v1392 = vunpack.c.l.b16 %v1353
    %v1393 = vunpack.c.l.b16 %v1354
    %v1394 = vunpack.c.l.b16 %v1355
    %v1395 = vunpack.c.l.b16 %v1356
    %v1396 = vunpack.c.l.b16 %v1357
    %v1397 = vunpack.c.l.b16 %v1358
    %v1398 = vunpack.c.l.b16 %v1359
    %v1399 = vunpack.c.l.b16 %v1360
    %v1400 = vunpack.c.l.b16 %v1361
    %v1401 = vunpack.c.l.b16 %v1362
    %v1402 = vunpack.c.l.b16 %v1363
    %v1403 = vpack.c.b16 %v1388, %v1387
    %v1404 = vpack.c.b16 %v1390, %v1389
    %v1405 = vpack.c.b16 %v1392, %v1391
    %v1406 = vpack.c.b16 %v1394, %v1393
    %v1407 = vpack.c.b16 %v1396, %v1395
    %v1408 = vpack.c.b16 %v1398, %v1397
    %v1409 = vpack.c.b16 %v1400, %v1399
    %v1410 = vpack.c.b16 %v1402, %v1401
    %1419 = vmatprep.subr.bf16.mxu0 0
    %1420 = vmatpush1.bf16.msra.mxu0 %v1403
    %1421 = vmatprep.subr.bf16.mxu0 0
    %1422 = vmatpush1.bf16.msra.mxu0 %v1404
    %1423 = vmatprep.subr.bf16.mxu0 0
    %1424 = vmatpush1.bf16.msra.mxu0 %v1405
    %1425 = vmatprep.subr.bf16.mxu0 0
    %1426 = vmatpush1.bf16.msra.mxu0 %v1406
    %1427 = vmatprep.subr.bf16.mxu0 0
    %1428 = vmatpush1.bf16.msra.mxu0 %v1407
    %1429 = vmatprep.subr.bf16.mxu0 0
    %1430 = vmatpush1.bf16.msra.mxu0 %v1408
    %1431 = vmatprep.subr.bf16.mxu0 0
    %1432 = vmatpush1.bf16.msra.mxu0 %v1409
    %1433 = vmatprep.subr.bf16.mxu0 0
    %1434 = vmatpush1.bf16.msra.mxu0 %v1410
    %1435 = vmatprep.subr.bf16.mxu0 0
    %1436 = vmatpush1.bf16.msra.mxu0 0
    %1437 = vmatprep.subr.bf16.mxu0 0
    %1438 = vmatpush1.bf16.msra.mxu0 0
    %1439 = vmatprep.subr.bf16.mxu0 0
    %1440 = vmatpush1.bf16.msra.mxu0 0
    %1441 = vmatprep.subr.bf16.mxu0 0
    %1442 = vmatpush1.bf16.msra.mxu0 0
    %1443 = vmatprep.subr.bf16.mxu0 0
    %1444 = vmatpush1.bf16.msra.mxu0 0
    %1445 = vmatprep.subr.bf16.mxu0 0
    %1446 = vmatpush1.bf16.msra.mxu0 0
    %1447 = vmatprep.subr.bf16.mxu0 0
    %1448 = vmatpush1.bf16.msra.mxu0 0
    %1449 = vmatprep.subr.bf16.mxu0 0
    %1450 = vmatpush1.bf16.msra.mxu0 0
    %1451 = vmatprep.mubr.bf16.mxu0 0
    %1452 = vmatmul.mubr.bf16.gmra.mrb[0].mxu0 %v1316
    %v1453 = vpop.f32.mrb[0].mxu0
    %v1454 = vadd.f32 %v1369, %v1453
    %v1455 = vpop.f32.mrb[0].mxu0
    %v1456 = vpop.f32.mrb[0].mxu0
    %v1457 = vadd.f32 %v1369, %v1456
    %v1458 = vpop.f32.mrb[0].mxu0
    %1459 = vmatprep.mubr.bf16.mxu0 0
    %1460 = vmatmul.mubr.bf16.gmra.mrb[0].mxu0 %v1317
    %v1461 = vpop.f32.mrb[0].mxu0
    %v1462 = vadd.f32 %v1369, %v1461
    %v1463 = vpop.f32.mrb[0].mxu0
    %v1464 = vpop.f32.mrb[0].mxu0
    %v1465 = vadd.f32 %v1369, %v1464
    %v1466 = vpop.f32.mrb[0].mxu0
    %1467 = vmatprep.mubr.bf16.mxu0 0
    %1468 = vmatmul.mubr.bf16.gmra.mrb[0].mxu0 %v1318
    %v1469 = vpop.f32.mrb[0].mxu0
    %v1470 = vadd.f32 %v1369, %v1469
    %v1471 = vpop.f32.mrb[0].mxu0
    %v1472 = vpop.f32.mrb[0].mxu0
    %v1473 = vadd.f32 %v1369, %v1472
    %v1474 = vpop.f32.mrb[0].mxu0
    %1475 = vmatprep.mubr.bf16.mxu0 0
    %1476 = vmatmul.mubr.bf16.gmra.mrb[0].mxu0 %v1319
    %v1477 = vpop.f32.mrb[0].mxu0
    %v1478 = vadd.f32 %v1369, %v1477
    %v1479 = vpop.f32.mrb[0].mxu0
    %v1480 = vpop.f32.mrb[0].mxu0
    %v1481 = vadd.f32 %v1369, %v1480
    %v1482 = vpop.f32.mrb[0].mxu0
    %1483 = vmatprep.mubr.bf16.mxu0 0
    %1484 = vmatmul.mubr.bf16.gmra.mrb[0].mxu0 %v1320
    %v1485 = vpop.f32.mrb[0].mxu0
    %v1486 = vadd.f32 %v1369, %v1485
    %v1487 = vpop.f32.mrb[0].mxu0
    %v1488 = vpop.f32.mrb[0].mxu0
    %v1489 = vadd.f32 %v1369, %v1488
    %v1490 = vpop.f32.mrb[0].mxu0
    %1491 = vmatprep.mubr.bf16.mxu0 0
    %1492 = vmatmul.mubr.bf16.gmra.mrb[0].mxu0 %v1321
    %v1493 = vpop.f32.mrb[0].mxu0
    %v1494 = vadd.f32 %v1369, %v1493
    %v1495 = vpop.f32.mrb[0].mxu0
    %v1496 = vpop.f32.mrb[0].mxu0
    %v1497 = vadd.f32 %v1369, %v1496
    %v1498 = vpop.f32.mrb[0].mxu0
    %1499 = vmatprep.mubr.bf16.mxu0 0
    %1500 = vmatmul.mubr.bf16.gmra.mrb[0].mxu0 %v1322
    %v1501 = vpop.f32.mrb[0].mxu0
    %v1502 = vadd.f32 %v1369, %v1501
    %v1503 = vpop.f32.mrb[0].mxu0
    %v1504 = vpop.f32.mrb[0].mxu0
    %v1505 = vadd.f32 %v1369, %v1504
    %v1506 = vpop.f32.mrb[0].mxu0
    %1507 = vmatprep.mubr.bf16.mxu0 0
    %1508 = vmatmul.mubr.bf16.gmra.mrb[0].mxu0 %v1323
    %v1509 = vpop.f32.mrb[0].mxu0
    %v1510 = vadd.f32 %v1369, %v1509
    %v1511 = vpop.f32.mrb[0].mxu0
    %v1512 = vpop.f32.mrb[0].mxu0
    %v1513 = vadd.f32 %v1369, %v1512
    %v1514 = vpop.f32.mrb[0].mxu0
    %1515 = vmatprep.mubr.bf16.mxu0 0
    %1516 = vmatmul.mubr.bf16.gmra.mrb[0].mxu0 %v1324
    %v1517 = vpop.f32.mrb[0].mxu0
    %v1518 = vadd.f32 %v1369, %v1517
    %v1519 = vpop.f32.mrb[0].mxu0
    %v1520 = vpop.f32.mrb[0].mxu0
    %v1521 = vadd.f32 %v1369, %v1520
    %v1522 = vpop.f32.mrb[0].mxu0
    %1523 = vmatprep.mubr.bf16.mxu0 0
    %1524 = vmatmul.mubr.bf16.gmra.mrb[0].mxu0 %v1325
    %v1525 = vpop.f32.mrb[0].mxu0
    %v1526 = vadd.f32 %v1369, %v1525
    %v1527 = vpop.f32.mrb[0].mxu0
    %v1528 = vpop.f32.mrb[0].mxu0
    %v1529 = vadd.f32 %v1369, %v1528
    %v1530 = vpop.f32.mrb[0].mxu0
    %1531 = vmatprep.mubr.bf16.mxu0 0
    %1532 = vmatmul.mubr.bf16.gmra.mrb[0].mxu0 %v1326
    %v1533 = vpop.f32.mrb[0].mxu0
    %v1534 = vadd.f32 %v1369, %v1533
    %v1535 = vpop.f32.mrb[0].mxu0
    %v1536 = vpop.f32.mrb[0].mxu0
    %v1537 = vadd.f32 %v1369, %v1536
    %v1538 = vpop.f32.mrb[0].mxu0
    %1539 = vmatprep.mubr.bf16.mxu0 0
    %1540 = vmatmul.mubr.bf16.gmra.mrb[0].mxu0 %v1327
    %v1541 = vpop.f32.mrb[0].mxu0
    %v1542 = vadd.f32 %v1369, %v1541
    %v1543 = vpop.f32.mrb[0].mxu0
    %v1544 = vpop.f32.mrb[0].mxu0
    %v1545 = vadd.f32 %v1369, %v1544
    %v1546 = vpop.f32.mrb[0].mxu0
    %1547 = vmatprep.mubr.bf16.mxu0 0
    %1548 = vmatmul.mubr.bf16.gmra.mrb[0].mxu0 %v1328
    %v1549 = vpop.f32.mrb[0].mxu0
    %v1550 = vadd.f32 %v1369, %v1549
    %v1551 = vpop.f32.mrb[0].mxu0
    %v1552 = vpop.f32.mrb[0].mxu0
    %v1553 = vadd.f32 %v1369, %v1552
    %v1554 = vpop.f32.mrb[0].mxu0
    %1555 = vmatprep.mubr.bf16.mxu0 0
    %1556 = vmatmul.mubr.bf16.gmra.mrb[0].mxu0 %v1329
    %v1557 = vpop.f32.mrb[0].mxu0
    %v1558 = vadd.f32 %v1369, %v1557
    %v1559 = vpop.f32.mrb[0].mxu0
    %v1560 = vpop.f32.mrb[0].mxu0
    %v1561 = vadd.f32 %v1369, %v1560
    %v1562 = vpop.f32.mrb[0].mxu0
    %1563 = vmatprep.mubr.bf16.mxu0 0
    %1564 = vmatmul.mubr.bf16.gmra.mrb[0].mxu0 %v1330
    %v1565 = vpop.f32.mrb[0].mxu0
    %v1566 = vadd.f32 %v1369, %v1565
    %v1567 = vpop.f32.mrb[0].mxu0
    %v1568 = vpop.f32.mrb[0].mxu0
    %v1569 = vadd.f32 %v1369, %v1568
    %v1570 = vpop.f32.mrb[0].mxu0
    %1571 = vmatprep.mubr.bf16.mxu0 0
    %1572 = vmatmul.mubr.bf16.gmra.mrb[0].mxu0 %v1331
    %v1573 = vpop.f32.mrb[0].mxu0
    %v1574 = vadd.f32 %v1369, %v1573
    %v1575 = vpop.f32.mrb[0].mxu0
    %v1576 = vpop.f32.mrb[0].mxu0
    %v1577 = vadd.f32 %v1369, %v1576
    %v1578 = vpop.f32.mrb[0].mxu0
    %1579 = vmatprep.mubr.bf16.mxu0 0
    %1580 = vmatmul.mubr.bf16.gmra.mrb[0].mxu0 %v1332
    %v1581 = vpop.f32.mrb[0].mxu0
    %v1582 = vadd.f32 %v1369, %v1581
    %v1583 = vpop.f32.mrb[0].mxu0
    %v1584 = vpop.f32.mrb[0].mxu0
    %v1585 = vadd.f32 %v1369, %v1584
    %v1586 = vpop.f32.mrb[0].mxu0
    %1587 = vmatprep.mubr.bf16.mxu0 0
    %1588 = vmatmul.mubr.bf16.gmra.mrb[0].mxu0 %v1333
    %v1589 = vpop.f32.mrb[0].mxu0
    %v1590 = vadd.f32 %v1369, %v1589
    %v1591 = vpop.f32.mrb[0].mxu0
    %v1592 = vpop.f32.mrb[0].mxu0
    %v1593 = vadd.f32 %v1369, %v1592
    %v1594 = vpop.f32.mrb[0].mxu0
    %1595 = vmatprep.mubr.bf16.mxu0 0
    %1596 = vmatmul.mubr.bf16.gmra.mrb[0].mxu0 %v1334
    %v1597 = vpop.f32.mrb[0].mxu0
    %v1598 = vadd.f32 %v1369, %v1597
    %v1599 = vpop.f32.mrb[0].mxu0
    %v1600 = vpop.f32.mrb[0].mxu0
    %v1601 = vadd.f32 %v1369, %v1600
    %v1602 = vpop.f32.mrb[0].mxu0
    %1603 = vmatprep.mubr.bf16.mxu0 0
    %1604 = vmatmul.mubr.bf16.gmra.mrb[0].mxu0 %v1335
    %v1605 = vpop.f32.mrb[0].mxu0
    %v1606 = vadd.f32 %v1369, %v1605
    %v1607 = vpop.f32.mrb[0].mxu0
    %v1608 = vpop.f32.mrb[0].mxu0
    %v1609 = vadd.f32 %v1369, %v1608
    %v1610 = vpop.f32.mrb[0].mxu0
    %1611 = vmatprep.mubr.bf16.mxu0 0
    %1612 = vmatmul.mubr.bf16.gmra.mrb[0].mxu0 %v1336
    %v1613 = vpop.f32.mrb[0].mxu0
    %v1614 = vadd.f32 %v1369, %v1613
    %v1615 = vpop.f32.mrb[0].mxu0
    %v1616 = vpop.f32.mrb[0].mxu0
    %v1617 = vadd.f32 %v1369, %v1616
    %v1618 = vpop.f32.mrb[0].mxu0
    %1619 = vmatprep.mubr.bf16.mxu0 0
    %1620 = vmatmul.mubr.bf16.gmra.mrb[0].mxu0 %v1337
    %v1621 = vpop.f32.mrb[0].mxu0
    %v1622 = vadd.f32 %v1369, %v1621
    %v1623 = vpop.f32.mrb[0].mxu0
    %v1624 = vpop.f32.mrb[0].mxu0
    %v1625 = vadd.f32 %v1369, %v1624
    %v1626 = vpop.f32.mrb[0].mxu0
    %1627 = vmatprep.mubr.bf16.mxu0 0
    %1628 = vmatmul.mubr.bf16.gmra.mrb[0].mxu0 %v1338
    %v1629 = vpop.f32.mrb[0].mxu0
    %v1630 = vadd.f32 %v1369, %v1629
    %v1631 = vpop.f32.mrb[0].mxu0
    %v1632 = vpop.f32.mrb[0].mxu0
    %v1633 = vadd.f32 %v1369, %v1632
    %v1634 = vpop.f32.mrb[0].mxu0
    %1635 = vmatprep.mubr.bf16.mxu0 0
    %1636 = vmatmul.mubr.bf16.gmra.mrb[0].mxu0 %v1339
    %v1637 = vpop.f32.mrb[0].mxu0
    %v1638 = vadd.f32 %v1369, %v1637
    %v1639 = vpop.f32.mrb[0].mxu0
    %v1640 = vpop.f32.mrb[0].mxu0
    %v1641 = vadd.f32 %v1369, %v1640
    %v1642 = vpop.f32.mrb[0].mxu0
    %1643 = vmatprep.mubr.bf16.mxu0 0
    %1644 = vmatmul.mubr.bf16.gmra.mrb[0].mxu0 %v1340
    %v1645 = vpop.f32.mrb[0].mxu0
    %v1646 = vadd.f32 %v1369, %v1645
    %v1647 = vpop.f32.mrb[0].mxu0
    %v1648 = vpop.f32.mrb[0].mxu0
    %v1649 = vadd.f32 %v1369, %v1648
    %v1650 = vpop.f32.mrb[0].mxu0
    %1651 = vmatprep.mubr.bf16.mxu0 0
    %1652 = vmatmul.mubr.bf16.gmra.mrb[0].mxu0 %v1341
    %v1653 = vpop.f32.mrb[0].mxu0
    %v1654 = vadd.f32 %v1369, %v1653
    %v1655 = vpop.f32.mrb[0].mxu0
    %v1656 = vpop.f32.mrb[0].mxu0
    %v1657 = vadd.f32 %v1369, %v1656
    %v1658 = vpop.f32.mrb[0].mxu0
    %1659 = vmatprep.mubr.bf16.mxu0 0
    %1660 = vmatmul.mubr.bf16.gmra.mrb[0].mxu0 %v1342
    %v1661 = vpop.f32.mrb[0].mxu0
    %v1662 = vadd.f32 %v1369, %v1661
    %v1663 = vpop.f32.mrb[0].mxu0
    %v1664 = vpop.f32.mrb[0].mxu0
    %v1665 = vadd.f32 %v1369, %v1664
    %v1666 = vpop.f32.mrb[0].mxu0
    %1667 = vmatprep.mubr.bf16.mxu0 0
    %1668 = vmatmul.mubr.bf16.gmra.mrb[0].mxu0 %v1343
    %v1669 = vpop.f32.mrb[0].mxu0
    %v1670 = vadd.f32 %v1369, %v1669
    %v1671 = vpop.f32.mrb[0].mxu0
    %v1672 = vpop.f32.mrb[0].mxu0
    %v1673 = vadd.f32 %v1369, %v1672
    %v1674 = vpop.f32.mrb[0].mxu0
    %1675 = vmatprep.mubr.bf16.mxu0 0
    %1676 = vmatmul.mubr.bf16.gmra.mrb[0].mxu0 %v1344
    %v1677 = vpop.f32.mrb[0].mxu0
    %v1678 = vadd.f32 %v1369, %v1677
    %v1679 = vpop.f32.mrb[0].mxu0
    %v1680 = vpop.f32.mrb[0].mxu0
    %v1681 = vadd.f32 %v1369, %v1680
    %v1682 = vpop.f32.mrb[0].mxu0
    %1683 = vmatprep.mubr.bf16.mxu0 0
    %1684 = vmatmul.mubr.bf16.gmra.mrb[0].mxu0 %v1345
    %v1685 = vpop.f32.mrb[0].mxu0
    %v1686 = vadd.f32 %v1369, %v1685
    %v1687 = vpop.f32.mrb[0].mxu0
    %v1688 = vpop.f32.mrb[0].mxu0
    %v1689 = vadd.f32 %v1369, %v1688
    %v1690 = vpop.f32.mrb[0].mxu0
    %1691 = vmatprep.mubr.bf16.mxu0 0
    %1692 = vmatmul.mubr.bf16.gmra.mrb[0].mxu0 %v1346
    %v1693 = vpop.f32.mrb[0].mxu0
    %v1694 = vadd.f32 %v1369, %v1693
    %v1695 = vpop.f32.mrb[0].mxu0
    %v1696 = vpop.f32.mrb[0].mxu0
    %v1697 = vadd.f32 %v1369, %v1696
    %v1698 = vpop.f32.mrb[0].mxu0
    %1699 = vmatprep.mubr.bf16.mxu0 0
    %1700 = vmatmul.mubr.bf16.gmra.mrb[0].mxu0 %v1347
    %v1701 = vpop.f32.mrb[0].mxu0
    %v1702 = vadd.f32 %v1369, %v1701
    %v1703 = vpop.f32.mrb[0].mxu0
    %v1704 = vpop.f32.mrb[0].mxu0
    %v1705 = vadd.f32 %v1369, %v1704
    %v1706 = vpop.f32.mrb[0].mxu0
    %1707 = vdwg.mxu0
    %v1708 = vmax.f32 %v1454, 0.0
    %v1709 = vmax.f32 %v1457, 0.0
    %v1710 = vmax.f32 %v1462, 0.0
    %v1711 = vmax.f32 %v1465, 0.0
    %v1712 = vmax.f32 %v1470, 0.0
    %v1713 = vmax.f32 %v1473, 0.0
    %v1714 = vmax.f32 %v1478, 0.0
    %v1715 = vmax.f32 %v1481, 0.0
    %v1716 = vmax.f32 %v1486, 0.0
    %v1717 = vmax.f32 %v1489, 0.0
    %v1718 = vmax.f32 %v1494, 0.0
    %v1719 = vmax.f32 %v1497, 0.0
    %v1720 = vmax.f32 %v1502, 0.0
    %v1721 = vmax.f32 %v1505, 0.0
    %v1722 = vmax.f32 %v1510, 0.0
    %v1723 = vmax.f32 %v1513, 0.0
    %v1724 = vmax.f32 %v1518, 0.0
    %v1725 = vmax.f32 %v1521, 0.0
    %v1726 = vmax.f32 %v1526, 0.0
    %v1727 = vmax.f32 %v1529, 0.0
    %v1728 = vmax.f32 %v1534, 0.0
    %v1729 = vmax.f32 %v1537, 0.0
    %v1730 = vmax.f32 %v1542, 0.0
    %v1731 = vmax.f32 %v1545, 0.0
    %v1732 = vmax.f32 %v1550, 0.0
    %v1733 = vmax.f32 %v1553, 0.0
    %v1734 = vmax.f32 %v1558, 0.0
    %v1735 = vmax.f32 %v1561, 0.0
    %v1736 = vmax.f32 %v1566, 0.0
    %v1737 = vmax.f32 %v1569, 0.0
    %v1738 = vmax.f32 %v1574, 0.0
    %v1739 = vmax.f32 %v1577, 0.0
    %v1740 = vmax.f32 %v1582, 0.0
    %v1741 = vmax.f32 %v1585, 0.0
    %v1742 = vmax.f32 %v1590, 0.0
    %v1743 = vmax.f32 %v1593, 0.0
    %v1744 = vmax.f32 %v1598, 0.0
    %v1745 = vmax.f32 %v1601, 0.0
    %v1746 = vmax.f32 %v1606, 0.0
    %v1747 = vmax.f32 %v1609, 0.0
    %v1748 = vmax.f32 %v1614, 0.0
    %v1749 = vmax.f32 %v1617, 0.0
    %v1750 = vmax.f32 %v1622, 0.0
    %v1751 = vmax.f32 %v1625, 0.0
    %v1752 = vmax.f32 %v1630, 0.0
    %v1753 = vmax.f32 %v1633, 0.0
    %v1754 = vmax.f32 %v1638, 0.0
    %v1755 = vmax.f32 %v1641, 0.0
    %v1756 = vmax.f32 %v1646, 0.0
    %v1757 = vmax.f32 %v1649, 0.0
    %v1758 = vmax.f32 %v1654, 0.0
    %v1759 = vmax.f32 %v1657, 0.0
    %v1760 = vmax.f32 %v1662, 0.0
    %v1761 = vmax.f32 %v1665, 0.0
    %v1762 = vmax.f32 %v1670, 0.0
    %v1763 = vmax.f32 %v1673, 0.0
    %v1764 = vmax.f32 %v1678, 0.0
    %v1765 = vmax.f32 %v1681, 0.0
    %v1766 = vmax.f32 %v1686, 0.0
    %v1767 = vmax.f32 %v1689, 0.0
    %v1768 = vmax.f32 %v1694, 0.0
    %v1769 = vmax.f32 %v1697, 0.0
    %v1770 = vmax.f32 %v1702, 0.0
    %v1771 = vmax.f32 %v1705, 0.0
    %v1772 = vpack.c.bf16 %v1709, %v1708
    %v1773 = vpack.c.bf16 %v1711, %v1710
    %v1774 = vpack.c.bf16 %v1713, %v1712
    %v1775 = vpack.c.bf16 %v1715, %v1714
    %v1776 = vpack.c.bf16 %v1717, %v1716
    %v1777 = vpack.c.bf16 %v1719, %v1718
    %v1778 = vpack.c.bf16 %v1721, %v1720
    %v1779 = vpack.c.bf16 %v1723, %v1722
    %v1780 = vpack.c.bf16 %v1725, %v1724
    %v1781 = vpack.c.bf16 %v1727, %v1726
    %v1782 = vpack.c.bf16 %v1729, %v1728
    %v1783 = vpack.c.bf16 %v1731, %v1730
    %v1784 = vpack.c.bf16 %v1733, %v1732
    %v1785 = vpack.c.bf16 %v1735, %v1734
    %v1786 = vpack.c.bf16 %v1737, %v1736
    %v1787 = vpack.c.bf16 %v1739, %v1738
    %v1788 = vpack.c.bf16 %v1741, %v1740
    %v1789 = vpack.c.bf16 %v1743, %v1742
    %v1790 = vpack.c.bf16 %v1745, %v1744
    %v1791 = vpack.c.bf16 %v1747, %v1746
    %v1792 = vpack.c.bf16 %v1749, %v1748
    %v1793 = vpack.c.bf16 %v1751, %v1750
    %v1794 = vpack.c.bf16 %v1753, %v1752
    %v1795 = vpack.c.bf16 %v1755, %v1754
    %v1796 = vpack.c.bf16 %v1757, %v1756
    %v1797 = vpack.c.bf16 %v1759, %v1758
    %v1798 = vpack.c.bf16 %v1761, %v1760
    %v1799 = vpack.c.bf16 %v1763, %v1762
    %v1800 = vpack.c.bf16 %v1765, %v1764
    %v1801 = vpack.c.bf16 %v1767, %v1766
    %v1802 = vpack.c.bf16 %v1769, %v1768
    %v1803 = vpack.c.bf16 %v1771, %v1770
    %v1804 = vld [vmem:[#allocation10] sm:$0xf]
    %v1805 = vld [vmem:[#allocation10 + $0x4] sm:$0xf]
    %v1806 = vld [vmem:[#allocation10 + $0x8] sm:$0xf]
    %v1807 = vld [vmem:[#allocation10 + $0xc] sm:$0xf]
    %v1808 = vld [vmem:[#allocation10 + $0x10] sm:$0xf]
    %v1809 = vld [vmem:[#allocation10 + $0x14] sm:$0xf]
    %v1810 = vld [vmem:[#allocation10 + $0x18] sm:$0xf]
    %v1811 = vld [vmem:[#allocation10 + $0x1c] sm:$0xf]
    %v1812 = vld [vmem:[#allocation10 + $0x20] sm:$0xf]
    %v1813 = vld [vmem:[#allocation10 + $0x24] sm:$0xf]
    %v1814 = vld [vmem:[#allocation10 + $0x28] sm:$0xf]
    %v1815 = vld [vmem:[#allocation10 + $0x2c] sm:$0xf]
    %v1816 = vld [vmem:[#allocation10 + $0x30] sm:$0xf]
    %v1817 = vld [vmem:[#allocation10 + $0x34] sm:$0xf]
    %v1818 = vld [vmem:[#allocation10 + $0x38] sm:$0xf]
    %v1819 = vld [vmem:[#allocation10 + $0x3c] sm:$0xf]
    %v1820 = vld [vmem:[%s8] sm:$0x1]
    %v1822 = vlaneseq
    %v1823 = vshrl.u32 %v1822, 7
    %v1824 = vsub.s32 0, %v1823
    %v1825 = vrot.slane %v1820, %v1824
    %v1843 = vunpack.c.l.b16 %v1804
    %v1844 = vunpack.c.l.b16 %v1805
    %v1845 = vunpack.c.l.b16 %v1806
    %v1846 = vunpack.c.l.b16 %v1807
    %v1847 = vunpack.c.l.b16 %v1808
    %v1848 = vunpack.c.l.b16 %v1809
    %v1849 = vunpack.c.l.b16 %v1810
    %v1850 = vunpack.c.l.b16 %v1811
    %v1851 = vunpack.c.l.b16 %v1812
    %v1852 = vunpack.c.l.b16 %v1813
    %v1853 = vunpack.c.l.b16 %v1814
    %v1854 = vunpack.c.l.b16 %v1815
    %v1855 = vunpack.c.l.b16 %v1816
    %v1856 = vunpack.c.l.b16 %v1817
    %v1857 = vunpack.c.l.b16 %v1818
    %v1858 = vunpack.c.l.b16 %v1819
    %v1859 = vpack.c.b16 %v1844, %v1843
    %v1860 = vpack.c.b16 %v1846, %v1845
    %v1861 = vpack.c.b16 %v1848, %v1847
    %v1862 = vpack.c.b16 %v1850, %v1849
    %v1863 = vpack.c.b16 %v1852, %v1851
    %v1864 = vpack.c.b16 %v1854, %v1853
    %v1865 = vpack.c.b16 %v1856, %v1855
    %v1866 = vpack.c.b16 %v1858, %v1857
    %1875 = vmatprep.subr.bf16.mxu0 0
    %1876 = vmatpush1.bf16.msra.mxu0 %v1859
    %1877 = vmatprep.subr.bf16.mxu0 0
    %1878 = vmatpush1.bf16.msra.mxu0 %v1860
    %1879 = vmatprep.subr.bf16.mxu0 0
    %1880 = vmatpush1.bf16.msra.mxu0 %v1861
    %1881 = vmatprep.subr.bf16.mxu0 0
    %1882 = vmatpush1.bf16.msra.mxu0 %v1862
    %1883 = vmatprep.subr.bf16.mxu0 0
    %1884 = vmatpush1.bf16.msra.mxu0 %v1863
    %1885 = vmatprep.subr.bf16.mxu0 0
    %1886 = vmatpush1.bf16.msra.mxu0 %v1864
    %1887 = vmatprep.subr.bf16.mxu0 0
    %1888 = vmatpush1.bf16.msra.mxu0 %v1865
    %1889 = vmatprep.subr.bf16.mxu0 0
    %1890 = vmatpush1.bf16.msra.mxu0 %v1866
    %1891 = vmatprep.subr.bf16.mxu0 0
    %1892 = vmatpush1.bf16.msra.mxu0 0
    %1893 = vmatprep.subr.bf16.mxu0 0
    %1894 = vmatpush1.bf16.msra.mxu0 0
    %1895 = vmatprep.subr.bf16.mxu0 0
    %1896 = vmatpush1.bf16.msra.mxu0 0
    %1897 = vmatprep.subr.bf16.mxu0 0
    %1898 = vmatpush1.bf16.msra.mxu0 0
    %1899 = vmatprep.subr.bf16.mxu0 0
    %1900 = vmatpush1.bf16.msra.mxu0 0
    %1901 = vmatprep.subr.bf16.mxu0 0
    %1902 = vmatpush1.bf16.msra.mxu0 0
    %1903 = vmatprep.subr.bf16.mxu0 0
    %1904 = vmatpush1.bf16.msra.mxu0 0
    %1905 = vmatprep.subr.bf16.mxu0 0
    %1906 = vmatpush1.bf16.msra.mxu0 0
    %1907 = vmatprep.mubr.bf16.mxu0 0
    %1908 = vmatmul.mubr.bf16.gmra.mrb[0].mxu0 %v1772
    %v1909 = vpop.f32.mrb[0].mxu0
    %v1910 = vadd.f32 %v1825, %v1909
    %v1911 = vpop.f32.mrb[0].mxu0
    %v1912 = vpop.f32.mrb[0].mxu0
    %v1913 = vadd.f32 %v1825, %v1912
    %v1914 = vpop.f32.mrb[0].mxu0
    %1915 = vmatprep.mubr.bf16.mxu0 0
    %1916 = vmatmul.mubr.bf16.gmra.mrb[0].mxu0 %v1773
    %v1917 = vpop.f32.mrb[0].mxu0
    %v1918 = vadd.f32 %v1825, %v1917
    %v1919 = vpop.f32.mrb[0].mxu0
    %v1920 = vpop.f32.mrb[0].mxu0
    %v1921 = vadd.f32 %v1825, %v1920
    %v1922 = vpop.f32.mrb[0].mxu0
    %1923 = vmatprep.mubr.bf16.mxu0 0
    %1924 = vmatmul.mubr.bf16.gmra.mrb[0].mxu0 %v1774
    %v1925 = vpop.f32.mrb[0].mxu0
    %v1926 = vadd.f32 %v1825, %v1925
    %v1927 = vpop.f32.mrb[0].mxu0
    %v1928 = vpop.f32.mrb[0].mxu0
    %v1929 = vadd.f32 %v1825, %v1928
    %v1930 = vpop.f32.mrb[0].mxu0
    %1931 = vmatprep.mubr.bf16.mxu0 0
    %1932 = vmatmul.mubr.bf16.gmra.mrb[0].mxu0 %v1775
    %v1933 = vpop.f32.mrb[0].mxu0
    %v1934 = vadd.f32 %v1825, %v1933
    %v1935 = vpop.f32.mrb[0].mxu0
    %v1936 = vpop.f32.mrb[0].mxu0
    %v1937 = vadd.f32 %v1825, %v1936
    %v1938 = vpop.f32.mrb[0].mxu0
    %1939 = vmatprep.mubr.bf16.mxu0 0
    %1940 = vmatmul.mubr.bf16.gmra.mrb[0].mxu0 %v1776
    %v1941 = vpop.f32.mrb[0].mxu0
    %v1942 = vadd.f32 %v1825, %v1941
    %v1943 = vpop.f32.mrb[0].mxu0
    %v1944 = vpop.f32.mrb[0].mxu0
    %v1945 = vadd.f32 %v1825, %v1944
    %v1946 = vpop.f32.mrb[0].mxu0
    %1947 = vmatprep.mubr.bf16.mxu0 0
    %1948 = vmatmul.mubr.bf16.gmra.mrb[0].mxu0 %v1777
    %v1949 = vpop.f32.mrb[0].mxu0
    %v1950 = vadd.f32 %v1825, %v1949
    %v1951 = vpop.f32.mrb[0].mxu0
    %v1952 = vpop.f32.mrb[0].mxu0
    %v1953 = vadd.f32 %v1825, %v1952
    %v1954 = vpop.f32.mrb[0].mxu0
    %1955 = vmatprep.mubr.bf16.mxu0 0
    %1956 = vmatmul.mubr.bf16.gmra.mrb[0].mxu0 %v1778
    %v1957 = vpop.f32.mrb[0].mxu0
    %v1958 = vadd.f32 %v1825, %v1957
    %v1959 = vpop.f32.mrb[0].mxu0
    %v1960 = vpop.f32.mrb[0].mxu0
    %v1961 = vadd.f32 %v1825, %v1960
    %v1962 = vpop.f32.mrb[0].mxu0
    %1963 = vmatprep.mubr.bf16.mxu0 0
    %1964 = vmatmul.mubr.bf16.gmra.mrb[0].mxu0 %v1779
    %v1965 = vpop.f32.mrb[0].mxu0
    %v1966 = vadd.f32 %v1825, %v1965
    %v1967 = vpop.f32.mrb[0].mxu0
    %v1968 = vpop.f32.mrb[0].mxu0
    %v1969 = vadd.f32 %v1825, %v1968
    %v1970 = vpop.f32.mrb[0].mxu0
    %1971 = vmatprep.mubr.bf16.mxu0 0
    %1972 = vmatmul.mubr.bf16.gmra.mrb[0].mxu0 %v1780
    %v1973 = vpop.f32.mrb[0].mxu0
    %v1974 = vadd.f32 %v1825, %v1973
    %v1975 = vpop.f32.mrb[0].mxu0
    %v1976 = vpop.f32.mrb[0].mxu0
    %v1977 = vadd.f32 %v1825, %v1976
    %v1978 = vpop.f32.mrb[0].mxu0
    %1979 = vmatprep.mubr.bf16.mxu0 0
    %1980 = vmatmul.mubr.bf16.gmra.mrb[0].mxu0 %v1781
    %v1981 = vpop.f32.mrb[0].mxu0
    %v1982 = vadd.f32 %v1825, %v1981
    %v1983 = vpop.f32.mrb[0].mxu0
    %v1984 = vpop.f32.mrb[0].mxu0
    %v1985 = vadd.f32 %v1825, %v1984
    %v1986 = vpop.f32.mrb[0].mxu0
    %1987 = vmatprep.mubr.bf16.mxu0 0
    %1988 = vmatmul.mubr.bf16.gmra.mrb[0].mxu0 %v1782
    %v1989 = vpop.f32.mrb[0].mxu0
    %v1990 = vadd.f32 %v1825, %v1989
    %v1991 = vpop.f32.mrb[0].mxu0
    %v1992 = vpop.f32.mrb[0].mxu0
    %v1993 = vadd.f32 %v1825, %v1992
    %v1994 = vpop.f32.mrb[0].mxu0
    %1995 = vmatprep.mubr.bf16.mxu0 0
    %1996 = vmatmul.mubr.bf16.gmra.mrb[0].mxu0 %v1783
    %v1997 = vpop.f32.mrb[0].mxu0
    %v1998 = vadd.f32 %v1825, %v1997
    %v1999 = vpop.f32.mrb[0].mxu0
    %v2000 = vpop.f32.mrb[0].mxu0
    %v2001 = vadd.f32 %v1825, %v2000
    %v2002 = vpop.f32.mrb[0].mxu0
    %2003 = vmatprep.mubr.bf16.mxu0 0
    %2004 = vmatmul.mubr.bf16.gmra.mrb[0].mxu0 %v1784
    %v2005 = vpop.f32.mrb[0].mxu0
    %v2006 = vadd.f32 %v1825, %v2005
    %v2007 = vpop.f32.mrb[0].mxu0
    %v2008 = vpop.f32.mrb[0].mxu0
    %v2009 = vadd.f32 %v1825, %v2008
    %v2010 = vpop.f32.mrb[0].mxu0
    %2011 = vmatprep.mubr.bf16.mxu0 0
    %2012 = vmatmul.mubr.bf16.gmra.mrb[0].mxu0 %v1785
    %v2013 = vpop.f32.mrb[0].mxu0
    %v2014 = vadd.f32 %v1825, %v2013
    %v2015 = vpop.f32.mrb[0].mxu0
    %v2016 = vpop.f32.mrb[0].mxu0
    %v2017 = vadd.f32 %v1825, %v2016
    %v2018 = vpop.f32.mrb[0].mxu0
    %2019 = vmatprep.mubr.bf16.mxu0 0
    %2020 = vmatmul.mubr.bf16.gmra.mrb[0].mxu0 %v1786
    %v2021 = vpop.f32.mrb[0].mxu0
    %v2022 = vadd.f32 %v1825, %v2021
    %v2023 = vpop.f32.mrb[0].mxu0
    %v2024 = vpop.f32.mrb[0].mxu0
    %v2025 = vadd.f32 %v1825, %v2024
    %v2026 = vpop.f32.mrb[0].mxu0
    %2027 = vmatprep.mubr.bf16.mxu0 0
    %2028 = vmatmul.mubr.bf16.gmra.mrb[0].mxu0 %v1787
    %v2029 = vpop.f32.mrb[0].mxu0
    %v2030 = vadd.f32 %v1825, %v2029
    %v2031 = vpop.f32.mrb[0].mxu0
    %v2032 = vpop.f32.mrb[0].mxu0
    %v2033 = vadd.f32 %v1825, %v2032
    %v2034 = vpop.f32.mrb[0].mxu0
    %2035 = vmatprep.mubr.bf16.mxu0 0
    %2036 = vmatmul.mubr.bf16.gmra.mrb[0].mxu0 %v1788
    %v2037 = vpop.f32.mrb[0].mxu0
    %v2038 = vadd.f32 %v1825, %v2037
    %v2039 = vpop.f32.mrb[0].mxu0
    %v2040 = vpop.f32.mrb[0].mxu0
    %v2041 = vadd.f32 %v1825, %v2040
    %v2042 = vpop.f32.mrb[0].mxu0
    %2043 = vmatprep.mubr.bf16.mxu0 0
    %2044 = vmatmul.mubr.bf16.gmra.mrb[0].mxu0 %v1789
    %v2045 = vpop.f32.mrb[0].mxu0
    %v2046 = vadd.f32 %v1825, %v2045
    %v2047 = vpop.f32.mrb[0].mxu0
    %v2048 = vpop.f32.mrb[0].mxu0
    %v2049 = vadd.f32 %v1825, %v2048
    %v2050 = vpop.f32.mrb[0].mxu0
    %2051 = vmatprep.mubr.bf16.mxu0 0
    %2052 = vmatmul.mubr.bf16.gmra.mrb[0].mxu0 %v1790
    %v2053 = vpop.f32.mrb[0].mxu0
    %v2054 = vadd.f32 %v1825, %v2053
    %v2055 = vpop.f32.mrb[0].mxu0
    %v2056 = vpop.f32.mrb[0].mxu0
    %v2057 = vadd.f32 %v1825, %v2056
    %v2058 = vpop.f32.mrb[0].mxu0
    %2059 = vmatprep.mubr.bf16.mxu0 0
    %2060 = vmatmul.mubr.bf16.gmra.mrb[0].mxu0 %v1791
    %v2061 = vpop.f32.mrb[0].mxu0
    %v2062 = vadd.f32 %v1825, %v2061
    %v2063 = vpop.f32.mrb[0].mxu0
    %v2064 = vpop.f32.mrb[0].mxu0
    %v2065 = vadd.f32 %v1825, %v2064
    %v2066 = vpop.f32.mrb[0].mxu0
    %2067 = vmatprep.mubr.bf16.mxu0 0
    %2068 = vmatmul.mubr.bf16.gmra.mrb[0].mxu0 %v1792
    %v2069 = vpop.f32.mrb[0].mxu0
    %v2070 = vadd.f32 %v1825, %v2069
    %v2071 = vpop.f32.mrb[0].mxu0
    %v2072 = vpop.f32.mrb[0].mxu0
    %v2073 = vadd.f32 %v1825, %v2072
    %v2074 = vpop.f32.mrb[0].mxu0
    %2075 = vmatprep.mubr.bf16.mxu0 0
    %2076 = vmatmul.mubr.bf16.gmra.mrb[0].mxu0 %v1793
    %v2077 = vpop.f32.mrb[0].mxu0
    %v2078 = vadd.f32 %v1825, %v2077
    %v2079 = vpop.f32.mrb[0].mxu0
    %v2080 = vpop.f32.mrb[0].mxu0
    %v2081 = vadd.f32 %v1825, %v2080
    %v2082 = vpop.f32.mrb[0].mxu0
    %2083 = vmatprep.mubr.bf16.mxu0 0
    %2084 = vmatmul.mubr.bf16.gmra.mrb[0].mxu0 %v1794
    %v2085 = vpop.f32.mrb[0].mxu0
    %v2086 = vadd.f32 %v1825, %v2085
    %v2087 = vpop.f32.mrb[0].mxu0
    %v2088 = vpop.f32.mrb[0].mxu0
    %v2089 = vadd.f32 %v1825, %v2088
    %v2090 = vpop.f32.mrb[0].mxu0
    %2091 = vmatprep.mubr.bf16.mxu0 0
    %2092 = vmatmul.mubr.bf16.gmra.mrb[0].mxu0 %v1795
    %v2093 = vpop.f32.mrb[0].mxu0
    %v2094 = vadd.f32 %v1825, %v2093
    %v2095 = vpop.f32.mrb[0].mxu0
    %v2096 = vpop.f32.mrb[0].mxu0
    %v2097 = vadd.f32 %v1825, %v2096
    %v2098 = vpop.f32.mrb[0].mxu0
    %2099 = vmatprep.mubr.bf16.mxu0 0
    %2100 = vmatmul.mubr.bf16.gmra.mrb[0].mxu0 %v1796
    %v2101 = vpop.f32.mrb[0].mxu0
    %v2102 = vadd.f32 %v1825, %v2101
    %v2103 = vpop.f32.mrb[0].mxu0
    %v2104 = vpop.f32.mrb[0].mxu0
    %v2105 = vadd.f32 %v1825, %v2104
    %v2106 = vpop.f32.mrb[0].mxu0
    %2107 = vmatprep.mubr.bf16.mxu0 0
    %2108 = vmatmul.mubr.bf16.gmra.mrb[0].mxu0 %v1797
    %v2109 = vpop.f32.mrb[0].mxu0
    %v2110 = vadd.f32 %v1825, %v2109
    %v2111 = vpop.f32.mrb[0].mxu0
    %v2112 = vpop.f32.mrb[0].mxu0
    %v2113 = vadd.f32 %v1825, %v2112
    %v2114 = vpop.f32.mrb[0].mxu0
    %2115 = vmatprep.mubr.bf16.mxu0 0
    %2116 = vmatmul.mubr.bf16.gmra.mrb[0].mxu0 %v1798
    %v2117 = vpop.f32.mrb[0].mxu0
    %v2118 = vadd.f32 %v1825, %v2117
    %v2119 = vpop.f32.mrb[0].mxu0
    %v2120 = vpop.f32.mrb[0].mxu0
    %v2121 = vadd.f32 %v1825, %v2120
    %v2122 = vpop.f32.mrb[0].mxu0
    %2123 = vmatprep.mubr.bf16.mxu0 0
    %2124 = vmatmul.mubr.bf16.gmra.mrb[0].mxu0 %v1799
    %v2125 = vpop.f32.mrb[0].mxu0
    %v2126 = vadd.f32 %v1825, %v2125
    %v2127 = vpop.f32.mrb[0].mxu0
    %v2128 = vpop.f32.mrb[0].mxu0
    %v2129 = vadd.f32 %v1825, %v2128
    %v2130 = vpop.f32.mrb[0].mxu0
    %2131 = vmatprep.mubr.bf16.mxu0 0
    %2132 = vmatmul.mubr.bf16.gmra.mrb[0].mxu0 %v1800
    %v2133 = vpop.f32.mrb[0].mxu0
    %v2134 = vadd.f32 %v1825, %v2133
    %v2135 = vpop.f32.mrb[0].mxu0
    %v2136 = vpop.f32.mrb[0].mxu0
    %v2137 = vadd.f32 %v1825, %v2136
    %v2138 = vpop.f32.mrb[0].mxu0
    %2139 = vmatprep.mubr.bf16.mxu0 0
    %2140 = vmatmul.mubr.bf16.gmra.mrb[0].mxu0 %v1801
    %v2141 = vpop.f32.mrb[0].mxu0
    %v2142 = vadd.f32 %v1825, %v2141
    %v2143 = vpop.f32.mrb[0].mxu0
    %v2144 = vpop.f32.mrb[0].mxu0
    %v2145 = vadd.f32 %v1825, %v2144
    %v2146 = vpop.f32.mrb[0].mxu0
    %2147 = vmatprep.mubr.bf16.mxu0 0
    %2148 = vmatmul.mubr.bf16.gmra.mrb[0].mxu0 %v1802
    %v2149 = vpop.f32.mrb[0].mxu0
    %v2150 = vadd.f32 %v1825, %v2149
    %v2151 = vpop.f32.mrb[0].mxu0
    %v2152 = vpop.f32.mrb[0].mxu0
    %v2153 = vadd.f32 %v1825, %v2152
    %v2154 = vpop.f32.mrb[0].mxu0
    %2155 = vmatprep.mubr.bf16.mxu0 0
    %2156 = vmatmul.mubr.bf16.gmra.mrb[0].mxu0 %v1803
    %v2157 = vpop.f32.mrb[0].mxu0
    %v2158 = vadd.f32 %v1825, %v2157
    %v2159 = vpop.f32.mrb[0].mxu0
    %v2160 = vpop.f32.mrb[0].mxu0
    %v2161 = vadd.f32 %v1825, %v2160
    %v2162 = vpop.f32.mrb[0].mxu0
    %2163 = vdwg.mxu0
    %v2164 = vmax.f32 %v1910, 0.0
    %v2165 = vmax.f32 %v1913, 0.0
    %v2166 = vmax.f32 %v1918, 0.0
    %v2167 = vmax.f32 %v1921, 0.0
    %v2168 = vmax.f32 %v1926, 0.0
    %v2169 = vmax.f32 %v1929, 0.0
    %v2170 = vmax.f32 %v1934, 0.0
    %v2171 = vmax.f32 %v1937, 0.0
    %v2172 = vmax.f32 %v1942, 0.0
    %v2173 = vmax.f32 %v1945, 0.0
    %v2174 = vmax.f32 %v1950, 0.0
    %v2175 = vmax.f32 %v1953, 0.0
    %v2176 = vmax.f32 %v1958, 0.0
    %v2177 = vmax.f32 %v1961, 0.0
    %v2178 = vmax.f32 %v1966, 0.0
    %v2179 = vmax.f32 %v1969, 0.0
    %v2180 = vmax.f32 %v1974, 0.0
    %v2181 = vmax.f32 %v1977, 0.0
    %v2182 = vmax.f32 %v1982, 0.0
    %v2183 = vmax.f32 %v1985, 0.0
    %v2184 = vmax.f32 %v1990, 0.0
    %v2185 = vmax.f32 %v1993, 0.0
    %v2186 = vmax.f32 %v1998, 0.0
    %v2187 = vmax.f32 %v2001, 0.0
    %v2188 = vmax.f32 %v2006, 0.0
    %v2189 = vmax.f32 %v2009, 0.0
    %v2190 = vmax.f32 %v2014, 0.0
    %v2191 = vmax.f32 %v2017, 0.0
    %v2192 = vmax.f32 %v2022, 0.0
    %v2193 = vmax.f32 %v2025, 0.0
    %v2194 = vmax.f32 %v2030, 0.0
    %v2195 = vmax.f32 %v2033, 0.0
    %v2196 = vmax.f32 %v2038, 0.0
    %v2197 = vmax.f32 %v2041, 0.0
    %v2198 = vmax.f32 %v2046, 0.0
    %v2199 = vmax.f32 %v2049, 0.0
    %v2200 = vmax.f32 %v2054, 0.0
    %v2201 = vmax.f32 %v2057, 0.0
    %v2202 = vmax.f32 %v2062, 0.0
    %v2203 = vmax.f32 %v2065, 0.0
    %v2204 = vmax.f32 %v2070, 0.0
    %v2205 = vmax.f32 %v2073, 0.0
    %v2206 = vmax.f32 %v2078, 0.0
    %v2207 = vmax.f32 %v2081, 0.0
    %v2208 = vmax.f32 %v2086, 0.0
    %v2209 = vmax.f32 %v2089, 0.0
    %v2210 = vmax.f32 %v2094, 0.0
    %v2211 = vmax.f32 %v2097, 0.0
    %v2212 = vmax.f32 %v2102, 0.0
    %v2213 = vmax.f32 %v2105, 0.0
    %v2214 = vmax.f32 %v2110, 0.0
    %v2215 = vmax.f32 %v2113, 0.0
    %v2216 = vmax.f32 %v2118, 0.0
    %v2217 = vmax.f32 %v2121, 0.0
    %v2218 = vmax.f32 %v2126, 0.0
    %v2219 = vmax.f32 %v2129, 0.0
    %v2220 = vmax.f32 %v2134, 0.0
    %v2221 = vmax.f32 %v2137, 0.0
    %v2222 = vmax.f32 %v2142, 0.0
    %v2223 = vmax.f32 %v2145, 0.0
    %v2224 = vmax.f32 %v2150, 0.0
    %v2225 = vmax.f32 %v2153, 0.0
    %v2226 = vmax.f32 %v2158, 0.0
    %v2227 = vmax.f32 %v2161, 0.0
    %v2228 = vpack.c.bf16 %v2165, %v2164
    %v2229 = vpack.c.bf16 %v2167, %v2166
    %v2230 = vpack.c.bf16 %v2169, %v2168
    %v2231 = vpack.c.bf16 %v2171, %v2170
    %v2232 = vpack.c.bf16 %v2173, %v2172
    %v2233 = vpack.c.bf16 %v2175, %v2174
    %v2234 = vpack.c.bf16 %v2177, %v2176
    %v2235 = vpack.c.bf16 %v2179, %v2178
    %v2236 = vpack.c.bf16 %v2181, %v2180
    %v2237 = vpack.c.bf16 %v2183, %v2182
    %v2238 = vpack.c.bf16 %v2185, %v2184
    %v2239 = vpack.c.bf16 %v2187, %v2186
    %v2240 = vpack.c.bf16 %v2189, %v2188
    %v2241 = vpack.c.bf16 %v2191, %v2190
    %v2242 = vpack.c.bf16 %v2193, %v2192
    %v2243 = vpack.c.bf16 %v2195, %v2194
    %v2244 = vpack.c.bf16 %v2197, %v2196
    %v2245 = vpack.c.bf16 %v2199, %v2198
    %v2246 = vpack.c.bf16 %v2201, %v2200
    %v2247 = vpack.c.bf16 %v2203, %v2202
    %v2248 = vpack.c.bf16 %v2205, %v2204
    %v2249 = vpack.c.bf16 %v2207, %v2206
    %v2250 = vpack.c.bf16 %v2209, %v2208
    %v2251 = vpack.c.bf16 %v2211, %v2210
    %v2252 = vpack.c.bf16 %v2213, %v2212
    %v2253 = vpack.c.bf16 %v2215, %v2214
    %v2254 = vpack.c.bf16 %v2217, %v2216
    %v2255 = vpack.c.bf16 %v2219, %v2218
    %v2256 = vpack.c.bf16 %v2221, %v2220
    %v2257 = vpack.c.bf16 %v2223, %v2222
    %v2258 = vpack.c.bf16 %v2225, %v2224
    %v2259 = vpack.c.bf16 %v2227, %v2226
    %v2260 = vld [vmem:[#allocation11] sm:$0xf]
    %v2261 = vld [vmem:[#allocation11 + $0x4] sm:$0xf]
    %v2262 = vld [vmem:[#allocation11 + $0x8] sm:$0xf]
    %v2263 = vld [vmem:[#allocation11 + $0xc] sm:$0xf]
    %v2264 = vld [vmem:[#allocation11 + $0x10] sm:$0xf]
    %v2265 = vld [vmem:[#allocation11 + $0x14] sm:$0xf]
    %v2266 = vld [vmem:[#allocation11 + $0x18] sm:$0xf]
    %v2267 = vld [vmem:[#allocation11 + $0x1c] sm:$0xf]
    %v2268 = vld [vmem:[#allocation11 + $0x20] sm:$0xf]
    %v2269 = vld [vmem:[#allocation11 + $0x24] sm:$0xf]
    %v2270 = vld [vmem:[#allocation11 + $0x28] sm:$0xf]
    %v2271 = vld [vmem:[#allocation11 + $0x2c] sm:$0xf]
    %v2272 = vld [vmem:[#allocation11 + $0x30] sm:$0xf]
    %v2273 = vld [vmem:[#allocation11 + $0x34] sm:$0xf]
    %v2274 = vld [vmem:[#allocation11 + $0x38] sm:$0xf]
    %v2275 = vld [vmem:[#allocation11 + $0x3c] sm:$0xf]
    %v2276 = vld [vmem:[%s10] sm:$0x1]
    %v2278 = vlaneseq
    %v2279 = vshrl.u32 %v2278, 7
    %v2280 = vsub.s32 0, %v2279
    %v2281 = vrot.slane %v2276, %v2280
    %v2299 = vunpack.c.l.b16 %v2260
    %v2300 = vunpack.c.l.b16 %v2261
    %v2301 = vunpack.c.l.b16 %v2262
    %v2302 = vunpack.c.l.b16 %v2263
    %v2303 = vunpack.c.l.b16 %v2264
    %v2304 = vunpack.c.l.b16 %v2265
    %v2305 = vunpack.c.l.b16 %v2266
    %v2306 = vunpack.c.l.b16 %v2267
    %v2307 = vunpack.c.l.b16 %v2268
    %v2308 = vunpack.c.l.b16 %v2269
    %v2309 = vunpack.c.l.b16 %v2270
    %v2310 = vunpack.c.l.b16 %v2271
    %v2311 = vunpack.c.l.b16 %v2272
    %v2312 = vunpack.c.l.b16 %v2273
    %v2313 = vunpack.c.l.b16 %v2274
    %v2314 = vunpack.c.l.b16 %v2275
    %v2315 = vpack.c.b16 %v2300, %v2299
    %v2316 = vpack.c.b16 %v2302, %v2301
    %v2317 = vpack.c.b16 %v2304, %v2303
    %v2318 = vpack.c.b16 %v2306, %v2305
    %v2319 = vpack.c.b16 %v2308, %v2307
    %v2320 = vpack.c.b16 %v2310, %v2309
    %v2321 = vpack.c.b16 %v2312, %v2311
    %v2322 = vpack.c.b16 %v2314, %v2313
    %2331 = vmatprep.subr.bf16.mxu0 0
    %2332 = vmatpush1.bf16.msra.mxu0 %v2315
    %2333 = vmatprep.subr.bf16.mxu0 0
    %2334 = vmatpush1.bf16.msra.mxu0 %v2316
    %2335 = vmatprep.subr.bf16.mxu0 0
    %2336 = vmatpush1.bf16.msra.mxu0 %v2317
    %2337 = vmatprep.subr.bf16.mxu0 0
    %2338 = vmatpush1.bf16.msra.mxu0 %v2318
    %2339 = vmatprep.subr.bf16.mxu0 0
    %2340 = vmatpush1.bf16.msra.mxu0 %v2319
    %2341 = vmatprep.subr.bf16.mxu0 0
    %2342 = vmatpush1.bf16.msra.mxu0 %v2320
    %2343 = vmatprep.subr.bf16.mxu0 0
    %2344 = vmatpush1.bf16.msra.mxu0 %v2321
    %2345 = vmatprep.subr.bf16.mxu0 0
    %2346 = vmatpush1.bf16.msra.mxu0 %v2322
    %2347 = vmatprep.subr.bf16.mxu0 0
    %2348 = vmatpush1.bf16.msra.mxu0 0
    %2349 = vmatprep.subr.bf16.mxu0 0
    %2350 = vmatpush1.bf16.msra.mxu0 0
    %2351 = vmatprep.subr.bf16.mxu0 0
    %2352 = vmatpush1.bf16.msra.mxu0 0
    %2353 = vmatprep.subr.bf16.mxu0 0
    %2354 = vmatpush1.bf16.msra.mxu0 0
    %2355 = vmatprep.subr.bf16.mxu0 0
    %2356 = vmatpush1.bf16.msra.mxu0 0
    %2357 = vmatprep.subr.bf16.mxu0 0
    %2358 = vmatpush1.bf16.msra.mxu0 0
    %2359 = vmatprep.subr.bf16.mxu0 0
    %2360 = vmatpush1.bf16.msra.mxu0 0
    %2361 = vmatprep.subr.bf16.mxu0 0
    %2362 = vmatpush1.bf16.msra.mxu0 0
    %2363 = vmatprep.mubr.bf16.mxu0 0
    %2364 = vmatmul.mubr.bf16.gmra.mrb[0].mxu0 %v2228
    %v2365 = vpop.f32.mrb[0].mxu0
    %v2366 = vadd.f32 %v2281, %v2365
    %v2367 = vpop.f32.mrb[0].mxu0
    %v2368 = vpop.f32.mrb[0].mxu0
    %v2369 = vadd.f32 %v2281, %v2368
    %v2370 = vpop.f32.mrb[0].mxu0
    %2371 = vmatprep.mubr.bf16.mxu0 0
    %2372 = vmatmul.mubr.bf16.gmra.mrb[0].mxu0 %v2229
    %v2373 = vpop.f32.mrb[0].mxu0
    %v2374 = vadd.f32 %v2281, %v2373
    %v2375 = vpop.f32.mrb[0].mxu0
    %v2376 = vpop.f32.mrb[0].mxu0
    %v2377 = vadd.f32 %v2281, %v2376
    %v2378 = vpop.f32.mrb[0].mxu0
    %2379 = vmatprep.mubr.bf16.mxu0 0
    %2380 = vmatmul.mubr.bf16.gmra.mrb[0].mxu0 %v2230
    %v2381 = vpop.f32.mrb[0].mxu0
    %v2382 = vadd.f32 %v2281, %v2381
    %v2383 = vpop.f32.mrb[0].mxu0
    %v2384 = vpop.f32.mrb[0].mxu0
    %v2385 = vadd.f32 %v2281, %v2384
    %v2386 = vpop.f32.mrb[0].mxu0
    %2387 = vmatprep.mubr.bf16.mxu0 0
    %2388 = vmatmul.mubr.bf16.gmra.mrb[0].mxu0 %v2231
    %v2389 = vpop.f32.mrb[0].mxu0
    %v2390 = vadd.f32 %v2281, %v2389
    %v2391 = vpop.f32.mrb[0].mxu0
    %v2392 = vpop.f32.mrb[0].mxu0
    %v2393 = vadd.f32 %v2281, %v2392
    %v2394 = vpop.f32.mrb[0].mxu0
    %2395 = vmatprep.mubr.bf16.mxu0 0
    %2396 = vmatmul.mubr.bf16.gmra.mrb[0].mxu0 %v2232
    %v2397 = vpop.f32.mrb[0].mxu0
    %v2398 = vadd.f32 %v2281, %v2397
    %v2399 = vpop.f32.mrb[0].mxu0
    %v2400 = vpop.f32.mrb[0].mxu0
    %v2401 = vadd.f32 %v2281, %v2400
    %v2402 = vpop.f32.mrb[0].mxu0
    %2403 = vmatprep.mubr.bf16.mxu0 0
    %2404 = vmatmul.mubr.bf16.gmra.mrb[0].mxu0 %v2233
    %v2405 = vpop.f32.mrb[0].mxu0
    %v2406 = vadd.f32 %v2281, %v2405
    %v2407 = vpop.f32.mrb[0].mxu0
    %v2408 = vpop.f32.mrb[0].mxu0
    %v2409 = vadd.f32 %v2281, %v2408
    %v2410 = vpop.f32.mrb[0].mxu0
    %2411 = vmatprep.mubr.bf16.mxu0 0
    %2412 = vmatmul.mubr.bf16.gmra.mrb[0].mxu0 %v2234
    %v2413 = vpop.f32.mrb[0].mxu0
    %v2414 = vadd.f32 %v2281, %v2413
    %v2415 = vpop.f32.mrb[0].mxu0
    %v2416 = vpop.f32.mrb[0].mxu0
    %v2417 = vadd.f32 %v2281, %v2416
    %v2418 = vpop.f32.mrb[0].mxu0
    %2419 = vmatprep.mubr.bf16.mxu0 0
    %2420 = vmatmul.mubr.bf16.gmra.mrb[0].mxu0 %v2235
    %v2421 = vpop.f32.mrb[0].mxu0
    %v2422 = vadd.f32 %v2281, %v2421
    %v2423 = vpop.f32.mrb[0].mxu0
    %v2424 = vpop.f32.mrb[0].mxu0
    %v2425 = vadd.f32 %v2281, %v2424
    %v2426 = vpop.f32.mrb[0].mxu0
    %2427 = vmatprep.mubr.bf16.mxu0 0
    %2428 = vmatmul.mubr.bf16.gmra.mrb[0].mxu0 %v2236
    %v2429 = vpop.f32.mrb[0].mxu0
    %v2430 = vadd.f32 %v2281, %v2429
    %v2431 = vpop.f32.mrb[0].mxu0
    %v2432 = vpop.f32.mrb[0].mxu0
    %v2433 = vadd.f32 %v2281, %v2432
    %v2434 = vpop.f32.mrb[0].mxu0
    %2435 = vmatprep.mubr.bf16.mxu0 0
    %2436 = vmatmul.mubr.bf16.gmra.mrb[0].mxu0 %v2237
    %v2437 = vpop.f32.mrb[0].mxu0
    %v2438 = vadd.f32 %v2281, %v2437
    %v2439 = vpop.f32.mrb[0].mxu0
    %v2440 = vpop.f32.mrb[0].mxu0
    %v2441 = vadd.f32 %v2281, %v2440
    %v2442 = vpop.f32.mrb[0].mxu0
    %2443 = vmatprep.mubr.bf16.mxu0 0
    %2444 = vmatmul.mubr.bf16.gmra.mrb[0].mxu0 %v2238
    %v2445 = vpop.f32.mrb[0].mxu0
    %v2446 = vadd.f32 %v2281, %v2445
    %v2447 = vpop.f32.mrb[0].mxu0
    %v2448 = vpop.f32.mrb[0].mxu0
    %v2449 = vadd.f32 %v2281, %v2448
    %v2450 = vpop.f32.mrb[0].mxu0
    %2451 = vmatprep.mubr.bf16.mxu0 0
    %2452 = vmatmul.mubr.bf16.gmra.mrb[0].mxu0 %v2239
    %v2453 = vpop.f32.mrb[0].mxu0
    %v2454 = vadd.f32 %v2281, %v2453
    %v2455 = vpop.f32.mrb[0].mxu0
    %v2456 = vpop.f32.mrb[0].mxu0
    %v2457 = vadd.f32 %v2281, %v2456
    %v2458 = vpop.f32.mrb[0].mxu0
    %2459 = vmatprep.mubr.bf16.mxu0 0
    %2460 = vmatmul.mubr.bf16.gmra.mrb[0].mxu0 %v2240
    %v2461 = vpop.f32.mrb[0].mxu0
    %v2462 = vadd.f32 %v2281, %v2461
    %v2463 = vpop.f32.mrb[0].mxu0
    %v2464 = vpop.f32.mrb[0].mxu0
    %v2465 = vadd.f32 %v2281, %v2464
    %v2466 = vpop.f32.mrb[0].mxu0
    %2467 = vmatprep.mubr.bf16.mxu0 0
    %2468 = vmatmul.mubr.bf16.gmra.mrb[0].mxu0 %v2241
    %v2469 = vpop.f32.mrb[0].mxu0
    %v2470 = vadd.f32 %v2281, %v2469
    %v2471 = vpop.f32.mrb[0].mxu0
    %v2472 = vpop.f32.mrb[0].mxu0
    %v2473 = vadd.f32 %v2281, %v2472
    %v2474 = vpop.f32.mrb[0].mxu0
    %2475 = vmatprep.mubr.bf16.mxu0 0
    %2476 = vmatmul.mubr.bf16.gmra.mrb[0].mxu0 %v2242
    %v2477 = vpop.f32.mrb[0].mxu0
    %v2478 = vadd.f32 %v2281, %v2477
    %v2479 = vpop.f32.mrb[0].mxu0
    %v2480 = vpop.f32.mrb[0].mxu0
    %v2481 = vadd.f32 %v2281, %v2480
    %v2482 = vpop.f32.mrb[0].mxu0
    %2483 = vmatprep.mubr.bf16.mxu0 0
    %2484 = vmatmul.mubr.bf16.gmra.mrb[0].mxu0 %v2243
    %v2485 = vpop.f32.mrb[0].mxu0
    %v2486 = vadd.f32 %v2281, %v2485
    %v2487 = vpop.f32.mrb[0].mxu0
    %v2488 = vpop.f32.mrb[0].mxu0
    %v2489 = vadd.f32 %v2281, %v2488
    %v2490 = vpop.f32.mrb[0].mxu0
    %2491 = vmatprep.mubr.bf16.mxu0 0
    %2492 = vmatmul.mubr.bf16.gmra.mrb[0].mxu0 %v2244
    %v2493 = vpop.f32.mrb[0].mxu0
    %v2494 = vadd.f32 %v2281, %v2493
    %v2495 = vpop.f32.mrb[0].mxu0
    %v2496 = vpop.f32.mrb[0].mxu0
    %v2497 = vadd.f32 %v2281, %v2496
    %v2498 = vpop.f32.mrb[0].mxu0
    %2499 = vmatprep.mubr.bf16.mxu0 0
    %2500 = vmatmul.mubr.bf16.gmra.mrb[0].mxu0 %v2245
    %v2501 = vpop.f32.mrb[0].mxu0
    %v2502 = vadd.f32 %v2281, %v2501
    %v2503 = vpop.f32.mrb[0].mxu0
    %v2504 = vpop.f32.mrb[0].mxu0
    %v2505 = vadd.f32 %v2281, %v2504
    %v2506 = vpop.f32.mrb[0].mxu0
    %2507 = vmatprep.mubr.bf16.mxu0 0
    %2508 = vmatmul.mubr.bf16.gmra.mrb[0].mxu0 %v2246
    %v2509 = vpop.f32.mrb[0].mxu0
    %v2510 = vadd.f32 %v2281, %v2509
    %v2511 = vpop.f32.mrb[0].mxu0
    %v2512 = vpop.f32.mrb[0].mxu0
    %v2513 = vadd.f32 %v2281, %v2512
    %v2514 = vpop.f32.mrb[0].mxu0
    %2515 = vmatprep.mubr.bf16.mxu0 0
    %2516 = vmatmul.mubr.bf16.gmra.mrb[0].mxu0 %v2247
    %v2517 = vpop.f32.mrb[0].mxu0
    %v2518 = vadd.f32 %v2281, %v2517
    %v2519 = vpop.f32.mrb[0].mxu0
    %v2520 = vpop.f32.mrb[0].mxu0
    %v2521 = vadd.f32 %v2281, %v2520
    %v2522 = vpop.f32.mrb[0].mxu0
    %2523 = vmatprep.mubr.bf16.mxu0 0
    %2524 = vmatmul.mubr.bf16.gmra.mrb[0].mxu0 %v2248
    %v2525 = vpop.f32.mrb[0].mxu0
    %v2526 = vadd.f32 %v2281, %v2525
    %v2527 = vpop.f32.mrb[0].mxu0
    %v2528 = vpop.f32.mrb[0].mxu0
    %v2529 = vadd.f32 %v2281, %v2528
    %v2530 = vpop.f32.mrb[0].mxu0
    %2531 = vmatprep.mubr.bf16.mxu0 0
    %2532 = vmatmul.mubr.bf16.gmra.mrb[0].mxu0 %v2249
    %v2533 = vpop.f32.mrb[0].mxu0
    %v2534 = vadd.f32 %v2281, %v2533
    %v2535 = vpop.f32.mrb[0].mxu0
    %v2536 = vpop.f32.mrb[0].mxu0
    %v2537 = vadd.f32 %v2281, %v2536
    %v2538 = vpop.f32.mrb[0].mxu0
    %2539 = vmatprep.mubr.bf16.mxu0 0
    %2540 = vmatmul.mubr.bf16.gmra.mrb[0].mxu0 %v2250
    %v2541 = vpop.f32.mrb[0].mxu0
    %v2542 = vadd.f32 %v2281, %v2541
    %v2543 = vpop.f32.mrb[0].mxu0
    %v2544 = vpop.f32.mrb[0].mxu0
    %v2545 = vadd.f32 %v2281, %v2544
    %v2546 = vpop.f32.mrb[0].mxu0
    %2547 = vmatprep.mubr.bf16.mxu0 0
    %2548 = vmatmul.mubr.bf16.gmra.mrb[0].mxu0 %v2251
    %v2549 = vpop.f32.mrb[0].mxu0
    %v2550 = vadd.f32 %v2281, %v2549
    %v2551 = vpop.f32.mrb[0].mxu0
    %v2552 = vpop.f32.mrb[0].mxu0
    %v2553 = vadd.f32 %v2281, %v2552
    %v2554 = vpop.f32.mrb[0].mxu0
    %2555 = vmatprep.mubr.bf16.mxu0 0
    %2556 = vmatmul.mubr.bf16.gmra.mrb[0].mxu0 %v2252
    %v2557 = vpop.f32.mrb[0].mxu0
    %v2558 = vadd.f32 %v2281, %v2557
    %v2559 = vpop.f32.mrb[0].mxu0
    %v2560 = vpop.f32.mrb[0].mxu0
    %v2561 = vadd.f32 %v2281, %v2560
    %v2562 = vpop.f32.mrb[0].mxu0
    %2563 = vmatprep.mubr.bf16.mxu0 0
    %2564 = vmatmul.mubr.bf16.gmra.mrb[0].mxu0 %v2253
    %v2565 = vpop.f32.mrb[0].mxu0
    %v2566 = vadd.f32 %v2281, %v2565
    %v2567 = vpop.f32.mrb[0].mxu0
    %v2568 = vpop.f32.mrb[0].mxu0
    %v2569 = vadd.f32 %v2281, %v2568
    %v2570 = vpop.f32.mrb[0].mxu0
    %2571 = vmatprep.mubr.bf16.mxu0 0
    %2572 = vmatmul.mubr.bf16.gmra.mrb[0].mxu0 %v2254
    %v2573 = vpop.f32.mrb[0].mxu0
    %v2574 = vadd.f32 %v2281, %v2573
    %v2575 = vpop.f32.mrb[0].mxu0
    %v2576 = vpop.f32.mrb[0].mxu0
    %v2577 = vadd.f32 %v2281, %v2576
    %v2578 = vpop.f32.mrb[0].mxu0
    %2579 = vmatprep.mubr.bf16.mxu0 0
    %2580 = vmatmul.mubr.bf16.gmra.mrb[0].mxu0 %v2255
    %v2581 = vpop.f32.mrb[0].mxu0
    %v2582 = vadd.f32 %v2281, %v2581
    %v2583 = vpop.f32.mrb[0].mxu0
    %v2584 = vpop.f32.mrb[0].mxu0
    %v2585 = vadd.f32 %v2281, %v2584
    %v2586 = vpop.f32.mrb[0].mxu0
    %2587 = vmatprep.mubr.bf16.mxu0 0
    %2588 = vmatmul.mubr.bf16.gmra.mrb[0].mxu0 %v2256
    %v2589 = vpop.f32.mrb[0].mxu0
    %v2590 = vadd.f32 %v2281, %v2589
    %v2591 = vpop.f32.mrb[0].mxu0
    %v2592 = vpop.f32.mrb[0].mxu0
    %v2593 = vadd.f32 %v2281, %v2592
    %v2594 = vpop.f32.mrb[0].mxu0
    %2595 = vmatprep.mubr.bf16.mxu0 0
    %2596 = vmatmul.mubr.bf16.gmra.mrb[0].mxu0 %v2257
    %v2597 = vpop.f32.mrb[0].mxu0
    %v2598 = vadd.f32 %v2281, %v2597
    %v2599 = vpop.f32.mrb[0].mxu0
    %v2600 = vpop.f32.mrb[0].mxu0
    %v2601 = vadd.f32 %v2281, %v2600
    %v2602 = vpop.f32.mrb[0].mxu0
    %2603 = vmatprep.mubr.bf16.mxu0 0
    %2604 = vmatmul.mubr.bf16.gmra.mrb[0].mxu0 %v2258
    %v2605 = vpop.f32.mrb[0].mxu0
    %v2606 = vadd.f32 %v2281, %v2605
    %v2607 = vpop.f32.mrb[0].mxu0
    %v2608 = vpop.f32.mrb[0].mxu0
    %v2609 = vadd.f32 %v2281, %v2608
    %v2610 = vpop.f32.mrb[0].mxu0
    %2611 = vmatprep.mubr.bf16.mxu0 0
    %2612 = vmatmul.mubr.bf16.gmra.mrb[0].mxu0 %v2259
    %v2613 = vpop.f32.mrb[0].mxu0
    %v2614 = vadd.f32 %v2281, %v2613
    %v2615 = vpop.f32.mrb[0].mxu0
    %v2616 = vpop.f32.mrb[0].mxu0
    %v2617 = vadd.f32 %v2281, %v2616
    %v2618 = vpop.f32.mrb[0].mxu0
    %2619 = vdwg.mxu0
    %v2620 = vmax.f32 %v2366, 0.0
    %v2621 = vmax.f32 %v2369, 0.0
    %v2622 = vmax.f32 %v2374, 0.0
    %v2623 = vmax.f32 %v2377, 0.0
    %v2624 = vmax.f32 %v2382, 0.0
    %v2625 = vmax.f32 %v2385, 0.0
    %v2626 = vmax.f32 %v2390, 0.0
    %v2627 = vmax.f32 %v2393, 0.0
    %v2628 = vmax.f32 %v2398, 0.0
    %v2629 = vmax.f32 %v2401, 0.0
    %v2630 = vmax.f32 %v2406, 0.0
    %v2631 = vmax.f32 %v2409, 0.0
    %v2632 = vmax.f32 %v2414, 0.0
    %v2633 = vmax.f32 %v2417, 0.0
    %v2634 = vmax.f32 %v2422, 0.0
    %v2635 = vmax.f32 %v2425, 0.0
    %v2636 = vmax.f32 %v2430, 0.0
    %v2637 = vmax.f32 %v2433, 0.0
    %v2638 = vmax.f32 %v2438, 0.0
    %v2639 = vmax.f32 %v2441, 0.0
    %v2640 = vmax.f32 %v2446, 0.0
    %v2641 = vmax.f32 %v2449, 0.0
    %v2642 = vmax.f32 %v2454, 0.0
    %v2643 = vmax.f32 %v2457, 0.0
    %v2644 = vmax.f32 %v2462, 0.0
    %v2645 = vmax.f32 %v2465, 0.0
    %v2646 = vmax.f32 %v2470, 0.0
    %v2647 = vmax.f32 %v2473, 0.0
    %v2648 = vmax.f32 %v2478, 0.0
    %v2649 = vmax.f32 %v2481, 0.0
    %v2650 = vmax.f32 %v2486, 0.0
    %v2651 = vmax.f32 %v2489, 0.0
    %v2652 = vmax.f32 %v2494, 0.0
    %v2653 = vmax.f32 %v2497, 0.0
    %v2654 = vmax.f32 %v2502, 0.0
    %v2655 = vmax.f32 %v2505, 0.0
    %v2656 = vmax.f32 %v2510, 0.0
    %v2657 = vmax.f32 %v2513, 0.0
    %v2658 = vmax.f32 %v2518, 0.0
    %v2659 = vmax.f32 %v2521, 0.0
    %v2660 = vmax.f32 %v2526, 0.0
    %v2661 = vmax.f32 %v2529, 0.0
    %v2662 = vmax.f32 %v2534, 0.0
    %v2663 = vmax.f32 %v2537, 0.0
    %v2664 = vmax.f32 %v2542, 0.0
    %v2665 = vmax.f32 %v2545, 0.0
    %v2666 = vmax.f32 %v2550, 0.0
    %v2667 = vmax.f32 %v2553, 0.0
    %v2668 = vmax.f32 %v2558, 0.0
    %v2669 = vmax.f32 %v2561, 0.0
    %v2670 = vmax.f32 %v2566, 0.0
    %v2671 = vmax.f32 %v2569, 0.0
    %v2672 = vmax.f32 %v2574, 0.0
    %v2673 = vmax.f32 %v2577, 0.0
    %v2674 = vmax.f32 %v2582, 0.0
    %v2675 = vmax.f32 %v2585, 0.0
    %v2676 = vmax.f32 %v2590, 0.0
    %v2677 = vmax.f32 %v2593, 0.0
    %v2678 = vmax.f32 %v2598, 0.0
    %v2679 = vmax.f32 %v2601, 0.0
    %v2680 = vmax.f32 %v2606, 0.0
    %v2681 = vmax.f32 %v2609, 0.0
    %v2682 = vmax.f32 %v2614, 0.0
    %v2683 = vmax.f32 %v2617, 0.0
    %v2684 = vpack.c.bf16 %v2621, %v2620
    %v2685 = vpack.c.bf16 %v2623, %v2622
    %v2686 = vpack.c.bf16 %v2625, %v2624
    %v2687 = vpack.c.bf16 %v2627, %v2626
    %v2688 = vpack.c.bf16 %v2629, %v2628
    %v2689 = vpack.c.bf16 %v2631, %v2630
    %v2690 = vpack.c.bf16 %v2633, %v2632
    %v2691 = vpack.c.bf16 %v2635, %v2634
    %v2692 = vpack.c.bf16 %v2637, %v2636
    %v2693 = vpack.c.bf16 %v2639, %v2638
    %v2694 = vpack.c.bf16 %v2641, %v2640
    %v2695 = vpack.c.bf16 %v2643, %v2642
    %v2696 = vpack.c.bf16 %v2645, %v2644
    %v2697 = vpack.c.bf16 %v2647, %v2646
    %v2698 = vpack.c.bf16 %v2649, %v2648
    %v2699 = vpack.c.bf16 %v2651, %v2650
    %v2700 = vpack.c.bf16 %v2653, %v2652
    %v2701 = vpack.c.bf16 %v2655, %v2654
    %v2702 = vpack.c.bf16 %v2657, %v2656
    %v2703 = vpack.c.bf16 %v2659, %v2658
    %v2704 = vpack.c.bf16 %v2661, %v2660
    %v2705 = vpack.c.bf16 %v2663, %v2662
    %v2706 = vpack.c.bf16 %v2665, %v2664
    %v2707 = vpack.c.bf16 %v2667, %v2666
    %v2708 = vpack.c.bf16 %v2669, %v2668
    %v2709 = vpack.c.bf16 %v2671, %v2670
    %v2710 = vpack.c.bf16 %v2673, %v2672
    %v2711 = vpack.c.bf16 %v2675, %v2674
    %v2712 = vpack.c.bf16 %v2677, %v2676
    %v2713 = vpack.c.bf16 %v2679, %v2678
    %v2714 = vpack.c.bf16 %v2681, %v2680
    %v2715 = vpack.c.bf16 %v2683, %v2682
    %v2716 = vld [vmem:[#allocation13] sm:$0xf]
    %v2717 = vld [vmem:[#allocation13 + $0x4] sm:$0xf]
    %v2718 = vld [vmem:[#allocation13 + $0x8] sm:$0xf]
    %v2719 = vld [vmem:[#allocation13 + $0xc] sm:$0xf]
    %v2720 = vld [vmem:[#allocation13 + $0x10] sm:$0xf]
    %v2721 = vld [vmem:[#allocation13 + $0x14] sm:$0xf]
    %v2722 = vld [vmem:[#allocation13 + $0x18] sm:$0xf]
    %v2723 = vld [vmem:[#allocation13 + $0x1c] sm:$0xf]
    %v2724 = vld [vmem:[#allocation13 + $0x20] sm:$0xf]
    %v2725 = vld [vmem:[#allocation13 + $0x24] sm:$0xf]
    %v2726 = vld [vmem:[#allocation13 + $0x28] sm:$0xf]
    %v2727 = vld [vmem:[#allocation13 + $0x2c] sm:$0xf]
    %v2728 = vld [vmem:[#allocation13 + $0x30] sm:$0xf]
    %v2729 = vld [vmem:[#allocation13 + $0x34] sm:$0xf]
    %v2730 = vld [vmem:[#allocation13 + $0x38] sm:$0xf]
    %v2731 = vld [vmem:[#allocation13 + $0x3c] sm:$0xf]
    %v2732 = vld [vmem:[%s12] sm:$0x1]
    %v2734 = vlaneseq
    %v2735 = vshrl.u32 %v2734, 7
    %v2736 = vsub.s32 0, %v2735
    %v2737 = vrot.slane %v2732, %v2736
    %v2755 = vunpack.c.l.b16 %v2716
    %v2756 = vunpack.c.l.b16 %v2717
    %v2757 = vunpack.c.l.b16 %v2718
    %v2758 = vunpack.c.l.b16 %v2719
    %v2759 = vunpack.c.l.b16 %v2720
    %v2760 = vunpack.c.l.b16 %v2721
    %v2761 = vunpack.c.l.b16 %v2722
    %v2762 = vunpack.c.l.b16 %v2723
    %v2763 = vunpack.c.l.b16 %v2724
    %v2764 = vunpack.c.l.b16 %v2725
    %v2765 = vunpack.c.l.b16 %v2726
    %v2766 = vunpack.c.l.b16 %v2727
    %v2767 = vunpack.c.l.b16 %v2728
    %v2768 = vunpack.c.l.b16 %v2729
    %v2769 = vunpack.c.l.b16 %v2730
    %v2770 = vunpack.c.l.b16 %v2731
    %v2771 = vpack.c.b16 %v2756, %v2755
    %v2772 = vpack.c.b16 %v2758, %v2757
    %v2773 = vpack.c.b16 %v2760, %v2759
    %v2774 = vpack.c.b16 %v2762, %v2761
    %v2775 = vpack.c.b16 %v2764, %v2763
    %v2776 = vpack.c.b16 %v2766, %v2765
    %v2777 = vpack.c.b16 %v2768, %v2767
    %v2778 = vpack.c.b16 %v2770, %v2769
    %2787 = vmatprep.subr.bf16.mxu0 0
    %2788 = vmatpush1.bf16.msra.mxu0 %v2771
    %2789 = vmatprep.subr.bf16.mxu0 0
    %2790 = vmatpush1.bf16.msra.mxu0 %v2772
    %2791 = vmatprep.subr.bf16.mxu0 0
    %2792 = vmatpush1.bf16.msra.mxu0 %v2773
    %2793 = vmatprep.subr.bf16.mxu0 0
    %2794 = vmatpush1.bf16.msra.mxu0 %v2774
    %2795 = vmatprep.subr.bf16.mxu0 0
    %2796 = vmatpush1.bf16.msra.mxu0 %v2775
    %2797 = vmatprep.subr.bf16.mxu0 0
    %2798 = vmatpush1.bf16.msra.mxu0 %v2776
    %2799 = vmatprep.subr.bf16.mxu0 0
    %2800 = vmatpush1.bf16.msra.mxu0 %v2777
    %2801 = vmatprep.subr.bf16.mxu0 0
    %2802 = vmatpush1.bf16.msra.mxu0 %v2778
    %2803 = vmatprep.subr.bf16.mxu0 0
    %2804 = vmatpush1.bf16.msra.mxu0 0
    %2805 = vmatprep.subr.bf16.mxu0 0
    %2806 = vmatpush1.bf16.msra.mxu0 0
    %2807 = vmatprep.subr.bf16.mxu0 0
    %2808 = vmatpush1.bf16.msra.mxu0 0
    %2809 = vmatprep.subr.bf16.mxu0 0
    %2810 = vmatpush1.bf16.msra.mxu0 0
    %2811 = vmatprep.subr.bf16.mxu0 0
    %2812 = vmatpush1.bf16.msra.mxu0 0
    %2813 = vmatprep.subr.bf16.mxu0 0
    %2814 = vmatpush1.bf16.msra.mxu0 0
    %2815 = vmatprep.subr.bf16.mxu0 0
    %2816 = vmatpush1.bf16.msra.mxu0 0
    %2817 = vmatprep.subr.bf16.mxu0 0
    %2818 = vmatpush1.bf16.msra.mxu0 0
    %2819 = vmatprep.mubr.bf16.mxu0 0
    %2820 = vmatmul.mubr.bf16.gmra.mrb[0].mxu0 %v2684
    %v2821 = vpop.f32.mrb[0].mxu0
    %v2822 = vadd.f32 %v2737, %v2821
    %v2823 = vpop.f32.mrb[0].mxu0
    %v2824 = vpop.f32.mrb[0].mxu0
    %v2825 = vadd.f32 %v2737, %v2824
    %v2826 = vpop.f32.mrb[0].mxu0
    %2827 = vmatprep.mubr.bf16.mxu0 0
    %2828 = vmatmul.mubr.bf16.gmra.mrb[0].mxu0 %v2685
    %v2829 = vpop.f32.mrb[0].mxu0
    %v2830 = vadd.f32 %v2737, %v2829
    %v2831 = vpop.f32.mrb[0].mxu0
    %v2832 = vpop.f32.mrb[0].mxu0
    %v2833 = vadd.f32 %v2737, %v2832
    %v2834 = vpop.f32.mrb[0].mxu0
    %2835 = vmatprep.mubr.bf16.mxu0 0
    %2836 = vmatmul.mubr.bf16.gmra.mrb[0].mxu0 %v2686
    %v2837 = vpop.f32.mrb[0].mxu0
    %v2838 = vadd.f32 %v2737, %v2837
    %v2839 = vpop.f32.mrb[0].mxu0
    %v2840 = vpop.f32.mrb[0].mxu0
    %v2841 = vadd.f32 %v2737, %v2840
    %v2842 = vpop.f32.mrb[0].mxu0
    %2843 = vmatprep.mubr.bf16.mxu0 0
    %2844 = vmatmul.mubr.bf16.gmra.mrb[0].mxu0 %v2687
    %v2845 = vpop.f32.mrb[0].mxu0
    %v2846 = vadd.f32 %v2737, %v2845
    %v2847 = vpop.f32.mrb[0].mxu0
    %v2848 = vpop.f32.mrb[0].mxu0
    %v2849 = vadd.f32 %v2737, %v2848
    %v2850 = vpop.f32.mrb[0].mxu0
    %2851 = vmatprep.mubr.bf16.mxu0 0
    %2852 = vmatmul.mubr.bf16.gmra.mrb[0].mxu0 %v2688
    %v2853 = vpop.f32.mrb[0].mxu0
    %v2854 = vadd.f32 %v2737, %v2853
    %v2855 = vpop.f32.mrb[0].mxu0
    %v2856 = vpop.f32.mrb[0].mxu0
    %v2857 = vadd.f32 %v2737, %v2856
    %v2858 = vpop.f32.mrb[0].mxu0
    %2859 = vmatprep.mubr.bf16.mxu0 0
    %2860 = vmatmul.mubr.bf16.gmra.mrb[0].mxu0 %v2689
    %v2861 = vpop.f32.mrb[0].mxu0
    %v2862 = vadd.f32 %v2737, %v2861
    %v2863 = vpop.f32.mrb[0].mxu0
    %v2864 = vpop.f32.mrb[0].mxu0
    %v2865 = vadd.f32 %v2737, %v2864
    %v2866 = vpop.f32.mrb[0].mxu0
    %2867 = vmatprep.mubr.bf16.mxu0 0
    %2868 = vmatmul.mubr.bf16.gmra.mrb[0].mxu0 %v2690
    %v2869 = vpop.f32.mrb[0].mxu0
    %v2870 = vadd.f32 %v2737, %v2869
    %v2871 = vpop.f32.mrb[0].mxu0
    %v2872 = vpop.f32.mrb[0].mxu0
    %v2873 = vadd.f32 %v2737, %v2872
    %v2874 = vpop.f32.mrb[0].mxu0
    %2875 = vmatprep.mubr.bf16.mxu0 0
    %2876 = vmatmul.mubr.bf16.gmra.mrb[0].mxu0 %v2691
    %v2877 = vpop.f32.mrb[0].mxu0
    %v2878 = vadd.f32 %v2737, %v2877
    %v2879 = vpop.f32.mrb[0].mxu0
    %v2880 = vpop.f32.mrb[0].mxu0
    %v2881 = vadd.f32 %v2737, %v2880
    %v2882 = vpop.f32.mrb[0].mxu0
    %2883 = vmatprep.mubr.bf16.mxu0 0
    %2884 = vmatmul.mubr.bf16.gmra.mrb[0].mxu0 %v2692
    %v2885 = vpop.f32.mrb[0].mxu0
    %v2886 = vadd.f32 %v2737, %v2885
    %v2887 = vpop.f32.mrb[0].mxu0
    %v2888 = vpop.f32.mrb[0].mxu0
    %v2889 = vadd.f32 %v2737, %v2888
    %v2890 = vpop.f32.mrb[0].mxu0
    %2891 = vmatprep.mubr.bf16.mxu0 0
    %2892 = vmatmul.mubr.bf16.gmra.mrb[0].mxu0 %v2693
    %v2893 = vpop.f32.mrb[0].mxu0
    %v2894 = vadd.f32 %v2737, %v2893
    %v2895 = vpop.f32.mrb[0].mxu0
    %v2896 = vpop.f32.mrb[0].mxu0
    %v2897 = vadd.f32 %v2737, %v2896
    %v2898 = vpop.f32.mrb[0].mxu0
    %2899 = vmatprep.mubr.bf16.mxu0 0
    %2900 = vmatmul.mubr.bf16.gmra.mrb[0].mxu0 %v2694
    %v2901 = vpop.f32.mrb[0].mxu0
    %v2902 = vadd.f32 %v2737, %v2901
    %v2903 = vpop.f32.mrb[0].mxu0
    %v2904 = vpop.f32.mrb[0].mxu0
    %v2905 = vadd.f32 %v2737, %v2904
    %v2906 = vpop.f32.mrb[0].mxu0
    %2907 = vmatprep.mubr.bf16.mxu0 0
    %2908 = vmatmul.mubr.bf16.gmra.mrb[0].mxu0 %v2695
    %v2909 = vpop.f32.mrb[0].mxu0
    %v2910 = vadd.f32 %v2737, %v2909
    %v2911 = vpop.f32.mrb[0].mxu0
    %v2912 = vpop.f32.mrb[0].mxu0
    %v2913 = vadd.f32 %v2737, %v2912
    %v2914 = vpop.f32.mrb[0].mxu0
    %2915 = vmatprep.mubr.bf16.mxu0 0
    %2916 = vmatmul.mubr.bf16.gmra.mrb[0].mxu0 %v2696
    %v2917 = vpop.f32.mrb[0].mxu0
    %v2918 = vadd.f32 %v2737, %v2917
    %v2919 = vpop.f32.mrb[0].mxu0
    %v2920 = vpop.f32.mrb[0].mxu0
    %v2921 = vadd.f32 %v2737, %v2920
    %v2922 = vpop.f32.mrb[0].mxu0
    %2923 = vmatprep.mubr.bf16.mxu0 0
    %2924 = vmatmul.mubr.bf16.gmra.mrb[0].mxu0 %v2697
    %v2925 = vpop.f32.mrb[0].mxu0
    %v2926 = vadd.f32 %v2737, %v2925
    %v2927 = vpop.f32.mrb[0].mxu0
    %v2928 = vpop.f32.mrb[0].mxu0
    %v2929 = vadd.f32 %v2737, %v2928
    %v2930 = vpop.f32.mrb[0].mxu0
    %2931 = vmatprep.mubr.bf16.mxu0 0
    %2932 = vmatmul.mubr.bf16.gmra.mrb[0].mxu0 %v2698
    %v2933 = vpop.f32.mrb[0].mxu0
    %v2934 = vadd.f32 %v2737, %v2933
    %v2935 = vpop.f32.mrb[0].mxu0
    %v2936 = vpop.f32.mrb[0].mxu0
    %v2937 = vadd.f32 %v2737, %v2936
    %v2938 = vpop.f32.mrb[0].mxu0
    %2939 = vmatprep.mubr.bf16.mxu0 0
    %2940 = vmatmul.mubr.bf16.gmra.mrb[0].mxu0 %v2699
    %v2941 = vpop.f32.mrb[0].mxu0
    %v2942 = vadd.f32 %v2737, %v2941
    %v2943 = vpop.f32.mrb[0].mxu0
    %v2944 = vpop.f32.mrb[0].mxu0
    %v2945 = vadd.f32 %v2737, %v2944
    %v2946 = vpop.f32.mrb[0].mxu0
    %2947 = vmatprep.mubr.bf16.mxu0 0
    %2948 = vmatmul.mubr.bf16.gmra.mrb[0].mxu0 %v2700
    %v2949 = vpop.f32.mrb[0].mxu0
    %v2950 = vadd.f32 %v2737, %v2949
    %v2951 = vpop.f32.mrb[0].mxu0
    %v2952 = vpop.f32.mrb[0].mxu0
    %v2953 = vadd.f32 %v2737, %v2952
    %v2954 = vpop.f32.mrb[0].mxu0
    %2955 = vmatprep.mubr.bf16.mxu0 0
    %2956 = vmatmul.mubr.bf16.gmra.mrb[0].mxu0 %v2701
    %v2957 = vpop.f32.mrb[0].mxu0
    %v2958 = vadd.f32 %v2737, %v2957
    %v2959 = vpop.f32.mrb[0].mxu0
    %v2960 = vpop.f32.mrb[0].mxu0
    %v2961 = vadd.f32 %v2737, %v2960
    %v2962 = vpop.f32.mrb[0].mxu0
    %2963 = vmatprep.mubr.bf16.mxu0 0
    %2964 = vmatmul.mubr.bf16.gmra.mrb[0].mxu0 %v2702
    %v2965 = vpop.f32.mrb[0].mxu0
    %v2966 = vadd.f32 %v2737, %v2965
    %v2967 = vpop.f32.mrb[0].mxu0
    %v2968 = vpop.f32.mrb[0].mxu0
    %v2969 = vadd.f32 %v2737, %v2968
    %v2970 = vpop.f32.mrb[0].mxu0
    %2971 = vmatprep.mubr.bf16.mxu0 0
    %2972 = vmatmul.mubr.bf16.gmra.mrb[0].mxu0 %v2703
    %v2973 = vpop.f32.mrb[0].mxu0
    %v2974 = vadd.f32 %v2737, %v2973
    %v2975 = vpop.f32.mrb[0].mxu0
    %v2976 = vpop.f32.mrb[0].mxu0
    %v2977 = vadd.f32 %v2737, %v2976
    %v2978 = vpop.f32.mrb[0].mxu0
    %2979 = vmatprep.mubr.bf16.mxu0 0
    %2980 = vmatmul.mubr.bf16.gmra.mrb[0].mxu0 %v2704
    %v2981 = vpop.f32.mrb[0].mxu0
    %v2982 = vadd.f32 %v2737, %v2981
    %v2983 = vpop.f32.mrb[0].mxu0
    %v2984 = vpop.f32.mrb[0].mxu0
    %v2985 = vadd.f32 %v2737, %v2984
    %v2986 = vpop.f32.mrb[0].mxu0
    %2987 = vmatprep.mubr.bf16.mxu0 0
    %2988 = vmatmul.mubr.bf16.gmra.mrb[0].mxu0 %v2705
    %v2989 = vpop.f32.mrb[0].mxu0
    %v2990 = vadd.f32 %v2737, %v2989
    %v2991 = vpop.f32.mrb[0].mxu0
    %v2992 = vpop.f32.mrb[0].mxu0
    %v2993 = vadd.f32 %v2737, %v2992
    %v2994 = vpop.f32.mrb[0].mxu0
    %2995 = vmatprep.mubr.bf16.mxu0 0
    %2996 = vmatmul.mubr.bf16.gmra.mrb[0].mxu0 %v2706
    %v2997 = vpop.f32.mrb[0].mxu0
    %v2998 = vadd.f32 %v2737, %v2997
    %v2999 = vpop.f32.mrb[0].mxu0
    %v3000 = vpop.f32.mrb[0].mxu0
    %v3001 = vadd.f32 %v2737, %v3000
    %v3002 = vpop.f32.mrb[0].mxu0
    %3003 = vmatprep.mubr.bf16.mxu0 0
    %3004 = vmatmul.mubr.bf16.gmra.mrb[0].mxu0 %v2707
    %v3005 = vpop.f32.mrb[0].mxu0
    %v3006 = vadd.f32 %v2737, %v3005
    %v3007 = vpop.f32.mrb[0].mxu0
    %v3008 = vpop.f32.mrb[0].mxu0
    %v3009 = vadd.f32 %v2737, %v3008
    %v3010 = vpop.f32.mrb[0].mxu0
    %3011 = vmatprep.mubr.bf16.mxu0 0
    %3012 = vmatmul.mubr.bf16.gmra.mrb[0].mxu0 %v2708
    %v3013 = vpop.f32.mrb[0].mxu0
    %v3014 = vadd.f32 %v2737, %v3013
    %v3015 = vpop.f32.mrb[0].mxu0
    %v3016 = vpop.f32.mrb[0].mxu0
    %v3017 = vadd.f32 %v2737, %v3016
    %v3018 = vpop.f32.mrb[0].mxu0
    %3019 = vmatprep.mubr.bf16.mxu0 0
    %3020 = vmatmul.mubr.bf16.gmra.mrb[0].mxu0 %v2709
    %v3021 = vpop.f32.mrb[0].mxu0
    %v3022 = vadd.f32 %v2737, %v3021
    %v3023 = vpop.f32.mrb[0].mxu0
    %v3024 = vpop.f32.mrb[0].mxu0
    %v3025 = vadd.f32 %v2737, %v3024
    %v3026 = vpop.f32.mrb[0].mxu0
    %3027 = vmatprep.mubr.bf16.mxu0 0
    %3028 = vmatmul.mubr.bf16.gmra.mrb[0].mxu0 %v2710
    %v3029 = vpop.f32.mrb[0].mxu0
    %v3030 = vadd.f32 %v2737, %v3029
    %v3031 = vpop.f32.mrb[0].mxu0
    %v3032 = vpop.f32.mrb[0].mxu0
    %v3033 = vadd.f32 %v2737, %v3032
    %v3034 = vpop.f32.mrb[0].mxu0
    %3035 = vmatprep.mubr.bf16.mxu0 0
    %3036 = vmatmul.mubr.bf16.gmra.mrb[0].mxu0 %v2711
    %v3037 = vpop.f32.mrb[0].mxu0
    %v3038 = vadd.f32 %v2737, %v3037
    %v3039 = vpop.f32.mrb[0].mxu0
    %v3040 = vpop.f32.mrb[0].mxu0
    %v3041 = vadd.f32 %v2737, %v3040
    %v3042 = vpop.f32.mrb[0].mxu0
    %3043 = vmatprep.mubr.bf16.mxu0 0
    %3044 = vmatmul.mubr.bf16.gmra.mrb[0].mxu0 %v2712
    %v3045 = vpop.f32.mrb[0].mxu0
    %v3046 = vadd.f32 %v2737, %v3045
    %v3047 = vpop.f32.mrb[0].mxu0
    %v3048 = vpop.f32.mrb[0].mxu0
    %v3049 = vadd.f32 %v2737, %v3048
    %v3050 = vpop.f32.mrb[0].mxu0
    %3051 = vmatprep.mubr.bf16.mxu0 0
    %3052 = vmatmul.mubr.bf16.gmra.mrb[0].mxu0 %v2713
    %v3053 = vpop.f32.mrb[0].mxu0
    %v3054 = vadd.f32 %v2737, %v3053
    %v3055 = vpop.f32.mrb[0].mxu0
    %v3056 = vpop.f32.mrb[0].mxu0
    %v3057 = vadd.f32 %v2737, %v3056
    %v3058 = vpop.f32.mrb[0].mxu0
    %3059 = vmatprep.mubr.bf16.mxu0 0
    %3060 = vmatmul.mubr.bf16.gmra.mrb[0].mxu0 %v2714
    %v3061 = vpop.f32.mrb[0].mxu0
    %v3062 = vadd.f32 %v2737, %v3061
    %v3063 = vpop.f32.mrb[0].mxu0
    %v3064 = vpop.f32.mrb[0].mxu0
    %v3065 = vadd.f32 %v2737, %v3064
    %v3066 = vpop.f32.mrb[0].mxu0
    %3067 = vmatprep.mubr.bf16.mxu0 0
    %3068 = vmatmul.mubr.bf16.gmra.mrb[0].mxu0 %v2715
    %v3069 = vpop.f32.mrb[0].mxu0
    %v3070 = vadd.f32 %v2737, %v3069
    %v3071 = vpop.f32.mrb[0].mxu0
    %v3072 = vpop.f32.mrb[0].mxu0
    %v3073 = vadd.f32 %v2737, %v3072
    %v3074 = vpop.f32.mrb[0].mxu0
    %3075 = vdwg.mxu0
    %v3076 = vmax.f32 %v2822, 0.0
    %v3077 = vmax.f32 %v2825, 0.0
    %v3078 = vmax.f32 %v2830, 0.0
    %v3079 = vmax.f32 %v2833, 0.0
    %v3080 = vmax.f32 %v2838, 0.0
    %v3081 = vmax.f32 %v2841, 0.0
    %v3082 = vmax.f32 %v2846, 0.0
    %v3083 = vmax.f32 %v2849, 0.0
    %v3084 = vmax.f32 %v2854, 0.0
    %v3085 = vmax.f32 %v2857, 0.0
    %v3086 = vmax.f32 %v2862, 0.0
    %v3087 = vmax.f32 %v2865, 0.0
    %v3088 = vmax.f32 %v2870, 0.0
    %v3089 = vmax.f32 %v2873, 0.0
    %v3090 = vmax.f32 %v2878, 0.0
    %v3091 = vmax.f32 %v2881, 0.0
    %v3092 = vmax.f32 %v2886, 0.0
    %v3093 = vmax.f32 %v2889, 0.0
    %v3094 = vmax.f32 %v2894, 0.0
    %v3095 = vmax.f32 %v2897, 0.0
    %v3096 = vmax.f32 %v2902, 0.0
    %v3097 = vmax.f32 %v2905, 0.0
    %v3098 = vmax.f32 %v2910, 0.0
    %v3099 = vmax.f32 %v2913, 0.0
    %v3100 = vmax.f32 %v2918, 0.0
    %v3101 = vmax.f32 %v2921, 0.0
    %v3102 = vmax.f32 %v2926, 0.0
    %v3103 = vmax.f32 %v2929, 0.0
    %v3104 = vmax.f32 %v2934, 0.0
    %v3105 = vmax.f32 %v2937, 0.0
    %v3106 = vmax.f32 %v2942, 0.0
    %v3107 = vmax.f32 %v2945, 0.0
    %v3108 = vmax.f32 %v2950, 0.0
    %v3109 = vmax.f32 %v2953, 0.0
    %v3110 = vmax.f32 %v2958, 0.0
    %v3111 = vmax.f32 %v2961, 0.0
    %v3112 = vmax.f32 %v2966, 0.0
    %v3113 = vmax.f32 %v2969, 0.0
    %v3114 = vmax.f32 %v2974, 0.0
    %v3115 = vmax.f32 %v2977, 0.0
    %v3116 = vmax.f32 %v2982, 0.0
    %v3117 = vmax.f32 %v2985, 0.0
    %v3118 = vmax.f32 %v2990, 0.0
    %v3119 = vmax.f32 %v2993, 0.0
    %v3120 = vmax.f32 %v2998, 0.0
    %v3121 = vmax.f32 %v3001, 0.0
    %v3122 = vmax.f32 %v3006, 0.0
    %v3123 = vmax.f32 %v3009, 0.0
    %v3124 = vmax.f32 %v3014, 0.0
    %v3125 = vmax.f32 %v3017, 0.0
    %v3126 = vmax.f32 %v3022, 0.0
    %v3127 = vmax.f32 %v3025, 0.0
    %v3128 = vmax.f32 %v3030, 0.0
    %v3129 = vmax.f32 %v3033, 0.0
    %v3130 = vmax.f32 %v3038, 0.0
    %v3131 = vmax.f32 %v3041, 0.0
    %v3132 = vmax.f32 %v3046, 0.0
    %v3133 = vmax.f32 %v3049, 0.0
    %v3134 = vmax.f32 %v3054, 0.0
    %v3135 = vmax.f32 %v3057, 0.0
    %v3136 = vmax.f32 %v3062, 0.0
    %v3137 = vmax.f32 %v3065, 0.0
    %v3138 = vmax.f32 %v3070, 0.0
    %v3139 = vmax.f32 %v3073, 0.0
    %v3140 = vpack.c.bf16 %v3077, %v3076
    %v3141 = vpack.c.bf16 %v3079, %v3078
    %v3142 = vpack.c.bf16 %v3081, %v3080
    %v3143 = vpack.c.bf16 %v3083, %v3082
    %v3144 = vpack.c.bf16 %v3085, %v3084
    %v3145 = vpack.c.bf16 %v3087, %v3086
    %v3146 = vpack.c.bf16 %v3089, %v3088
    %v3147 = vpack.c.bf16 %v3091, %v3090
    %v3148 = vpack.c.bf16 %v3093, %v3092
    %v3149 = vpack.c.bf16 %v3095, %v3094
    %v3150 = vpack.c.bf16 %v3097, %v3096
    %v3151 = vpack.c.bf16 %v3099, %v3098
    %v3152 = vpack.c.bf16 %v3101, %v3100
    %v3153 = vpack.c.bf16 %v3103, %v3102
    %v3154 = vpack.c.bf16 %v3105, %v3104
    %v3155 = vpack.c.bf16 %v3107, %v3106
    %v3156 = vpack.c.bf16 %v3109, %v3108
    %v3157 = vpack.c.bf16 %v3111, %v3110
    %v3158 = vpack.c.bf16 %v3113, %v3112
    %v3159 = vpack.c.bf16 %v3115, %v3114
    %v3160 = vpack.c.bf16 %v3117, %v3116
    %v3161 = vpack.c.bf16 %v3119, %v3118
    %v3162 = vpack.c.bf16 %v3121, %v3120
    %v3163 = vpack.c.bf16 %v3123, %v3122
    %v3164 = vpack.c.bf16 %v3125, %v3124
    %v3165 = vpack.c.bf16 %v3127, %v3126
    %v3166 = vpack.c.bf16 %v3129, %v3128
    %v3167 = vpack.c.bf16 %v3131, %v3130
    %v3168 = vpack.c.bf16 %v3133, %v3132
    %v3169 = vpack.c.bf16 %v3135, %v3134
    %v3170 = vpack.c.bf16 %v3137, %v3136
    %v3171 = vpack.c.bf16 %v3139, %v3138
    %v3172 = vld [vmem:[#allocation14] sm:$0xf]
    %v3173 = vld [vmem:[#allocation14 + $0x4] sm:$0xf]
    %v3174 = vld [vmem:[#allocation14 + $0x8] sm:$0xf]
    %v3175 = vld [vmem:[#allocation14 + $0xc] sm:$0xf]
    %v3176 = vld [vmem:[#allocation14 + $0x10] sm:$0xf]
    %v3177 = vld [vmem:[#allocation14 + $0x14] sm:$0xf]
    %v3178 = vld [vmem:[#allocation14 + $0x18] sm:$0xf]
    %v3179 = vld [vmem:[#allocation14 + $0x1c] sm:$0xf]
    %v3180 = vld [vmem:[#allocation14 + $0x20] sm:$0xf]
    %v3181 = vld [vmem:[#allocation14 + $0x24] sm:$0xf]
    %v3182 = vld [vmem:[#allocation14 + $0x28] sm:$0xf]
    %v3183 = vld [vmem:[#allocation14 + $0x2c] sm:$0xf]
    %v3184 = vld [vmem:[#allocation14 + $0x30] sm:$0xf]
    %v3185 = vld [vmem:[#allocation14 + $0x34] sm:$0xf]
    %v3186 = vld [vmem:[#allocation14 + $0x38] sm:$0xf]
    %v3187 = vld [vmem:[#allocation14 + $0x3c] sm:$0xf]
    %v3188 = vld [vmem:[%s14] sm:$0x1]
    %v3190 = vlaneseq
    %v3191 = vshrl.u32 %v3190, 7
    %v3192 = vsub.s32 0, %v3191
    %v3193 = vrot.slane %v3188, %v3192
    %v3211 = vunpack.c.l.b16 %v3172
    %v3212 = vunpack.c.l.b16 %v3173
    %v3213 = vunpack.c.l.b16 %v3174
    %v3214 = vunpack.c.l.b16 %v3175
    %v3215 = vunpack.c.l.b16 %v3176
    %v3216 = vunpack.c.l.b16 %v3177
    %v3217 = vunpack.c.l.b16 %v3178
    %v3218 = vunpack.c.l.b16 %v3179
    %v3219 = vunpack.c.l.b16 %v3180
    %v3220 = vunpack.c.l.b16 %v3181
    %v3221 = vunpack.c.l.b16 %v3182
    %v3222 = vunpack.c.l.b16 %v3183
    %v3223 = vunpack.c.l.b16 %v3184
    %v3224 = vunpack.c.l.b16 %v3185
    %v3225 = vunpack.c.l.b16 %v3186
    %v3226 = vunpack.c.l.b16 %v3187
    %v3227 = vpack.c.b16 %v3212, %v3211
    %v3228 = vpack.c.b16 %v3214, %v3213
    %v3229 = vpack.c.b16 %v3216, %v3215
    %v3230 = vpack.c.b16 %v3218, %v3217
    %v3231 = vpack.c.b16 %v3220, %v3219
    %v3232 = vpack.c.b16 %v3222, %v3221
    %v3233 = vpack.c.b16 %v3224, %v3223
    %v3234 = vpack.c.b16 %v3226, %v3225
    %3243 = vmatprep.subr.bf16.mxu0 0
    %3244 = vmatpush1.bf16.msra.mxu0 %v3227
    %3245 = vmatprep.subr.bf16.mxu0 0
    %3246 = vmatpush1.bf16.msra.mxu0 %v3228
    %3247 = vmatprep.subr.bf16.mxu0 0
    %3248 = vmatpush1.bf16.msra.mxu0 %v3229
    %3249 = vmatprep.subr.bf16.mxu0 0
    %3250 = vmatpush1.bf16.msra.mxu0 %v3230
    %3251 = vmatprep.subr.bf16.mxu0 0
    %3252 = vmatpush1.bf16.msra.mxu0 %v3231
    %3253 = vmatprep.subr.bf16.mxu0 0
    %3254 = vmatpush1.bf16.msra.mxu0 %v3232
    %3255 = vmatprep.subr.bf16.mxu0 0
    %3256 = vmatpush1.bf16.msra.mxu0 %v3233
    %3257 = vmatprep.subr.bf16.mxu0 0
    %3258 = vmatpush1.bf16.msra.mxu0 %v3234
    %3259 = vmatprep.subr.bf16.mxu0 0
    %3260 = vmatpush1.bf16.msra.mxu0 0
    %3261 = vmatprep.subr.bf16.mxu0 0
    %3262 = vmatpush1.bf16.msra.mxu0 0
    %3263 = vmatprep.subr.bf16.mxu0 0
    %3264 = vmatpush1.bf16.msra.mxu0 0
    %3265 = vmatprep.subr.bf16.mxu0 0
    %3266 = vmatpush1.bf16.msra.mxu0 0
    %3267 = vmatprep.subr.bf16.mxu0 0
    %3268 = vmatpush1.bf16.msra.mxu0 0
    %3269 = vmatprep.subr.bf16.mxu0 0
    %3270 = vmatpush1.bf16.msra.mxu0 0
    %3271 = vmatprep.subr.bf16.mxu0 0
    %3272 = vmatpush1.bf16.msra.mxu0 0
    %3273 = vmatprep.subr.bf16.mxu0 0
    %3274 = vmatpush1.bf16.msra.mxu0 0
    %3275 = vmatprep.mubr.bf16.mxu0 0
    %3276 = vmatmul.mubr.bf16.gmra.mrb[0].mxu0 %v3140
    %v3277 = vpop.f32.mrb[0].mxu0
    %v3278 = vadd.f32 %v3193, %v3277
    %v3279 = vpop.f32.mrb[0].mxu0
    %v3280 = vpop.f32.mrb[0].mxu0
    %v3281 = vadd.f32 %v3193, %v3280
    %v3282 = vpop.f32.mrb[0].mxu0
    %3283 = vmatprep.mubr.bf16.mxu0 0
    %3284 = vmatmul.mubr.bf16.gmra.mrb[0].mxu0 %v3141
    %v3285 = vpop.f32.mrb[0].mxu0
    %v3286 = vadd.f32 %v3193, %v3285
    %v3287 = vpop.f32.mrb[0].mxu0
    %v3288 = vpop.f32.mrb[0].mxu0
    %v3289 = vadd.f32 %v3193, %v3288
    %v3290 = vpop.f32.mrb[0].mxu0
    %3291 = vmatprep.mubr.bf16.mxu0 0
    %3292 = vmatmul.mubr.bf16.gmra.mrb[0].mxu0 %v3142
    %v3293 = vpop.f32.mrb[0].mxu0
    %v3294 = vadd.f32 %v3193, %v3293
    %v3295 = vpop.f32.mrb[0].mxu0
    %v3296 = vpop.f32.mrb[0].mxu0
    %v3297 = vadd.f32 %v3193, %v3296
    %v3298 = vpop.f32.mrb[0].mxu0
    %3299 = vmatprep.mubr.bf16.mxu0 0
    %3300 = vmatmul.mubr.bf16.gmra.mrb[0].mxu0 %v3143
    %v3301 = vpop.f32.mrb[0].mxu0
    %v3302 = vadd.f32 %v3193, %v3301
    %v3303 = vpop.f32.mrb[0].mxu0
    %v3304 = vpop.f32.mrb[0].mxu0
    %v3305 = vadd.f32 %v3193, %v3304
    %v3306 = vpop.f32.mrb[0].mxu0
    %3307 = vmatprep.mubr.bf16.mxu0 0
    %3308 = vmatmul.mubr.bf16.gmra.mrb[0].mxu0 %v3144
    %v3309 = vpop.f32.mrb[0].mxu0
    %v3310 = vadd.f32 %v3193, %v3309
    %v3311 = vpop.f32.mrb[0].mxu0
    %v3312 = vpop.f32.mrb[0].mxu0
    %v3313 = vadd.f32 %v3193, %v3312
    %v3314 = vpop.f32.mrb[0].mxu0
    %3315 = vmatprep.mubr.bf16.mxu0 0
    %3316 = vmatmul.mubr.bf16.gmra.mrb[0].mxu0 %v3145
    %v3317 = vpop.f32.mrb[0].mxu0
    %v3318 = vadd.f32 %v3193, %v3317
    %v3319 = vpop.f32.mrb[0].mxu0
    %v3320 = vpop.f32.mrb[0].mxu0
    %v3321 = vadd.f32 %v3193, %v3320
    %v3322 = vpop.f32.mrb[0].mxu0
    %3323 = vmatprep.mubr.bf16.mxu0 0
    %3324 = vmatmul.mubr.bf16.gmra.mrb[0].mxu0 %v3146
    %v3325 = vpop.f32.mrb[0].mxu0
    %v3326 = vadd.f32 %v3193, %v3325
    %v3327 = vpop.f32.mrb[0].mxu0
    %v3328 = vpop.f32.mrb[0].mxu0
    %v3329 = vadd.f32 %v3193, %v3328
    %v3330 = vpop.f32.mrb[0].mxu0
    %3331 = vmatprep.mubr.bf16.mxu0 0
    %3332 = vmatmul.mubr.bf16.gmra.mrb[0].mxu0 %v3147
    %v3333 = vpop.f32.mrb[0].mxu0
    %v3334 = vadd.f32 %v3193, %v3333
    %v3335 = vpop.f32.mrb[0].mxu0
    %v3336 = vpop.f32.mrb[0].mxu0
    %v3337 = vadd.f32 %v3193, %v3336
    %v3338 = vpop.f32.mrb[0].mxu0
    %3339 = vmatprep.mubr.bf16.mxu0 0
    %3340 = vmatmul.mubr.bf16.gmra.mrb[0].mxu0 %v3148
    %v3341 = vpop.f32.mrb[0].mxu0
    %v3342 = vadd.f32 %v3193, %v3341
    %v3343 = vpop.f32.mrb[0].mxu0
    %v3344 = vpop.f32.mrb[0].mxu0
    %v3345 = vadd.f32 %v3193, %v3344
    %v3346 = vpop.f32.mrb[0].mxu0
    %3347 = vmatprep.mubr.bf16.mxu0 0
    %3348 = vmatmul.mubr.bf16.gmra.mrb[0].mxu0 %v3149
    %v3349 = vpop.f32.mrb[0].mxu0
    %v3350 = vadd.f32 %v3193, %v3349
    %v3351 = vpop.f32.mrb[0].mxu0
    %v3352 = vpop.f32.mrb[0].mxu0
    %v3353 = vadd.f32 %v3193, %v3352
    %v3354 = vpop.f32.mrb[0].mxu0
    %3355 = vmatprep.mubr.bf16.mxu0 0
    %3356 = vmatmul.mubr.bf16.gmra.mrb[0].mxu0 %v3150
    %v3357 = vpop.f32.mrb[0].mxu0
    %v3358 = vadd.f32 %v3193, %v3357
    %v3359 = vpop.f32.mrb[0].mxu0
    %v3360 = vpop.f32.mrb[0].mxu0
    %v3361 = vadd.f32 %v3193, %v3360
    %v3362 = vpop.f32.mrb[0].mxu0
    %3363 = vmatprep.mubr.bf16.mxu0 0
    %3364 = vmatmul.mubr.bf16.gmra.mrb[0].mxu0 %v3151
    %v3365 = vpop.f32.mrb[0].mxu0
    %v3366 = vadd.f32 %v3193, %v3365
    %v3367 = vpop.f32.mrb[0].mxu0
    %v3368 = vpop.f32.mrb[0].mxu0
    %v3369 = vadd.f32 %v3193, %v3368
    %v3370 = vpop.f32.mrb[0].mxu0
    %3371 = vmatprep.mubr.bf16.mxu0 0
    %3372 = vmatmul.mubr.bf16.gmra.mrb[0].mxu0 %v3152
    %v3373 = vpop.f32.mrb[0].mxu0
    %v3374 = vadd.f32 %v3193, %v3373
    %v3375 = vpop.f32.mrb[0].mxu0
    %v3376 = vpop.f32.mrb[0].mxu0
    %v3377 = vadd.f32 %v3193, %v3376
    %v3378 = vpop.f32.mrb[0].mxu0
    %3379 = vmatprep.mubr.bf16.mxu0 0
    %3380 = vmatmul.mubr.bf16.gmra.mrb[0].mxu0 %v3153
    %v3381 = vpop.f32.mrb[0].mxu0
    %v3382 = vadd.f32 %v3193, %v3381
    %v3383 = vpop.f32.mrb[0].mxu0
    %v3384 = vpop.f32.mrb[0].mxu0
    %v3385 = vadd.f32 %v3193, %v3384
    %v3386 = vpop.f32.mrb[0].mxu0
    %3387 = vmatprep.mubr.bf16.mxu0 0
    %3388 = vmatmul.mubr.bf16.gmra.mrb[0].mxu0 %v3154
    %v3389 = vpop.f32.mrb[0].mxu0
    %v3390 = vadd.f32 %v3193, %v3389
    %v3391 = vpop.f32.mrb[0].mxu0
    %v3392 = vpop.f32.mrb[0].mxu0
    %v3393 = vadd.f32 %v3193, %v3392
    %v3394 = vpop.f32.mrb[0].mxu0
    %3395 = vmatprep.mubr.bf16.mxu0 0
    %3396 = vmatmul.mubr.bf16.gmra.mrb[0].mxu0 %v3155
    %v3397 = vpop.f32.mrb[0].mxu0
    %v3398 = vadd.f32 %v3193, %v3397
    %v3399 = vpop.f32.mrb[0].mxu0
    %v3400 = vpop.f32.mrb[0].mxu0
    %v3401 = vadd.f32 %v3193, %v3400
    %v3402 = vpop.f32.mrb[0].mxu0
    %3403 = vmatprep.mubr.bf16.mxu0 0
    %3404 = vmatmul.mubr.bf16.gmra.mrb[0].mxu0 %v3156
    %v3405 = vpop.f32.mrb[0].mxu0
    %v3406 = vadd.f32 %v3193, %v3405
    %v3407 = vpop.f32.mrb[0].mxu0
    %v3408 = vpop.f32.mrb[0].mxu0
    %v3409 = vadd.f32 %v3193, %v3408
    %v3410 = vpop.f32.mrb[0].mxu0
    %3411 = vmatprep.mubr.bf16.mxu0 0
    %3412 = vmatmul.mubr.bf16.gmra.mrb[0].mxu0 %v3157
    %v3413 = vpop.f32.mrb[0].mxu0
    %v3414 = vadd.f32 %v3193, %v3413
    %v3415 = vpop.f32.mrb[0].mxu0
    %v3416 = vpop.f32.mrb[0].mxu0
    %v3417 = vadd.f32 %v3193, %v3416
    %v3418 = vpop.f32.mrb[0].mxu0
    %3419 = vmatprep.mubr.bf16.mxu0 0
    %3420 = vmatmul.mubr.bf16.gmra.mrb[0].mxu0 %v3158
    %v3421 = vpop.f32.mrb[0].mxu0
    %v3422 = vadd.f32 %v3193, %v3421
    %v3423 = vpop.f32.mrb[0].mxu0
    %v3424 = vpop.f32.mrb[0].mxu0
    %v3425 = vadd.f32 %v3193, %v3424
    %v3426 = vpop.f32.mrb[0].mxu0
    %3427 = vmatprep.mubr.bf16.mxu0 0
    %3428 = vmatmul.mubr.bf16.gmra.mrb[0].mxu0 %v3159
    %v3429 = vpop.f32.mrb[0].mxu0
    %v3430 = vadd.f32 %v3193, %v3429
    %v3431 = vpop.f32.mrb[0].mxu0
    %v3432 = vpop.f32.mrb[0].mxu0
    %v3433 = vadd.f32 %v3193, %v3432
    %v3434 = vpop.f32.mrb[0].mxu0
    %3435 = vmatprep.mubr.bf16.mxu0 0
    %3436 = vmatmul.mubr.bf16.gmra.mrb[0].mxu0 %v3160
    %v3437 = vpop.f32.mrb[0].mxu0
    %v3438 = vadd.f32 %v3193, %v3437
    %v3439 = vpop.f32.mrb[0].mxu0
    %v3440 = vpop.f32.mrb[0].mxu0
    %v3441 = vadd.f32 %v3193, %v3440
    %v3442 = vpop.f32.mrb[0].mxu0
    %3443 = vmatprep.mubr.bf16.mxu0 0
    %3444 = vmatmul.mubr.bf16.gmra.mrb[0].mxu0 %v3161
    %v3445 = vpop.f32.mrb[0].mxu0
    %v3446 = vadd.f32 %v3193, %v3445
    %v3447 = vpop.f32.mrb[0].mxu0
    %v3448 = vpop.f32.mrb[0].mxu0
    %v3449 = vadd.f32 %v3193, %v3448
    %v3450 = vpop.f32.mrb[0].mxu0
    %3451 = vmatprep.mubr.bf16.mxu0 0
    %3452 = vmatmul.mubr.bf16.gmra.mrb[0].mxu0 %v3162
    %v3453 = vpop.f32.mrb[0].mxu0
    %v3454 = vadd.f32 %v3193, %v3453
    %v3455 = vpop.f32.mrb[0].mxu0
    %v3456 = vpop.f32.mrb[0].mxu0
    %v3457 = vadd.f32 %v3193, %v3456
    %v3458 = vpop.f32.mrb[0].mxu0
    %3459 = vmatprep.mubr.bf16.mxu0 0
    %3460 = vmatmul.mubr.bf16.gmra.mrb[0].mxu0 %v3163
    %v3461 = vpop.f32.mrb[0].mxu0
    %v3462 = vadd.f32 %v3193, %v3461
    %v3463 = vpop.f32.mrb[0].mxu0
    %v3464 = vpop.f32.mrb[0].mxu0
    %v3465 = vadd.f32 %v3193, %v3464
    %v3466 = vpop.f32.mrb[0].mxu0
    %3467 = vmatprep.mubr.bf16.mxu0 0
    %3468 = vmatmul.mubr.bf16.gmra.mrb[0].mxu0 %v3164
    %v3469 = vpop.f32.mrb[0].mxu0
    %v3470 = vadd.f32 %v3193, %v3469
    %v3471 = vpop.f32.mrb[0].mxu0
    %v3472 = vpop.f32.mrb[0].mxu0
    %v3473 = vadd.f32 %v3193, %v3472
    %v3474 = vpop.f32.mrb[0].mxu0
    %3475 = vmatprep.mubr.bf16.mxu0 0
    %3476 = vmatmul.mubr.bf16.gmra.mrb[0].mxu0 %v3165
    %v3477 = vpop.f32.mrb[0].mxu0
    %v3478 = vadd.f32 %v3193, %v3477
    %v3479 = vpop.f32.mrb[0].mxu0
    %v3480 = vpop.f32.mrb[0].mxu0
    %v3481 = vadd.f32 %v3193, %v3480
    %v3482 = vpop.f32.mrb[0].mxu0
    %3483 = vmatprep.mubr.bf16.mxu0 0
    %3484 = vmatmul.mubr.bf16.gmra.mrb[0].mxu0 %v3166
    %v3485 = vpop.f32.mrb[0].mxu0
    %v3486 = vadd.f32 %v3193, %v3485
    %v3487 = vpop.f32.mrb[0].mxu0
    %v3488 = vpop.f32.mrb[0].mxu0
    %v3489 = vadd.f32 %v3193, %v3488
    %v3490 = vpop.f32.mrb[0].mxu0
    %3491 = vmatprep.mubr.bf16.mxu0 0
    %3492 = vmatmul.mubr.bf16.gmra.mrb[0].mxu0 %v3167
    %v3493 = vpop.f32.mrb[0].mxu0
    %v3494 = vadd.f32 %v3193, %v3493
    %v3495 = vpop.f32.mrb[0].mxu0
    %v3496 = vpop.f32.mrb[0].mxu0
    %v3497 = vadd.f32 %v3193, %v3496
    %v3498 = vpop.f32.mrb[0].mxu0
    %3499 = vmatprep.mubr.bf16.mxu0 0
    %3500 = vmatmul.mubr.bf16.gmra.mrb[0].mxu0 %v3168
    %v3501 = vpop.f32.mrb[0].mxu0
    %v3502 = vadd.f32 %v3193, %v3501
    %v3503 = vpop.f32.mrb[0].mxu0
    %v3504 = vpop.f32.mrb[0].mxu0
    %v3505 = vadd.f32 %v3193, %v3504
    %v3506 = vpop.f32.mrb[0].mxu0
    %3507 = vmatprep.mubr.bf16.mxu0 0
    %3508 = vmatmul.mubr.bf16.gmra.mrb[0].mxu0 %v3169
    %v3509 = vpop.f32.mrb[0].mxu0
    %v3510 = vadd.f32 %v3193, %v3509
    %v3511 = vpop.f32.mrb[0].mxu0
    %v3512 = vpop.f32.mrb[0].mxu0
    %v3513 = vadd.f32 %v3193, %v3512
    %v3514 = vpop.f32.mrb[0].mxu0
    %3515 = vmatprep.mubr.bf16.mxu0 0
    %3516 = vmatmul.mubr.bf16.gmra.mrb[0].mxu0 %v3170
    %v3517 = vpop.f32.mrb[0].mxu0
    %v3518 = vadd.f32 %v3193, %v3517
    %v3519 = vpop.f32.mrb[0].mxu0
    %v3520 = vpop.f32.mrb[0].mxu0
    %v3521 = vadd.f32 %v3193, %v3520
    %v3522 = vpop.f32.mrb[0].mxu0
    %3523 = vmatprep.mubr.bf16.mxu0 0
    %3524 = vmatmul.mubr.bf16.gmra.mrb[0].mxu0 %v3171
    %v3525 = vpop.f32.mrb[0].mxu0
    %v3526 = vadd.f32 %v3193, %v3525
    %v3527 = vpop.f32.mrb[0].mxu0
    %v3528 = vpop.f32.mrb[0].mxu0
    %v3529 = vadd.f32 %v3193, %v3528
    %v3530 = vpop.f32.mrb[0].mxu0
    %3531 = vdwg.mxu0
    %v3532 = vmax.f32 %v3278, 0.0
    %v3533 = vmax.f32 %v3281, 0.0
    %v3534 = vmax.f32 %v3286, 0.0
    %v3535 = vmax.f32 %v3289, 0.0
    %v3536 = vmax.f32 %v3294, 0.0
    %v3537 = vmax.f32 %v3297, 0.0
    %v3538 = vmax.f32 %v3302, 0.0
    %v3539 = vmax.f32 %v3305, 0.0
    %v3540 = vmax.f32 %v3310, 0.0
    %v3541 = vmax.f32 %v3313, 0.0
    %v3542 = vmax.f32 %v3318, 0.0
    %v3543 = vmax.f32 %v3321, 0.0
    %v3544 = vmax.f32 %v3326, 0.0
    %v3545 = vmax.f32 %v3329, 0.0
    %v3546 = vmax.f32 %v3334, 0.0
    %v3547 = vmax.f32 %v3337, 0.0
    %v3548 = vmax.f32 %v3342, 0.0
    %v3549 = vmax.f32 %v3345, 0.0
    %v3550 = vmax.f32 %v3350, 0.0
    %v3551 = vmax.f32 %v3353, 0.0
    %v3552 = vmax.f32 %v3358, 0.0
    %v3553 = vmax.f32 %v3361, 0.0
    %v3554 = vmax.f32 %v3366, 0.0
    %v3555 = vmax.f32 %v3369, 0.0
    %v3556 = vmax.f32 %v3374, 0.0
    %v3557 = vmax.f32 %v3377, 0.0
    %v3558 = vmax.f32 %v3382, 0.0
    %v3559 = vmax.f32 %v3385, 0.0
    %v3560 = vmax.f32 %v3390, 0.0
    %v3561 = vmax.f32 %v3393, 0.0
    %v3562 = vmax.f32 %v3398, 0.0
    %v3563 = vmax.f32 %v3401, 0.0
    %v3564 = vmax.f32 %v3406, 0.0
    %v3565 = vmax.f32 %v3409, 0.0
    %v3566 = vmax.f32 %v3414, 0.0
    %v3567 = vmax.f32 %v3417, 0.0
    %v3568 = vmax.f32 %v3422, 0.0
    %v3569 = vmax.f32 %v3425, 0.0
    %v3570 = vmax.f32 %v3430, 0.0
    %v3571 = vmax.f32 %v3433, 0.0
    %v3572 = vmax.f32 %v3438, 0.0
    %v3573 = vmax.f32 %v3441, 0.0
    %v3574 = vmax.f32 %v3446, 0.0
    %v3575 = vmax.f32 %v3449, 0.0
    %v3576 = vmax.f32 %v3454, 0.0
    %v3577 = vmax.f32 %v3457, 0.0
    %v3578 = vmax.f32 %v3462, 0.0
    %v3579 = vmax.f32 %v3465, 0.0
    %v3580 = vmax.f32 %v3470, 0.0
    %v3581 = vmax.f32 %v3473, 0.0
    %v3582 = vmax.f32 %v3478, 0.0
    %v3583 = vmax.f32 %v3481, 0.0
    %v3584 = vmax.f32 %v3486, 0.0
    %v3585 = vmax.f32 %v3489, 0.0
    %v3586 = vmax.f32 %v3494, 0.0
    %v3587 = vmax.f32 %v3497, 0.0
    %v3588 = vmax.f32 %v3502, 0.0
    %v3589 = vmax.f32 %v3505, 0.0
    %v3590 = vmax.f32 %v3510, 0.0
    %v3591 = vmax.f32 %v3513, 0.0
    %v3592 = vmax.f32 %v3518, 0.0
    %v3593 = vmax.f32 %v3521, 0.0
    %v3594 = vmax.f32 %v3526, 0.0
    %v3595 = vmax.f32 %v3529, 0.0
    %v3596 = vpack.c.bf16 %v3533, %v3532
    %v3597 = vpack.c.bf16 %v3535, %v3534
    %v3598 = vpack.c.bf16 %v3537, %v3536
    %v3599 = vpack.c.bf16 %v3539, %v3538
    %v3600 = vpack.c.bf16 %v3541, %v3540
    %v3601 = vpack.c.bf16 %v3543, %v3542
    %v3602 = vpack.c.bf16 %v3545, %v3544
    %v3603 = vpack.c.bf16 %v3547, %v3546
    %v3604 = vpack.c.bf16 %v3549, %v3548
    %v3605 = vpack.c.bf16 %v3551, %v3550
    %v3606 = vpack.c.bf16 %v3553, %v3552
    %v3607 = vpack.c.bf16 %v3555, %v3554
    %v3608 = vpack.c.bf16 %v3557, %v3556
    %v3609 = vpack.c.bf16 %v3559, %v3558
    %v3610 = vpack.c.bf16 %v3561, %v3560
    %v3611 = vpack.c.bf16 %v3563, %v3562
    %v3612 = vpack.c.bf16 %v3565, %v3564
    %v3613 = vpack.c.bf16 %v3567, %v3566
    %v3614 = vpack.c.bf16 %v3569, %v3568
    %v3615 = vpack.c.bf16 %v3571, %v3570
    %v3616 = vpack.c.bf16 %v3573, %v3572
    %v3617 = vpack.c.bf16 %v3575, %v3574
    %v3618 = vpack.c.bf16 %v3577, %v3576
    %v3619 = vpack.c.bf16 %v3579, %v3578
    %v3620 = vpack.c.bf16 %v3581, %v3580
    %v3621 = vpack.c.bf16 %v3583, %v3582
    %v3622 = vpack.c.bf16 %v3585, %v3584
    %v3623 = vpack.c.bf16 %v3587, %v3586
    %v3624 = vpack.c.bf16 %v3589, %v3588
    %v3625 = vpack.c.bf16 %v3591, %v3590
    %v3626 = vpack.c.bf16 %v3593, %v3592
    %v3627 = vpack.c.bf16 %v3595, %v3594
    %v3628 = vld [vmem:[#allocation16] sm:$0xf]
    %v3629 = vld [vmem:[#allocation16 + $0x4] sm:$0xf]
    %v3630 = vld [vmem:[#allocation16 + $0x8] sm:$0xf]
    %v3631 = vld [vmem:[#allocation16 + $0xc] sm:$0xf]
    %v3632 = vld [vmem:[#allocation16 + $0x10] sm:$0xf]
    %v3633 = vld [vmem:[#allocation16 + $0x14] sm:$0xf]
    %v3634 = vld [vmem:[#allocation16 + $0x18] sm:$0xf]
    %v3635 = vld [vmem:[#allocation16 + $0x1c] sm:$0xf]
    %v3636 = vld [vmem:[#allocation16 + $0x20] sm:$0xf]
    %v3637 = vld [vmem:[#allocation16 + $0x24] sm:$0xf]
    %v3638 = vld [vmem:[#allocation16 + $0x28] sm:$0xf]
    %v3639 = vld [vmem:[#allocation16 + $0x2c] sm:$0xf]
    %v3640 = vld [vmem:[#allocation16 + $0x30] sm:$0xf]
    %v3641 = vld [vmem:[#allocation16 + $0x34] sm:$0xf]
    %v3642 = vld [vmem:[#allocation16 + $0x38] sm:$0xf]
    %v3643 = vld [vmem:[#allocation16 + $0x3c] sm:$0xf]
    %v3644 = vld [vmem:[%s16] sm:$0x1]
    %v3646 = vlaneseq
    %v3647 = vshrl.u32 %v3646, 7
    %v3648 = vsub.s32 0, %v3647
    %v3649 = vrot.slane %v3644, %v3648
    %v3667 = vunpack.c.l.b16 %v3628
    %v3668 = vunpack.c.l.b16 %v3629
    %v3669 = vunpack.c.l.b16 %v3630
    %v3670 = vunpack.c.l.b16 %v3631
    %v3671 = vunpack.c.l.b16 %v3632
    %v3672 = vunpack.c.l.b16 %v3633
    %v3673 = vunpack.c.l.b16 %v3634
    %v3674 = vunpack.c.l.b16 %v3635
    %v3675 = vunpack.c.l.b16 %v3636
    %v3676 = vunpack.c.l.b16 %v3637
    %v3677 = vunpack.c.l.b16 %v3638
    %v3678 = vunpack.c.l.b16 %v3639
    %v3679 = vunpack.c.l.b16 %v3640
    %v3680 = vunpack.c.l.b16 %v3641
    %v3681 = vunpack.c.l.b16 %v3642
    %v3682 = vunpack.c.l.b16 %v3643
    %v3683 = vpack.c.b16 %v3668, %v3667
    %v3684 = vpack.c.b16 %v3670, %v3669
    %v3685 = vpack.c.b16 %v3672, %v3671
    %v3686 = vpack.c.b16 %v3674, %v3673
    %v3687 = vpack.c.b16 %v3676, %v3675
    %v3688 = vpack.c.b16 %v3678, %v3677
    %v3689 = vpack.c.b16 %v3680, %v3679
    %v3690 = vpack.c.b16 %v3682, %v3681
    %3699 = vmatprep.subr.bf16.mxu0 0
    %3700 = vmatpush1.bf16.msra.mxu0 %v3683
    %3701 = vmatprep.subr.bf16.mxu0 0
    %3702 = vmatpush1.bf16.msra.mxu0 %v3684
    %3703 = vmatprep.subr.bf16.mxu0 0
    %3704 = vmatpush1.bf16.msra.mxu0 %v3685
    %3705 = vmatprep.subr.bf16.mxu0 0
    %3706 = vmatpush1.bf16.msra.mxu0 %v3686
    %3707 = vmatprep.subr.bf16.mxu0 0
    %3708 = vmatpush1.bf16.msra.mxu0 %v3687
    %3709 = vmatprep.subr.bf16.mxu0 0
    %3710 = vmatpush1.bf16.msra.mxu0 %v3688
    %3711 = vmatprep.subr.bf16.mxu0 0
    %3712 = vmatpush1.bf16.msra.mxu0 %v3689
    %3713 = vmatprep.subr.bf16.mxu0 0
    %3714 = vmatpush1.bf16.msra.mxu0 %v3690
    %3715 = vmatprep.subr.bf16.mxu0 0
    %3716 = vmatpush1.bf16.msra.mxu0 0
    %3717 = vmatprep.subr.bf16.mxu0 0
    %3718 = vmatpush1.bf16.msra.mxu0 0
    %3719 = vmatprep.subr.bf16.mxu0 0
    %3720 = vmatpush1.bf16.msra.mxu0 0
    %3721 = vmatprep.subr.bf16.mxu0 0
    %3722 = vmatpush1.bf16.msra.mxu0 0
    %3723 = vmatprep.subr.bf16.mxu0 0
    %3724 = vmatpush1.bf16.msra.mxu0 0
    %3725 = vmatprep.subr.bf16.mxu0 0
    %3726 = vmatpush1.bf16.msra.mxu0 0
    %3727 = vmatprep.subr.bf16.mxu0 0
    %3728 = vmatpush1.bf16.msra.mxu0 0
    %3729 = vmatprep.subr.bf16.mxu0 0
    %3730 = vmatpush1.bf16.msra.mxu0 0
    %3731 = vmatprep.mubr.bf16.mxu0 0
    %3732 = vmatmul.mubr.bf16.gmra.mrb[0].mxu0 %v3596
    %v3733 = vpop.f32.mrb[0].mxu0
    %v3734 = vadd.f32 %v3649, %v3733
    %v3735 = vpop.f32.mrb[0].mxu0
    %v3736 = vpop.f32.mrb[0].mxu0
    %v3737 = vadd.f32 %v3649, %v3736
    %v3738 = vpop.f32.mrb[0].mxu0
    %3739 = vmatprep.mubr.bf16.mxu0 0
    %3740 = vmatmul.mubr.bf16.gmra.mrb[0].mxu0 %v3597
    %v3741 = vpop.f32.mrb[0].mxu0
    %v3742 = vadd.f32 %v3649, %v3741
    %v3743 = vpop.f32.mrb[0].mxu0
    %v3744 = vpop.f32.mrb[0].mxu0
    %v3745 = vadd.f32 %v3649, %v3744
    %v3746 = vpop.f32.mrb[0].mxu0
    %3747 = vmatprep.mubr.bf16.mxu0 0
    %3748 = vmatmul.mubr.bf16.gmra.mrb[0].mxu0 %v3598
    %v3749 = vpop.f32.mrb[0].mxu0
    %v3750 = vadd.f32 %v3649, %v3749
    %v3751 = vpop.f32.mrb[0].mxu0
    %v3752 = vpop.f32.mrb[0].mxu0
    %v3753 = vadd.f32 %v3649, %v3752
    %v3754 = vpop.f32.mrb[0].mxu0
    %3755 = vmatprep.mubr.bf16.mxu0 0
    %3756 = vmatmul.mubr.bf16.gmra.mrb[0].mxu0 %v3599
    %v3757 = vpop.f32.mrb[0].mxu0
    %v3758 = vadd.f32 %v3649, %v3757
    %v3759 = vpop.f32.mrb[0].mxu0
    %v3760 = vpop.f32.mrb[0].mxu0
    %v3761 = vadd.f32 %v3649, %v3760
    %v3762 = vpop.f32.mrb[0].mxu0
    %3763 = vmatprep.mubr.bf16.mxu0 0
    %3764 = vmatmul.mubr.bf16.gmra.mrb[0].mxu0 %v3600
    %v3765 = vpop.f32.mrb[0].mxu0
    %v3766 = vadd.f32 %v3649, %v3765
    %v3767 = vpop.f32.mrb[0].mxu0
    %v3768 = vpop.f32.mrb[0].mxu0
    %v3769 = vadd.f32 %v3649, %v3768
    %v3770 = vpop.f32.mrb[0].mxu0
    %3771 = vmatprep.mubr.bf16.mxu0 0
    %3772 = vmatmul.mubr.bf16.gmra.mrb[0].mxu0 %v3601
    %v3773 = vpop.f32.mrb[0].mxu0
    %v3774 = vadd.f32 %v3649, %v3773
    %v3775 = vpop.f32.mrb[0].mxu0
    %v3776 = vpop.f32.mrb[0].mxu0
    %v3777 = vadd.f32 %v3649, %v3776
    %v3778 = vpop.f32.mrb[0].mxu0
    %3779 = vmatprep.mubr.bf16.mxu0 0
    %3780 = vmatmul.mubr.bf16.gmra.mrb[0].mxu0 %v3602
    %v3781 = vpop.f32.mrb[0].mxu0
    %v3782 = vadd.f32 %v3649, %v3781
    %v3783 = vpop.f32.mrb[0].mxu0
    %v3784 = vpop.f32.mrb[0].mxu0
    %v3785 = vadd.f32 %v3649, %v3784
    %v3786 = vpop.f32.mrb[0].mxu0
    %3787 = vmatprep.mubr.bf16.mxu0 0
    %3788 = vmatmul.mubr.bf16.gmra.mrb[0].mxu0 %v3603
    %v3789 = vpop.f32.mrb[0].mxu0
    %v3790 = vadd.f32 %v3649, %v3789
    %v3791 = vpop.f32.mrb[0].mxu0
    %v3792 = vpop.f32.mrb[0].mxu0
    %v3793 = vadd.f32 %v3649, %v3792
    %v3794 = vpop.f32.mrb[0].mxu0
    %3795 = vmatprep.mubr.bf16.mxu0 0
    %3796 = vmatmul.mubr.bf16.gmra.mrb[0].mxu0 %v3604
    %v3797 = vpop.f32.mrb[0].mxu0
    %v3798 = vadd.f32 %v3649, %v3797
    %v3799 = vpop.f32.mrb[0].mxu0
    %v3800 = vpop.f32.mrb[0].mxu0
    %v3801 = vadd.f32 %v3649, %v3800
    %v3802 = vpop.f32.mrb[0].mxu0
    %3803 = vmatprep.mubr.bf16.mxu0 0
    %3804 = vmatmul.mubr.bf16.gmra.mrb[0].mxu0 %v3605
    %v3805 = vpop.f32.mrb[0].mxu0
    %v3806 = vadd.f32 %v3649, %v3805
    %v3807 = vpop.f32.mrb[0].mxu0
    %v3808 = vpop.f32.mrb[0].mxu0
    %v3809 = vadd.f32 %v3649, %v3808
    %v3810 = vpop.f32.mrb[0].mxu0
    %3811 = vmatprep.mubr.bf16.mxu0 0
    %3812 = vmatmul.mubr.bf16.gmra.mrb[0].mxu0 %v3606
    %v3813 = vpop.f32.mrb[0].mxu0
    %v3814 = vadd.f32 %v3649, %v3813
    %v3815 = vpop.f32.mrb[0].mxu0
    %v3816 = vpop.f32.mrb[0].mxu0
    %v3817 = vadd.f32 %v3649, %v3816
    %v3818 = vpop.f32.mrb[0].mxu0
    %3819 = vmatprep.mubr.bf16.mxu0 0
    %3820 = vmatmul.mubr.bf16.gmra.mrb[0].mxu0 %v3607
    %v3821 = vpop.f32.mrb[0].mxu0
    %v3822 = vadd.f32 %v3649, %v3821
    %v3823 = vpop.f32.mrb[0].mxu0
    %v3824 = vpop.f32.mrb[0].mxu0
    %v3825 = vadd.f32 %v3649, %v3824
    %v3826 = vpop.f32.mrb[0].mxu0
    %3827 = vmatprep.mubr.bf16.mxu0 0
    %3828 = vmatmul.mubr.bf16.gmra.mrb[0].mxu0 %v3608
    %v3829 = vpop.f32.mrb[0].mxu0
    %v3830 = vadd.f32 %v3649, %v3829
    %v3831 = vpop.f32.mrb[0].mxu0
    %v3832 = vpop.f32.mrb[0].mxu0
    %v3833 = vadd.f32 %v3649, %v3832
    %v3834 = vpop.f32.mrb[0].mxu0
    %3835 = vmatprep.mubr.bf16.mxu0 0
    %3836 = vmatmul.mubr.bf16.gmra.mrb[0].mxu0 %v3609
    %v3837 = vpop.f32.mrb[0].mxu0
    %v3838 = vadd.f32 %v3649, %v3837
    %v3839 = vpop.f32.mrb[0].mxu0
    %v3840 = vpop.f32.mrb[0].mxu0
    %v3841 = vadd.f32 %v3649, %v3840
    %v3842 = vpop.f32.mrb[0].mxu0
    %3843 = vmatprep.mubr.bf16.mxu0 0
    %3844 = vmatmul.mubr.bf16.gmra.mrb[0].mxu0 %v3610
    %v3845 = vpop.f32.mrb[0].mxu0
    %v3846 = vadd.f32 %v3649, %v3845
    %v3847 = vpop.f32.mrb[0].mxu0
    %v3848 = vpop.f32.mrb[0].mxu0
    %v3849 = vadd.f32 %v3649, %v3848
    %v3850 = vpop.f32.mrb[0].mxu0
    %3851 = vmatprep.mubr.bf16.mxu0 0
    %3852 = vmatmul.mubr.bf16.gmra.mrb[0].mxu0 %v3611
    %v3853 = vpop.f32.mrb[0].mxu0
    %v3854 = vadd.f32 %v3649, %v3853
    %v3855 = vpop.f32.mrb[0].mxu0
    %v3856 = vpop.f32.mrb[0].mxu0
    %v3857 = vadd.f32 %v3649, %v3856
    %v3858 = vpop.f32.mrb[0].mxu0
    %3859 = vmatprep.mubr.bf16.mxu0 0
    %3860 = vmatmul.mubr.bf16.gmra.mrb[0].mxu0 %v3612
    %v3861 = vpop.f32.mrb[0].mxu0
    %v3862 = vadd.f32 %v3649, %v3861
    %v3863 = vpop.f32.mrb[0].mxu0
    %v3864 = vpop.f32.mrb[0].mxu0
    %v3865 = vadd.f32 %v3649, %v3864
    %v3866 = vpop.f32.mrb[0].mxu0
    %3867 = vmatprep.mubr.bf16.mxu0 0
    %3868 = vmatmul.mubr.bf16.gmra.mrb[0].mxu0 %v3613
    %v3869 = vpop.f32.mrb[0].mxu0
    %v3870 = vadd.f32 %v3649, %v3869
    %v3871 = vpop.f32.mrb[0].mxu0
    %v3872 = vpop.f32.mrb[0].mxu0
    %v3873 = vadd.f32 %v3649, %v3872
    %v3874 = vpop.f32.mrb[0].mxu0
    %3875 = vmatprep.mubr.bf16.mxu0 0
    %3876 = vmatmul.mubr.bf16.gmra.mrb[0].mxu0 %v3614
    %v3877 = vpop.f32.mrb[0].mxu0
    %v3878 = vadd.f32 %v3649, %v3877
    %v3879 = vpop.f32.mrb[0].mxu0
    %v3880 = vpop.f32.mrb[0].mxu0
    %v3881 = vadd.f32 %v3649, %v3880
    %v3882 = vpop.f32.mrb[0].mxu0
    %3883 = vmatprep.mubr.bf16.mxu0 0
    %3884 = vmatmul.mubr.bf16.gmra.mrb[0].mxu0 %v3615
    %v3885 = vpop.f32.mrb[0].mxu0
    %v3886 = vadd.f32 %v3649, %v3885
    %v3887 = vpop.f32.mrb[0].mxu0
    %v3888 = vpop.f32.mrb[0].mxu0
    %v3889 = vadd.f32 %v3649, %v3888
    %v3890 = vpop.f32.mrb[0].mxu0
    %3891 = vmatprep.mubr.bf16.mxu0 0
    %3892 = vmatmul.mubr.bf16.gmra.mrb[0].mxu0 %v3616
    %v3893 = vpop.f32.mrb[0].mxu0
    %v3894 = vadd.f32 %v3649, %v3893
    %v3895 = vpop.f32.mrb[0].mxu0
    %v3896 = vpop.f32.mrb[0].mxu0
    %v3897 = vadd.f32 %v3649, %v3896
    %v3898 = vpop.f32.mrb[0].mxu0
    %3899 = vmatprep.mubr.bf16.mxu0 0
    %3900 = vmatmul.mubr.bf16.gmra.mrb[0].mxu0 %v3617
    %v3901 = vpop.f32.mrb[0].mxu0
    %v3902 = vadd.f32 %v3649, %v3901
    %v3903 = vpop.f32.mrb[0].mxu0
    %v3904 = vpop.f32.mrb[0].mxu0
    %v3905 = vadd.f32 %v3649, %v3904
    %v3906 = vpop.f32.mrb[0].mxu0
    %3907 = vmatprep.mubr.bf16.mxu0 0
    %3908 = vmatmul.mubr.bf16.gmra.mrb[0].mxu0 %v3618
    %v3909 = vpop.f32.mrb[0].mxu0
    %v3910 = vadd.f32 %v3649, %v3909
    %v3911 = vpop.f32.mrb[0].mxu0
    %v3912 = vpop.f32.mrb[0].mxu0
    %v3913 = vadd.f32 %v3649, %v3912
    %v3914 = vpop.f32.mrb[0].mxu0
    %3915 = vmatprep.mubr.bf16.mxu0 0
    %3916 = vmatmul.mubr.bf16.gmra.mrb[0].mxu0 %v3619
    %v3917 = vpop.f32.mrb[0].mxu0
    %v3918 = vadd.f32 %v3649, %v3917
    %v3919 = vpop.f32.mrb[0].mxu0
    %v3920 = vpop.f32.mrb[0].mxu0
    %v3921 = vadd.f32 %v3649, %v3920
    %v3922 = vpop.f32.mrb[0].mxu0
    %3923 = vmatprep.mubr.bf16.mxu0 0
    %3924 = vmatmul.mubr.bf16.gmra.mrb[0].mxu0 %v3620
    %v3925 = vpop.f32.mrb[0].mxu0
    %v3926 = vadd.f32 %v3649, %v3925
    %v3927 = vpop.f32.mrb[0].mxu0
    %v3928 = vpop.f32.mrb[0].mxu0
    %v3929 = vadd.f32 %v3649, %v3928
    %v3930 = vpop.f32.mrb[0].mxu0
    %3931 = vmatprep.mubr.bf16.mxu0 0
    %3932 = vmatmul.mubr.bf16.gmra.mrb[0].mxu0 %v3621
    %v3933 = vpop.f32.mrb[0].mxu0
    %v3934 = vadd.f32 %v3649, %v3933
    %v3935 = vpop.f32.mrb[0].mxu0
    %v3936 = vpop.f32.mrb[0].mxu0
    %v3937 = vadd.f32 %v3649, %v3936
    %v3938 = vpop.f32.mrb[0].mxu0
    %3939 = vmatprep.mubr.bf16.mxu0 0
    %3940 = vmatmul.mubr.bf16.gmra.mrb[0].mxu0 %v3622
    %v3941 = vpop.f32.mrb[0].mxu0
    %v3942 = vadd.f32 %v3649, %v3941
    %v3943 = vpop.f32.mrb[0].mxu0
    %v3944 = vpop.f32.mrb[0].mxu0
    %v3945 = vadd.f32 %v3649, %v3944
    %v3946 = vpop.f32.mrb[0].mxu0
    %3947 = vmatprep.mubr.bf16.mxu0 0
    %3948 = vmatmul.mubr.bf16.gmra.mrb[0].mxu0 %v3623
    %v3949 = vpop.f32.mrb[0].mxu0
    %v3950 = vadd.f32 %v3649, %v3949
    %v3951 = vpop.f32.mrb[0].mxu0
    %v3952 = vpop.f32.mrb[0].mxu0
    %v3953 = vadd.f32 %v3649, %v3952
    %v3954 = vpop.f32.mrb[0].mxu0
    %3955 = vmatprep.mubr.bf16.mxu0 0
    %3956 = vmatmul.mubr.bf16.gmra.mrb[0].mxu0 %v3624
    %v3957 = vpop.f32.mrb[0].mxu0
    %v3958 = vadd.f32 %v3649, %v3957
    %v3959 = vpop.f32.mrb[0].mxu0
    %v3960 = vpop.f32.mrb[0].mxu0
    %v3961 = vadd.f32 %v3649, %v3960
    %v3962 = vpop.f32.mrb[0].mxu0
    %3963 = vmatprep.mubr.bf16.mxu0 0
    %3964 = vmatmul.mubr.bf16.gmra.mrb[0].mxu0 %v3625
    %v3965 = vpop.f32.mrb[0].mxu0
    %v3966 = vadd.f32 %v3649, %v3965
    %v3967 = vpop.f32.mrb[0].mxu0
    %v3968 = vpop.f32.mrb[0].mxu0
    %v3969 = vadd.f32 %v3649, %v3968
    %v3970 = vpop.f32.mrb[0].mxu0
    %3971 = vmatprep.mubr.bf16.mxu0 0
    %3972 = vmatmul.mubr.bf16.gmra.mrb[0].mxu0 %v3626
    %v3973 = vpop.f32.mrb[0].mxu0
    %v3974 = vadd.f32 %v3649, %v3973
    %v3975 = vpop.f32.mrb[0].mxu0
    %v3976 = vpop.f32.mrb[0].mxu0
    %v3977 = vadd.f32 %v3649, %v3976
    %v3978 = vpop.f32.mrb[0].mxu0
    %3979 = vmatprep.mubr.bf16.mxu0 0
    %3980 = vmatmul.mubr.bf16.gmra.mrb[0].mxu0 %v3627
    %v3981 = vpop.f32.mrb[0].mxu0
    %v3982 = vadd.f32 %v3649, %v3981
    %v3983 = vpop.f32.mrb[0].mxu0
    %v3984 = vpop.f32.mrb[0].mxu0
    %v3985 = vadd.f32 %v3649, %v3984
    %v3986 = vpop.f32.mrb[0].mxu0
    %3987 = vdwg.mxu0
    %3988 = vmax.xlane.f32.xlu0 %v3734
    %v3989 = vpop.xlane.xlu0 %3988
    %3990 = vmax.xlane.f32.xlu0 %v3737
    %v3991 = vpop.xlane.xlu0 %3990
    %3992 = vmax.xlane.f32.xlu0 %v3742
    %v3993 = vpop.xlane.xlu0 %3992
    %3994 = vmax.xlane.f32.xlu0 %v3745
    %v3995 = vpop.xlane.xlu0 %3994
    %3996 = vmax.xlane.f32.xlu0 %v3750
    %v3997 = vpop.xlane.xlu0 %3996
    %3998 = vmax.xlane.f32.xlu0 %v3753
    %v3999 = vpop.xlane.xlu0 %3998
    %4000 = vmax.xlane.f32.xlu0 %v3758
    %v4001 = vpop.xlane.xlu0 %4000
    %4002 = vmax.xlane.f32.xlu0 %v3761
    %v4003 = vpop.xlane.xlu0 %4002
    %4004 = vmax.xlane.f32.xlu0 %v3766
    %v4005 = vpop.xlane.xlu0 %4004
    %4006 = vmax.xlane.f32.xlu0 %v3769
    %v4007 = vpop.xlane.xlu0 %4006
    %4008 = vmax.xlane.f32.xlu0 %v3774
    %v4009 = vpop.xlane.xlu0 %4008
    %4010 = vmax.xlane.f32.xlu0 %v3777
    %v4011 = vpop.xlane.xlu0 %4010
    %4012 = vmax.xlane.f32.xlu0 %v3782
    %v4013 = vpop.xlane.xlu0 %4012
    %4014 = vmax.xlane.f32.xlu0 %v3785
    %v4015 = vpop.xlane.xlu0 %4014
    %4016 = vmax.xlane.f32.xlu0 %v3790
    %v4017 = vpop.xlane.xlu0 %4016
    %4018 = vmax.xlane.f32.xlu0 %v3793
    %v4019 = vpop.xlane.xlu0 %4018
    %4020 = vmax.xlane.f32.xlu0 %v3798
    %v4021 = vpop.xlane.xlu0 %4020
    %4022 = vmax.xlane.f32.xlu0 %v3801
    %v4023 = vpop.xlane.xlu0 %4022
    %4024 = vmax.xlane.f32.xlu0 %v3806
    %v4025 = vpop.xlane.xlu0 %4024
    %4026 = vmax.xlane.f32.xlu0 %v3809
    %v4027 = vpop.xlane.xlu0 %4026
    %4028 = vmax.xlane.f32.xlu0 %v3814
    %v4029 = vpop.xlane.xlu0 %4028
    %4030 = vmax.xlane.f32.xlu0 %v3817
    %v4031 = vpop.xlane.xlu0 %4030
    %4032 = vmax.xlane.f32.xlu0 %v3822
    %v4033 = vpop.xlane.xlu0 %4032
    %4034 = vmax.xlane.f32.xlu0 %v3825
    %v4035 = vpop.xlane.xlu0 %4034
    %4036 = vmax.xlane.f32.xlu0 %v3830
    %v4037 = vpop.xlane.xlu0 %4036
    %4038 = vmax.xlane.f32.xlu0 %v3833
    %v4039 = vpop.xlane.xlu0 %4038
    %4040 = vmax.xlane.f32.xlu0 %v3838
    %v4041 = vpop.xlane.xlu0 %4040
    %4042 = vmax.xlane.f32.xlu0 %v3841
    %v4043 = vpop.xlane.xlu0 %4042
    %4044 = vmax.xlane.f32.xlu0 %v3846
    %v4045 = vpop.xlane.xlu0 %4044
    %4046 = vmax.xlane.f32.xlu0 %v3849
    %v4047 = vpop.xlane.xlu0 %4046
    %4048 = vmax.xlane.f32.xlu0 %v3854
    %v4049 = vpop.xlane.xlu0 %4048
    %4050 = vmax.xlane.f32.xlu0 %v3857
    %v4051 = vpop.xlane.xlu0 %4050
    %4052 = vmax.xlane.f32.xlu0 %v3862
    %v4053 = vpop.xlane.xlu0 %4052
    %4054 = vmax.xlane.f32.xlu0 %v3865
    %v4055 = vpop.xlane.xlu0 %4054
    %4056 = vmax.xlane.f32.xlu0 %v3870
    %v4057 = vpop.xlane.xlu0 %4056
    %4058 = vmax.xlane.f32.xlu0 %v3873
    %v4059 = vpop.xlane.xlu0 %4058
    %4060 = vmax.xlane.f32.xlu0 %v3878
    %v4061 = vpop.xlane.xlu0 %4060
    %4062 = vmax.xlane.f32.xlu0 %v3881
    %v4063 = vpop.xlane.xlu0 %4062
    %4064 = vmax.xlane.f32.xlu0 %v3886
    %v4065 = vpop.xlane.xlu0 %4064
    %4066 = vmax.xlane.f32.xlu0 %v3889
    %v4067 = vpop.xlane.xlu0 %4066
    %4068 = vmax.xlane.f32.xlu0 %v3894
    %v4069 = vpop.xlane.xlu0 %4068
    %4070 = vmax.xlane.f32.xlu0 %v3897
    %v4071 = vpop.xlane.xlu0 %4070
    %4072 = vmax.xlane.f32.xlu0 %v3902
    %v4073 = vpop.xlane.xlu0 %4072
    %4074 = vmax.xlane.f32.xlu0 %v3905
    %v4075 = vpop.xlane.xlu0 %4074
    %4076 = vmax.xlane.f32.xlu0 %v3910
    %v4077 = vpop.xlane.xlu0 %4076
    %4078 = vmax.xlane.f32.xlu0 %v3913
    %v4079 = vpop.xlane.xlu0 %4078
    %4080 = vmax.xlane.f32.xlu0 %v3918
    %v4081 = vpop.xlane.xlu0 %4080
    %4082 = vmax.xlane.f32.xlu0 %v3921
    %v4083 = vpop.xlane.xlu0 %4082
    %4084 = vmax.xlane.f32.xlu0 %v3926
    %v4085 = vpop.xlane.xlu0 %4084
    %4086 = vmax.xlane.f32.xlu0 %v3929
    %v4087 = vpop.xlane.xlu0 %4086
    %4088 = vmax.xlane.f32.xlu0 %v3934
    %v4089 = vpop.xlane.xlu0 %4088
    %4090 = vmax.xlane.f32.xlu0 %v3937
    %v4091 = vpop.xlane.xlu0 %4090
    %4092 = vmax.xlane.f32.xlu0 %v3942
    %v4093 = vpop.xlane.xlu0 %4092
    %4094 = vmax.xlane.f32.xlu0 %v3945
    %v4095 = vpop.xlane.xlu0 %4094
    %4096 = vmax.xlane.f32.xlu0 %v3950
    %v4097 = vpop.xlane.xlu0 %4096
    %4098 = vmax.xlane.f32.xlu0 %v3953
    %v4099 = vpop.xlane.xlu0 %4098
    %4100 = vmax.xlane.f32.xlu0 %v3958
    %v4101 = vpop.xlane.xlu0 %4100
    %4102 = vmax.xlane.f32.xlu0 %v3961
    %v4103 = vpop.xlane.xlu0 %4102
    %4104 = vmax.xlane.f32.xlu0 %v3966
    %v4105 = vpop.xlane.xlu0 %4104
    %4106 = vmax.xlane.f32.xlu0 %v3969
    %v4107 = vpop.xlane.xlu0 %4106
    %4108 = vmax.xlane.f32.xlu0 %v3974
    %v4109 = vpop.xlane.xlu0 %4108
    %4110 = vmax.xlane.f32.xlu0 %v3977
    %v4111 = vpop.xlane.xlu0 %4110
    %4112 = vmax.xlane.f32.xlu0 %v3982
    %v4113 = vpop.xlane.xlu0 %4112
    %4114 = vmax.xlane.f32.xlu0 %v3985
    %v4115 = vpop.xlane.xlu0 %4114
    %v4116 = vsub.f32 %v3734, %v3989
    %v4117 = vsub.f32 %v3737, %v3991
    %v4118 = vsub.f32 %v3742, %v3993
    %v4119 = vsub.f32 %v3745, %v3995
    %v4120 = vsub.f32 %v3750, %v3997
    %v4121 = vsub.f32 %v3753, %v3999
    %v4122 = vsub.f32 %v3758, %v4001
    %v4123 = vsub.f32 %v3761, %v4003
    %v4124 = vsub.f32 %v3766, %v4005
    %v4125 = vsub.f32 %v3769, %v4007
    %v4126 = vsub.f32 %v3774, %v4009
    %v4127 = vsub.f32 %v3777, %v4011
    %v4128 = vsub.f32 %v3782, %v4013
    %v4129 = vsub.f32 %v3785, %v4015
    %v4130 = vsub.f32 %v3790, %v4017
    %v4131 = vsub.f32 %v3793, %v4019
    %v4132 = vsub.f32 %v3798, %v4021
    %v4133 = vsub.f32 %v3801, %v4023
    %v4134 = vsub.f32 %v3806, %v4025
    %v4135 = vsub.f32 %v3809, %v4027
    %v4136 = vsub.f32 %v3814, %v4029
    %v4137 = vsub.f32 %v3817, %v4031
    %v4138 = vsub.f32 %v3822, %v4033
    %v4139 = vsub.f32 %v3825, %v4035
    %v4140 = vsub.f32 %v3830, %v4037
    %v4141 = vsub.f32 %v3833, %v4039
    %v4142 = vsub.f32 %v3838, %v4041
    %v4143 = vsub.f32 %v3841, %v4043
    %v4144 = vsub.f32 %v3846, %v4045
    %v4145 = vsub.f32 %v3849, %v4047
    %v4146 = vsub.f32 %v3854, %v4049
    %v4147 = vsub.f32 %v3857, %v4051
    %v4148 = vsub.f32 %v3862, %v4053
    %v4149 = vsub.f32 %v3865, %v4055
    %v4150 = vsub.f32 %v3870, %v4057
    %v4151 = vsub.f32 %v3873, %v4059
    %v4152 = vsub.f32 %v3878, %v4061
    %v4153 = vsub.f32 %v3881, %v4063
    %v4154 = vsub.f32 %v3886, %v4065
    %v4155 = vsub.f32 %v3889, %v4067
    %v4156 = vsub.f32 %v3894, %v4069
    %v4157 = vsub.f32 %v3897, %v4071
    %v4158 = vsub.f32 %v3902, %v4073
    %v4159 = vsub.f32 %v3905, %v4075
    %v4160 = vsub.f32 %v3910, %v4077
    %v4161 = vsub.f32 %v3913, %v4079
    %v4162 = vsub.f32 %v3918, %v4081
    %v4163 = vsub.f32 %v3921, %v4083
    %v4164 = vsub.f32 %v3926, %v4085
    %v4165 = vsub.f32 %v3929, %v4087
    %v4166 = vsub.f32 %v3934, %v4089
    %v4167 = vsub.f32 %v3937, %v4091
    %v4168 = vsub.f32 %v3942, %v4093
    %v4169 = vsub.f32 %v3945, %v4095
    %v4170 = vsub.f32 %v3950, %v4097
    %v4171 = vsub.f32 %v3953, %v4099
    %v4172 = vsub.f32 %v3958, %v4101
    %v4173 = vsub.f32 %v3961, %v4103
    %v4174 = vsub.f32 %v3966, %v4105
    %v4175 = vsub.f32 %v3969, %v4107
    %v4176 = vsub.f32 %v3974, %v4109
    %v4177 = vsub.f32 %v3977, %v4111
    %v4178 = vsub.f32 %v3982, %v4113
    %v4179 = vsub.f32 %v3985, %v4115
    %v4180 = vmul.f32 %v4116, 1.442695
    %v4181 = vpow.pop %v4180
    %v4182 = vmul.f32 %v4117, 1.442695
    %v4183 = vpow.pop %v4182
    %v4184 = vmul.f32 %v4118, 1.442695
    %v4185 = vpow.pop %v4184
    %v4186 = vmul.f32 %v4119, 1.442695
    %v4187 = vpow.pop %v4186
    %v4188 = vmul.f32 %v4120, 1.442695
    %v4189 = vpow.pop %v4188
    %v4190 = vmul.f32 %v4121, 1.442695
    %v4191 = vpow.pop %v4190
    %v4192 = vmul.f32 %v4122, 1.442695
    %v4193 = vpow.pop %v4192
    %v4194 = vmul.f32 %v4123, 1.442695
    %v4195 = vpow.pop %v4194
    %v4196 = vmul.f32 %v4124, 1.442695
    %v4197 = vpow.pop %v4196
    %v4198 = vmul.f32 %v4125, 1.442695
    %v4199 = vpow.pop %v4198
    %v4200 = vmul.f32 %v4126, 1.442695
    %v4201 = vpow.pop %v4200
    %v4202 = vmul.f32 %v4127, 1.442695
    %v4203 = vpow.pop %v4202
    %v4204 = vmul.f32 %v4128, 1.442695
    %v4205 = vpow.pop %v4204
    %v4206 = vmul.f32 %v4129, 1.442695
    %v4207 = vpow.pop %v4206
    %v4208 = vmul.f32 %v4130, 1.442695
    %v4209 = vpow.pop %v4208
    %v4210 = vmul.f32 %v4131, 1.442695
    %v4211 = vpow.pop %v4210
    %v4212 = vmul.f32 %v4132, 1.442695
    %v4213 = vpow.pop %v4212
    %v4214 = vmul.f32 %v4133, 1.442695
    %v4215 = vpow.pop %v4214
    %v4216 = vmul.f32 %v4134, 1.442695
    %v4217 = vpow.pop %v4216
    %v4218 = vmul.f32 %v4135, 1.442695
    %v4219 = vpow.pop %v4218
    %v4220 = vmul.f32 %v4136, 1.442695
    %v4221 = vpow.pop %v4220
    %v4222 = vmul.f32 %v4137, 1.442695
    %v4223 = vpow.pop %v4222
    %v4224 = vmul.f32 %v4138, 1.442695
    %v4225 = vpow.pop %v4224
    %v4226 = vmul.f32 %v4139, 1.442695
    %v4227 = vpow.pop %v4226
    %v4228 = vmul.f32 %v4140, 1.442695
    %v4229 = vpow.pop %v4228
    %v4230 = vmul.f32 %v4141, 1.442695
    %v4231 = vpow.pop %v4230
    %v4232 = vmul.f32 %v4142, 1.442695
    %v4233 = vpow.pop %v4232
    %v4234 = vmul.f32 %v4143, 1.442695
    %v4235 = vpow.pop %v4234
    %v4236 = vmul.f32 %v4144, 1.442695
    %v4237 = vpow.pop %v4236
    %v4238 = vmul.f32 %v4145, 1.442695
    %v4239 = vpow.pop %v4238
    %v4240 = vmul.f32 %v4146, 1.442695
    %v4241 = vpow.pop %v4240
    %v4242 = vmul.f32 %v4147, 1.442695
    %v4243 = vpow.pop %v4242
    %v4244 = vmul.f32 %v4148, 1.442695
    %v4245 = vpow.pop %v4244
    %v4246 = vmul.f32 %v4149, 1.442695
    %v4247 = vpow.pop %v4246
    %v4248 = vmul.f32 %v4150, 1.442695
    %v4249 = vpow.pop %v4248
    %v4250 = vmul.f32 %v4151, 1.442695
    %v4251 = vpow.pop %v4250
    %v4252 = vmul.f32 %v4152, 1.442695
    %v4253 = vpow.pop %v4252
    %v4254 = vmul.f32 %v4153, 1.442695
    %v4255 = vpow.pop %v4254
    %v4256 = vmul.f32 %v4154, 1.442695
    %v4257 = vpow.pop %v4256
    %v4258 = vmul.f32 %v4155, 1.442695
    %v4259 = vpow.pop %v4258
    %v4260 = vmul.f32 %v4156, 1.442695
    %v4261 = vpow.pop %v4260
    %v4262 = vmul.f32 %v4157, 1.442695
    %v4263 = vpow.pop %v4262
    %v4264 = vmul.f32 %v4158, 1.442695
    %v4265 = vpow.pop %v4264
    %v4266 = vmul.f32 %v4159, 1.442695
    %v4267 = vpow.pop %v4266
    %v4268 = vmul.f32 %v4160, 1.442695
    %v4269 = vpow.pop %v4268
    %v4270 = vmul.f32 %v4161, 1.442695
    %v4271 = vpow.pop %v4270
    %v4272 = vmul.f32 %v4162, 1.442695
    %v4273 = vpow.pop %v4272
    %v4274 = vmul.f32 %v4163, 1.442695
    %v4275 = vpow.pop %v4274
    %v4276 = vmul.f32 %v4164, 1.442695
    %v4277 = vpow.pop %v4276
    %v4278 = vmul.f32 %v4165, 1.442695
    %v4279 = vpow.pop %v4278
    %v4280 = vmul.f32 %v4166, 1.442695
    %v4281 = vpow.pop %v4280
    %v4282 = vmul.f32 %v4167, 1.442695
    %v4283 = vpow.pop %v4282
    %v4284 = vmul.f32 %v4168, 1.442695
    %v4285 = vpow.pop %v4284
    %v4286 = vmul.f32 %v4169, 1.442695
    %v4287 = vpow.pop %v4286
    %v4288 = vmul.f32 %v4170, 1.442695
    %v4289 = vpow.pop %v4288
    %v4290 = vmul.f32 %v4171, 1.442695
    %v4291 = vpow.pop %v4290
    %v4292 = vmul.f32 %v4172, 1.442695
    %v4293 = vpow.pop %v4292
    %v4294 = vmul.f32 %v4173, 1.442695
    %v4295 = vpow.pop %v4294
    %v4296 = vmul.f32 %v4174, 1.442695
    %v4297 = vpow.pop %v4296
    %v4298 = vmul.f32 %v4175, 1.442695
    %v4299 = vpow.pop %v4298
    %v4300 = vmul.f32 %v4176, 1.442695
    %v4301 = vpow.pop %v4300
    %v4302 = vmul.f32 %v4177, 1.442695
    %v4303 = vpow.pop %v4302
    %v4304 = vmul.f32 %v4178, 1.442695
    %v4305 = vpow.pop %v4304
    %v4306 = vmul.f32 %v4179, 1.442695
    %v4307 = vpow.pop %v4306
    %4308 = vadd.xlane.f32.xlu0 %v4181
    %v4309 = vpop.xlane.xlu0 %4308
    %4310 = vadd.xlane.f32.xlu0 %v4183
    %v4311 = vpop.xlane.xlu0 %4310
    %4312 = vadd.xlane.f32.xlu0 %v4185
    %v4313 = vpop.xlane.xlu0 %4312
    %4314 = vadd.xlane.f32.xlu0 %v4187
    %v4315 = vpop.xlane.xlu0 %4314
    %4316 = vadd.xlane.f32.xlu0 %v4189
    %v4317 = vpop.xlane.xlu0 %4316
    %4318 = vadd.xlane.f32.xlu0 %v4191
    %v4319 = vpop.xlane.xlu0 %4318
    %4320 = vadd.xlane.f32.xlu0 %v4193
    %v4321 = vpop.xlane.xlu0 %4320
    %4322 = vadd.xlane.f32.xlu0 %v4195
    %v4323 = vpop.xlane.xlu0 %4322
    %4324 = vadd.xlane.f32.xlu0 %v4197
    %v4325 = vpop.xlane.xlu0 %4324
    %4326 = vadd.xlane.f32.xlu0 %v4199
    %v4327 = vpop.xlane.xlu0 %4326
    %4328 = vadd.xlane.f32.xlu0 %v4201
    %v4329 = vpop.xlane.xlu0 %4328
    %4330 = vadd.xlane.f32.xlu0 %v4203
    %v4331 = vpop.xlane.xlu0 %4330
    %4332 = vadd.xlane.f32.xlu0 %v4205
    %v4333 = vpop.xlane.xlu0 %4332
    %4334 = vadd.xlane.f32.xlu0 %v4207
    %v4335 = vpop.xlane.xlu0 %4334
    %4336 = vadd.xlane.f32.xlu0 %v4209
    %v4337 = vpop.xlane.xlu0 %4336
    %4338 = vadd.xlane.f32.xlu0 %v4211
    %v4339 = vpop.xlane.xlu0 %4338
    %4340 = vadd.xlane.f32.xlu0 %v4213
    %v4341 = vpop.xlane.xlu0 %4340
    %4342 = vadd.xlane.f32.xlu0 %v4215
    %v4343 = vpop.xlane.xlu0 %4342
    %4344 = vadd.xlane.f32.xlu0 %v4217
    %v4345 = vpop.xlane.xlu0 %4344
    %4346 = vadd.xlane.f32.xlu0 %v4219
    %v4347 = vpop.xlane.xlu0 %4346
    %4348 = vadd.xlane.f32.xlu0 %v4221
    %v4349 = vpop.xlane.xlu0 %4348
    %4350 = vadd.xlane.f32.xlu0 %v4223
    %v4351 = vpop.xlane.xlu0 %4350
    %4352 = vadd.xlane.f32.xlu0 %v4225
    %v4353 = vpop.xlane.xlu0 %4352
    %4354 = vadd.xlane.f32.xlu0 %v4227
    %v4355 = vpop.xlane.xlu0 %4354
    %4356 = vadd.xlane.f32.xlu0 %v4229
    %v4357 = vpop.xlane.xlu0 %4356
    %4358 = vadd.xlane.f32.xlu0 %v4231
    %v4359 = vpop.xlane.xlu0 %4358
    %4360 = vadd.xlane.f32.xlu0 %v4233
    %v4361 = vpop.xlane.xlu0 %4360
    %4362 = vadd.xlane.f32.xlu0 %v4235
    %v4363 = vpop.xlane.xlu0 %4362
    %4364 = vadd.xlane.f32.xlu0 %v4237
    %v4365 = vpop.xlane.xlu0 %4364
    %4366 = vadd.xlane.f32.xlu0 %v4239
    %v4367 = vpop.xlane.xlu0 %4366
    %4368 = vadd.xlane.f32.xlu0 %v4241
    %v4369 = vpop.xlane.xlu0 %4368
    %4370 = vadd.xlane.f32.xlu0 %v4243
    %v4371 = vpop.xlane.xlu0 %4370
    %4372 = vadd.xlane.f32.xlu0 %v4245
    %v4373 = vpop.xlane.xlu0 %4372
    %4374 = vadd.xlane.f32.xlu0 %v4247
    %v4375 = vpop.xlane.xlu0 %4374
    %4376 = vadd.xlane.f32.xlu0 %v4249
    %v4377 = vpop.xlane.xlu0 %4376
    %4378 = vadd.xlane.f32.xlu0 %v4251
    %v4379 = vpop.xlane.xlu0 %4378
    %4380 = vadd.xlane.f32.xlu0 %v4253
    %v4381 = vpop.xlane.xlu0 %4380
    %4382 = vadd.xlane.f32.xlu0 %v4255
    %v4383 = vpop.xlane.xlu0 %4382
    %4384 = vadd.xlane.f32.xlu0 %v4257
    %v4385 = vpop.xlane.xlu0 %4384
    %4386 = vadd.xlane.f32.xlu0 %v4259
    %v4387 = vpop.xlane.xlu0 %4386
    %4388 = vadd.xlane.f32.xlu0 %v4261
    %v4389 = vpop.xlane.xlu0 %4388
    %4390 = vadd.xlane.f32.xlu0 %v4263
    %v4391 = vpop.xlane.xlu0 %4390
    %4392 = vadd.xlane.f32.xlu0 %v4265
    %v4393 = vpop.xlane.xlu0 %4392
    %4394 = vadd.xlane.f32.xlu0 %v4267
    %v4395 = vpop.xlane.xlu0 %4394
    %4396 = vadd.xlane.f32.xlu0 %v4269
    %v4397 = vpop.xlane.xlu0 %4396
    %4398 = vadd.xlane.f32.xlu0 %v4271
    %v4399 = vpop.xlane.xlu0 %4398
    %4400 = vadd.xlane.f32.xlu0 %v4273
    %v4401 = vpop.xlane.xlu0 %4400
    %4402 = vadd.xlane.f32.xlu0 %v4275
    %v4403 = vpop.xlane.xlu0 %4402
    %4404 = vadd.xlane.f32.xlu0 %v4277
    %v4405 = vpop.xlane.xlu0 %4404
    %4406 = vadd.xlane.f32.xlu0 %v4279
    %v4407 = vpop.xlane.xlu0 %4406
    %4408 = vadd.xlane.f32.xlu0 %v4281
    %v4409 = vpop.xlane.xlu0 %4408
    %4410 = vadd.xlane.f32.xlu0 %v4283
    %v4411 = vpop.xlane.xlu0 %4410
    %4412 = vadd.xlane.f32.xlu0 %v4285
    %v4413 = vpop.xlane.xlu0 %4412
    %4414 = vadd.xlane.f32.xlu0 %v4287
    %v4415 = vpop.xlane.xlu0 %4414
    %4416 = vadd.xlane.f32.xlu0 %v4289
    %v4417 = vpop.xlane.xlu0 %4416
    %4418 = vadd.xlane.f32.xlu0 %v4291
    %v4419 = vpop.xlane.xlu0 %4418
    %4420 = vadd.xlane.f32.xlu0 %v4293
    %v4421 = vpop.xlane.xlu0 %4420
    %4422 = vadd.xlane.f32.xlu0 %v4295
    %v4423 = vpop.xlane.xlu0 %4422
    %4424 = vadd.xlane.f32.xlu0 %v4297
    %v4425 = vpop.xlane.xlu0 %4424
    %4426 = vadd.xlane.f32.xlu0 %v4299
    %v4427 = vpop.xlane.xlu0 %4426
    %4428 = vadd.xlane.f32.xlu0 %v4301
    %v4429 = vpop.xlane.xlu0 %4428
    %4430 = vadd.xlane.f32.xlu0 %v4303
    %v4431 = vpop.xlane.xlu0 %4430
    %4432 = vadd.xlane.f32.xlu0 %v4305
    %v4433 = vpop.xlane.xlu0 %4432
    %4434 = vadd.xlane.f32.xlu0 %v4307
    %v4435 = vpop.xlane.xlu0 %4434
    %v4436 = vlog2.pop %v4309
    %v4437 = vmul.f32 %v4436, 0.6931472
    %v4438 = vlog2.pop %v4311
    %v4439 = vmul.f32 %v4438, 0.6931472
    %v4440 = vlog2.pop %v4313
    %v4441 = vmul.f32 %v4440, 0.6931472
    %v4442 = vlog2.pop %v4315
    %v4443 = vmul.f32 %v4442, 0.6931472
    %v4444 = vlog2.pop %v4317
    %v4445 = vmul.f32 %v4444, 0.6931472
    %v4446 = vlog2.pop %v4319
    %v4447 = vmul.f32 %v4446, 0.6931472
    %v4448 = vlog2.pop %v4321
    %v4449 = vmul.f32 %v4448, 0.6931472
    %v4450 = vlog2.pop %v4323
    %v4451 = vmul.f32 %v4450, 0.6931472
    %v4452 = vlog2.pop %v4325
    %v4453 = vmul.f32 %v4452, 0.6931472
    %v4454 = vlog2.pop %v4327
    %v4455 = vmul.f32 %v4454, 0.6931472
    %v4456 = vlog2.pop %v4329
    %v4457 = vmul.f32 %v4456, 0.6931472
    %v4458 = vlog2.pop %v4331
    %v4459 = vmul.f32 %v4458, 0.6931472
    %v4460 = vlog2.pop %v4333
    %v4461 = vmul.f32 %v4460, 0.6931472
    %v4462 = vlog2.pop %v4335
    %v4463 = vmul.f32 %v4462, 0.6931472
    %v4464 = vlog2.pop %v4337
    %v4465 = vmul.f32 %v4464, 0.6931472
    %v4466 = vlog2.pop %v4339
    %v4467 = vmul.f32 %v4466, 0.6931472
    %v4468 = vlog2.pop %v4341
    %v4469 = vmul.f32 %v4468, 0.6931472
    %v4470 = vlog2.pop %v4343
    %v4471 = vmul.f32 %v4470, 0.6931472
    %v4472 = vlog2.pop %v4345
    %v4473 = vmul.f32 %v4472, 0.6931472
    %v4474 = vlog2.pop %v4347
    %v4475 = vmul.f32 %v4474, 0.6931472
    %v4476 = vlog2.pop %v4349
    %v4477 = vmul.f32 %v4476, 0.6931472
    %v4478 = vlog2.pop %v4351
    %v4479 = vmul.f32 %v4478, 0.6931472
    %v4480 = vlog2.pop %v4353
    %v4481 = vmul.f32 %v4480, 0.6931472
    %v4482 = vlog2.pop %v4355
    %v4483 = vmul.f32 %v4482, 0.6931472
    %v4484 = vlog2.pop %v4357
    %v4485 = vmul.f32 %v4484, 0.6931472
    %v4486 = vlog2.pop %v4359
    %v4487 = vmul.f32 %v4486, 0.6931472
    %v4488 = vlog2.pop %v4361
    %v4489 = vmul.f32 %v4488, 0.6931472
    %v4490 = vlog2.pop %v4363
    %v4491 = vmul.f32 %v4490, 0.6931472
    %v4492 = vlog2.pop %v4365
    %v4493 = vmul.f32 %v4492, 0.6931472
    %v4494 = vlog2.pop %v4367
    %v4495 = vmul.f32 %v4494, 0.6931472
    %v4496 = vlog2.pop %v4369
    %v4497 = vmul.f32 %v4496, 0.6931472
    %v4498 = vlog2.pop %v4371
    %v4499 = vmul.f32 %v4498, 0.6931472
    %v4500 = vlog2.pop %v4373
    %v4501 = vmul.f32 %v4500, 0.6931472
    %v4502 = vlog2.pop %v4375
    %v4503 = vmul.f32 %v4502, 0.6931472
    %v4504 = vlog2.pop %v4377
    %v4505 = vmul.f32 %v4504, 0.6931472
    %v4506 = vlog2.pop %v4379
    %v4507 = vmul.f32 %v4506, 0.6931472
    %v4508 = vlog2.pop %v4381
    %v4509 = vmul.f32 %v4508, 0.6931472
    %v4510 = vlog2.pop %v4383
    %v4511 = vmul.f32 %v4510, 0.6931472
    %v4512 = vlog2.pop %v4385
    %v4513 = vmul.f32 %v4512, 0.6931472
    %v4514 = vlog2.pop %v4387
    %v4515 = vmul.f32 %v4514, 0.6931472
    %v4516 = vlog2.pop %v4389
    %v4517 = vmul.f32 %v4516, 0.6931472
    %v4518 = vlog2.pop %v4391
    %v4519 = vmul.f32 %v4518, 0.6931472
    %v4520 = vlog2.pop %v4393
    %v4521 = vmul.f32 %v4520, 0.6931472
    %v4522 = vlog2.pop %v4395
    %v4523 = vmul.f32 %v4522, 0.6931472
    %v4524 = vlog2.pop %v4397
    %v4525 = vmul.f32 %v4524, 0.6931472
    %v4526 = vlog2.pop %v4399
    %v4527 = vmul.f32 %v4526, 0.6931472
    %v4528 = vlog2.pop %v4401
    %v4529 = vmul.f32 %v4528, 0.6931472
    %v4530 = vlog2.pop %v4403
    %v4531 = vmul.f32 %v4530, 0.6931472
    %v4532 = vlog2.pop %v4405
    %v4533 = vmul.f32 %v4532, 0.6931472
    %v4534 = vlog2.pop %v4407
    %v4535 = vmul.f32 %v4534, 0.6931472
    %v4536 = vlog2.pop %v4409
    %v4537 = vmul.f32 %v4536, 0.6931472
    %v4538 = vlog2.pop %v4411
    %v4539 = vmul.f32 %v4538, 0.6931472
    %v4540 = vlog2.pop %v4413
    %v4541 = vmul.f32 %v4540, 0.6931472
    %v4542 = vlog2.pop %v4415
    %v4543 = vmul.f32 %v4542, 0.6931472
    %v4544 = vlog2.pop %v4417
    %v4545 = vmul.f32 %v4544, 0.6931472
    %v4546 = vlog2.pop %v4419
    %v4547 = vmul.f32 %v4546, 0.6931472
    %v4548 = vlog2.pop %v4421
    %v4549 = vmul.f32 %v4548, 0.6931472
    %v4550 = vlog2.pop %v4423
    %v4551 = vmul.f32 %v4550, 0.6931472
    %v4552 = vlog2.pop %v4425
    %v4553 = vmul.f32 %v4552, 0.6931472
    %v4554 = vlog2.pop %v4427
    %v4555 = vmul.f32 %v4554, 0.6931472
    %v4556 = vlog2.pop %v4429
    %v4557 = vmul.f32 %v4556, 0.6931472
    %v4558 = vlog2.pop %v4431
    %v4559 = vmul.f32 %v4558, 0.6931472
    %v4560 = vlog2.pop %v4433
    %v4561 = vmul.f32 %v4560, 0.6931472
    %v4562 = vlog2.pop %v4435
    %v4563 = vmul.f32 %v4562, 0.6931472
    %v4564 = vsub.f32 %v4116, %v4437
    %v4565 = vsub.f32 %v4117, %v4439
    %v4566 = vsub.f32 %v4118, %v4441
    %v4567 = vsub.f32 %v4119, %v4443
    %v4568 = vsub.f32 %v4120, %v4445
    %v4569 = vsub.f32 %v4121, %v4447
    %v4570 = vsub.f32 %v4122, %v4449
    %v4571 = vsub.f32 %v4123, %v4451
    %v4572 = vsub.f32 %v4124, %v4453
    %v4573 = vsub.f32 %v4125, %v4455
    %v4574 = vsub.f32 %v4126, %v4457
    %v4575 = vsub.f32 %v4127, %v4459
    %v4576 = vsub.f32 %v4128, %v4461
    %v4577 = vsub.f32 %v4129, %v4463
    %v4578 = vsub.f32 %v4130, %v4465
    %v4579 = vsub.f32 %v4131, %v4467
    %v4580 = vsub.f32 %v4132, %v4469
    %v4581 = vsub.f32 %v4133, %v4471
    %v4582 = vsub.f32 %v4134, %v4473
    %v4583 = vsub.f32 %v4135, %v4475
    %v4584 = vsub.f32 %v4136, %v4477
    %v4585 = vsub.f32 %v4137, %v4479
    %v4586 = vsub.f32 %v4138, %v4481
    %v4587 = vsub.f32 %v4139, %v4483
    %v4588 = vsub.f32 %v4140, %v4485
    %v4589 = vsub.f32 %v4141, %v4487
    %v4590 = vsub.f32 %v4142, %v4489
    %v4591 = vsub.f32 %v4143, %v4491
    %v4592 = vsub.f32 %v4144, %v4493
    %v4593 = vsub.f32 %v4145, %v4495
    %v4594 = vsub.f32 %v4146, %v4497
    %v4595 = vsub.f32 %v4147, %v4499
    %v4596 = vsub.f32 %v4148, %v4501
    %v4597 = vsub.f32 %v4149, %v4503
    %v4598 = vsub.f32 %v4150, %v4505
    %v4599 = vsub.f32 %v4151, %v4507
    %v4600 = vsub.f32 %v4152, %v4509
    %v4601 = vsub.f32 %v4153, %v4511
    %v4602 = vsub.f32 %v4154, %v4513
    %v4603 = vsub.f32 %v4155, %v4515
    %v4604 = vsub.f32 %v4156, %v4517
    %v4605 = vsub.f32 %v4157, %v4519
    %v4606 = vsub.f32 %v4158, %v4521
    %v4607 = vsub.f32 %v4159, %v4523
    %v4608 = vsub.f32 %v4160, %v4525
    %v4609 = vsub.f32 %v4161, %v4527
    %v4610 = vsub.f32 %v4162, %v4529
    %v4611 = vsub.f32 %v4163, %v4531
    %v4612 = vsub.f32 %v4164, %v4533
    %v4613 = vsub.f32 %v4165, %v4535
    %v4614 = vsub.f32 %v4166, %v4537
    %v4615 = vsub.f32 %v4167, %v4539
    %v4616 = vsub.f32 %v4168, %v4541
    %v4617 = vsub.f32 %v4169, %v4543
    %v4618 = vsub.f32 %v4170, %v4545
    %v4619 = vsub.f32 %v4171, %v4547
    %v4620 = vsub.f32 %v4172, %v4549
    %v4621 = vsub.f32 %v4173, %v4551
    %v4622 = vsub.f32 %v4174, %v4553
    %v4623 = vsub.f32 %v4175, %v4555
    %v4624 = vsub.f32 %v4176, %v4557
    %v4625 = vsub.f32 %v4177, %v4559
    %v4626 = vsub.f32 %v4178, %v4561
    %v4627 = vsub.f32 %v4179, %v4563
    %4628 = vst [vmem:[#allocation17] sm:$0xff] %v4564
    %4629 = vst [vmem:[#allocation17 + $0x8] sm:$0xff] %v4565
    %4630 = vst [vmem:[#allocation17 + $0x10] sm:$0xff] %v4566
    %4631 = vst [vmem:[#allocation17 + $0x18] sm:$0xff] %v4567
    %4632 = vst [vmem:[#allocation17 + $0x20] sm:$0xff] %v4568
    %4633 = vst [vmem:[#allocation17 + $0x28] sm:$0xff] %v4569
    %4634 = vst [vmem:[#allocation17 + $0x30] sm:$0xff] %v4570
    %4635 = vst [vmem:[#allocation17 + $0x38] sm:$0xff] %v4571
    %4636 = vst [vmem:[#allocation17 + $0x40] sm:$0xff] %v4572
    %4637 = vst [vmem:[#allocation17 + $0x48] sm:$0xff] %v4573
    %4638 = vst [vmem:[#allocation17 + $0x50] sm:$0xff] %v4574
    %4639 = vst [vmem:[#allocation17 + $0x58] sm:$0xff] %v4575
    %4640 = vst [vmem:[#allocation17 + $0x60] sm:$0xff] %v4576
    %4641 = vst [vmem:[#allocation17 + $0x68] sm:$0xff] %v4577
    %4642 = vst [vmem:[#allocation17 + $0x70] sm:$0xff] %v4578
    %4643 = vst [vmem:[#allocation17 + $0x78] sm:$0xff] %v4579
    %4644 = vst [vmem:[#allocation17 + $0x80] sm:$0xff] %v4580
    %4645 = vst [vmem:[#allocation17 + $0x88] sm:$0xff] %v4581
    %4646 = vst [vmem:[#allocation17 + $0x90] sm:$0xff] %v4582
    %4647 = vst [vmem:[#allocation17 + $0x98] sm:$0xff] %v4583
    %4648 = vst [vmem:[#allocation17 + $0xa0] sm:$0xff] %v4584
    %4649 = vst [vmem:[#allocation17 + $0xa8] sm:$0xff] %v4585
    %4650 = vst [vmem:[#allocation17 + $0xb0] sm:$0xff] %v4586
    %4651 = vst [vmem:[#allocation17 + $0xb8] sm:$0xff] %v4587
    %4652 = vst [vmem:[#allocation17 + $0xc0] sm:$0xff] %v4588
    %4653 = vst [vmem:[#allocation17 + $0xc8] sm:$0xff] %v4589
    %4654 = vst [vmem:[#allocation17 + $0xd0] sm:$0xff] %v4590
    %4655 = vst [vmem:[#allocation17 + $0xd8] sm:$0xff] %v4591
    %4656 = vst [vmem:[#allocation17 + $0xe0] sm:$0xff] %v4592
    %4657 = vst [vmem:[#allocation17 + $0xe8] sm:$0xff] %v4593
    %4658 = vst [vmem:[#allocation17 + $0xf0] sm:$0xff] %v4594
    %4659 = vst [vmem:[#allocation17 + $0xf8] sm:$0xff] %v4595
    %4660 = vst [vmem:[#allocation17 + $0x100] sm:$0xff] %v4596
    %4661 = vst [vmem:[#allocation17 + $0x108] sm:$0xff] %v4597
    %4662 = vst [vmem:[#allocation17 + $0x110] sm:$0xff] %v4598
    %4663 = vst [vmem:[#allocation17 + $0x118] sm:$0xff] %v4599
    %4664 = vst [vmem:[#allocation17 + $0x120] sm:$0xff] %v4600
    %4665 = vst [vmem:[#allocation17 + $0x128] sm:$0xff] %v4601
    %4666 = vst [vmem:[#allocation17 + $0x130] sm:$0xff] %v4602
    %4667 = vst [vmem:[#allocation17 + $0x138] sm:$0xff] %v4603
    %4668 = vst [vmem:[#allocation17 + $0x140] sm:$0xff] %v4604
    %4669 = vst [vmem:[#allocation17 + $0x148] sm:$0xff] %v4605
    %4670 = vst [vmem:[#allocation17 + $0x150] sm:$0xff] %v4606
    %4671 = vst [vmem:[#allocation17 + $0x158] sm:$0xff] %v4607
    %4672 = vst [vmem:[#allocation17 + $0x160] sm:$0xff] %v4608
    %4673 = vst [vmem:[#allocation17 + $0x168] sm:$0xff] %v4609
    %4674 = vst [vmem:[#allocation17 + $0x170] sm:$0xff] %v4610
    %4675 = vst [vmem:[#allocation17 + $0x178] sm:$0xff] %v4611
    %4676 = vst [vmem:[#allocation17 + $0x180] sm:$0xff] %v4612
    %4677 = vst [vmem:[#allocation17 + $0x188] sm:$0xff] %v4613
    %4678 = vst [vmem:[#allocation17 + $0x190] sm:$0xff] %v4614
    %4679 = vst [vmem:[#allocation17 + $0x198] sm:$0xff] %v4615
    %4680 = vst [vmem:[#allocation17 + $0x1a0] sm:$0xff] %v4616
    %4681 = vst [vmem:[#allocation17 + $0x1a8] sm:$0xff] %v4617
    %4682 = vst [vmem:[#allocation17 + $0x1b0] sm:$0xff] %v4618
    %4683 = vst [vmem:[#allocation17 + $0x1b8] sm:$0xff] %v4619
    %4684 = vst [vmem:[#allocation17 + $0x1c0] sm:$0xff] %v4620
    %4685 = vst [vmem:[#allocation17 + $0x1c8] sm:$0xff] %v4621
    %4686 = vst [vmem:[#allocation17 + $0x1d0] sm:$0xff] %v4622
    %4687 = vst [vmem:[#allocation17 + $0x1d8] sm:$0xff] %v4623
    %4688 = vst [vmem:[#allocation17 + $0x1e0] sm:$0xff] %v4624
    %4689 = vst [vmem:[#allocation17 + $0x1e8] sm:$0xff] %v4625
    %4690 = vst [vmem:[#allocation17 + $0x1f0] sm:$0xff] %v4626
    %4691 = vst [vmem:[#allocation17 + $0x1f8] sm:$0xff] %v4627
    // Predicated region
    $region106: #{tpu_custom_call.1} parent=1 // pred_check
      _
    $region107: #{tpu_custom_call.1} parent=1 // pred_check_branch
      %4693 = sbr.rel (0) target = $region109
    $region108: #{tpu_custom_call.1} parent=1 // pred_region
      %s4695 = ssub.s32 8192, 8192
      %4696 = vsyncadd [#allocation4], %s4695
      %s4697 = sshll.u32 [#allocation17], 4
      %s4698 = int_to_ptr.vmem [resolvable:$true] %s4697
      %4703 = dma.vmem_to_hbm [thread:$0]  %s4698, 8192, %s17, [#allocation4], 128, 128, 8
    $region109: #{tpu_custom_call.1} parent=1 // pred_fallthru
      _
    // Predicated region
    $region110: #{tpu_custom_call.1} parent=1 // pred_check
      _
    $region111: #{tpu_custom_call.1} parent=1 // pred_check_branch
      %4705 = sbr.rel (0) target = $region113
    $region112: #{tpu_custom_call.1} parent=1 // pred_region
      %4706 = dma.done [#allocation4], 8192
    $region113: #{tpu_custom_call.1} parent=1 // pred_fallthru
      _
    %4707 = vsyncpa [#allocation3], 1
    %4708 = vsyncpa [#allocation6], 1
    %4709 = vsyncpa [#allocation9], 1
    %4710 = vsyncpa [#allocation12], 1
    %4711 = vsyncpa [#allocation15], 1
    %4712 = vsyncpa [#allocation4], 1

</llo_original>
